<compile_context>
chip_gen: v7x
topology: tpu7x:2x2x1
jax: 0.10.0
libtpu: 0.0.40
codegen_flags: <defaults>
</compile_context>

<pallas_src>
import jax
import jax.numpy as jnp
from jax.experimental import pallas as pl
from jax.experimental.pallas import tpu as pltpu

VMEM_SPEC = pl.BlockSpec(memory_space=pltpu.MemorySpace.VMEM)

GIN_EPS = 0.0     # GINConv(train_eps=True) initial eps
BN_EPS = 1e-5     # BatchNorm1d default eps


# ----------------------------------------------------------------------------
# Fused kernel:  GIN x3 (both graphs stacked)  +  vectorized pairwise-energy
#                softmax cost  +  attention pooling  +  NTN  +  scoring head
# ----------------------------------------------------------------------------
def _make_fused_kernel(npad: int, inv_n1: float, inv_n2: float,
                       inv_max_len: float):
    """All graph-size scalars are static python floats baked into the trace."""

    def kernel(adj_ref, x_ref, m1_ref, m2_ref,
               sel_pair_ref, sel_j_ref, sel_i_t_ref, colbias_ref,
               g1w1_ref, g1b1_ref, g1w2_ref, g1b2_ref, g1g_ref, g1bt_ref,
               g2w1_ref, g2b1_ref, g2w2_ref, g2b2_ref, g2g_ref, g2bt_ref,
               g3w1_ref, g3b1_ref, g3w2_ref, g3b2_ref, g3g_ref, g3bt_ref,
               fc1_ref, fc2_ref, fc3t_ref, fc3b_ref, attw_ref,
               ntnw_ref, tile_ref, gsum_ref, blockt_ref, ntnb_ref,
               h1w_ref, h1b_ref, h2w_ref, h2b_ref, h3w_ref, h3b_ref,
               hsw_ref, hsb_ref, hb_ref,
               preged_ref, score_ref):
        adj = adj_ref[...]                       # (2Np, 2Np) block-diagonal
        m1 = m1_ref[...]                         # (2Np, 1) valid rows, graph 1
        m2 = m2_ref[...]                         # (2Np, 1) valid rows, graph 2
        rmask = m1 + m2                          # (2Np, 1) any valid row

        # ------------- stacked GINConv layer (both graphs in one matmul) ----
        def gin_layer(h, w1_ref, b1_ref, w2_ref, b2_ref, g_ref, bt_ref,
                      relu_out):
            agg = jnp.dot(adj, h, preferred_element_type=jnp.float32)
            z = (1.0 + GIN_EPS) * h + agg
            z = jnp.dot(z, w1_ref[...],
                        preferred_element_type=jnp.float32) + b1_ref[...]
            z = jnp.maximum(z, 0.0)
            z = jnp.dot(z, w2_ref[...],
                        preferred_element_type=jnp.float32) + b2_ref[...]
            # BatchNorm1d(track_running_stats=False): batch stats per graph,
            # over the unpadded rows only (biased variance, as in PyTorch).
            mu1 = jnp.sum(z * m1, axis=0, keepdims=True) * inv_n1
            mu2 = jnp.sum(z * m2, axis=0, keepdims=True) * inv_n2
            mean_rows = m1 * mu1 + m2 * mu2
            d = z - mean_rows
            v1 = jnp.sum(d * d * m1, axis=0, keepdims=True) * inv_n1
            v2 = jnp.sum(d * d * m2, axis=0, keepdims=True) * inv_n2
            var_rows = m1 * v1 + m2 * v2
            zn = d * jax.lax.rsqrt(var_rows + BN_EPS)
            zn = zn * g_ref[...] + bt_ref[...]
            zn = zn * rmask                      # padded rows stay exactly 0
            if relu_out:
                zn = jnp.maximum(zn, 0.0)        # post-conv ReLU (layers 1, 2)
            return zn

        h = gin_layer(x_ref[...], g1w1_ref, g1b1_ref, g1w2_ref, g1b2_ref,
                      g1g_ref, g1bt_ref, True)
        h = gin_layer(h, g2w1_ref, g2b1_ref, g2w2_ref, g2b2_ref,
                      g2g_ref, g2bt_ref, True)
        h = gin_layer(h, g3w1_ref, g3b1_ref, g3w2_ref, g3b2_ref,
                      g3g_ref, g3bt_ref, False)  # no ReLU after conv_3

        af1 = h[:npad, :]                        # (Np, 32), zero padded rows
        af2 = h[npad:, :]                        # (Np, 32), zero padded rows

        # ------------- pairwise energy / softmax attention / cost -----------
        # Pair row r = i*Np + j.  fc1 has no bias, so it distributes over
        # af1[i] + af2[j]; a single combined selector matmul builds the sum.
        pp = jnp.dot(h, fc1_ref[...],
                     preferred_element_type=jnp.float32)          # (2Np, 64)
        r12 = jnp.dot(sel_pair_ref[...], pp,
                      preferred_element_type=jnp.float32)         # (Np^2, 64)
        h1 = jnp.maximum(r12, 0.0)
        h2 = jnp.maximum(jnp.dot(h1, fc2_ref[...],
                                 preferred_element_type=jnp.float32), 0.0)
        # energy E[i,j] as a (Np^2, 1) column; fc3 weight pre-transposed (1,32)
        e = jnp.sum(h2 * fc3t_ref[...], axis=1, keepdims=True) + fc3b_ref[...]
        e = e + colbias_ref[...]                 # -1e30 on columns j >= max_len
        m_glob = jnp.max(e, axis=0, keepdims=True)
        pcol = jnp.exp(e - m_glob)               # masked entries underflow to 0

        # Pmat[i, j] = pcol[i*Np + j]  (unnormalised per-row-i attention)
        pmat = jnp.dot(sel_i_t_ref[...], pcol * sel_j_ref[...],
                       preferred_element_type=jnp.float32)        # (Np, Np)
        den_i = jnp.sum(pmat, axis=1, keepdims=True)              # (Np, 1)
        pf1 = jnp.dot(pmat, af1,
                      preferred_element_type=jnp.float32)         # (Np, 32)
        num_i = jnp.sum(pf1 * af2, axis=1, keepdims=True)         # (Np, 1)
        # cost = sum_i ( sum_j P[i,j] * <af1[j], af2[i]> ) / ( sum_j P[i,j] )
        cost = jnp.sum(num_i / (den_i + 1e-30), axis=0, keepdims=True)  # (1,1)

        # ------------- SimGNN attention pooling (both graphs) ---------------
        attw = attw_ref[...]

        def attention_pool(emb):                  # emb (Np, 32), padded rows 0
            ctx = jnp.sum(jnp.dot(emb, attw,
                                  preferred_element_type=jnp.float32),
                          axis=0, keepdims=True) * inv_max_len    # (1, 32)
            t = jnp.tanh(ctx)
            s = jax.nn.sigmoid(jnp.sum(emb * t, axis=1, keepdims=True))
            return jnp.sum(s * emb, axis=0, keepdims=True)        # (1, 32)

        p1 = attention_pool(af1)
        p2 = attention_pool(af2)

        # ------------- NTN bilinear + block term (all 2-D, no relayout) -----
        # ntnw_ref pre-arranged as (32, 16*32), column index = k*32 + b, so
        #   scoring[k] = sum_{a,b} p1[a] * W[a,b,k] * p2[b]
        v = jnp.dot(p1, ntnw_ref[...],
                    preferred_element_type=jnp.float32)           # (1, 512)
        p2t = jnp.dot(p2, tile_ref[...],
                      preferred_element_type=jnp.float32)         # (1, 512)
        scoring = jnp.dot(v * p2t, gsum_ref[...],
                          preferred_element_type=jnp.float32)     # (1, 16)
        block = (jnp.dot(p1, blockt_ref[0:32, :],
                         preferred_element_type=jnp.float32)
                 + jnp.dot(p2, blockt_ref[32:64, :],
                           preferred_element_type=jnp.float32))   # (1, 16)
        s = jnp.maximum(scoring + block + ntnb_ref[...], 0.0)

        # ------------- scoring head ------------------------------------------
        s = jnp.maximum(jnp.dot(s, h1w_ref[...],
                                preferred_element_type=jnp.float32)
                        + h1b_ref[...], 0.0)                      # (1, 16)
        s = jnp.maximum(jnp.dot(s, h2w_ref[...],
                                preferred_element_type=jnp.float32)
                        + h2b_ref[...], 0.0)                      # (1, 8)
        s = jnp.maximum(jnp.dot(s, h3w_ref[...],
                                preferred_element_type=jnp.float32)
                        + h3b_ref[...], 0.0)                      # (1, 4)
        bias_score = jnp.dot(s, hsw_ref[...],
                             preferred_element_type=jnp.float32) + hsb_ref[...]

        score = jax.nn.sigmoid(cost + bias_score)                 # (1, 1)
        score_ref[...] = score
        preged_ref[...] = score * hb_ref[...]

    return kernel


# ----------------------------------------------------------------------------
# Forward pass (eval mode: dropout = identity).  Everything under one jit so
# the adjacency scatter and the constant selector matrices fuse with the single
# pallas_call; the entire model math runs in ONE kernel launch.
# ----------------------------------------------------------------------------
def ged_gnn_forward(params, edge_index_1, features_1, edge_index_2, features_2,
                    hb):
    n1 = features_1.shape[0]
    n2 = features_2.shape[0]
    f0 = features_1.shape[1]
    max_len = max(n1, n2)
    npad = max(8, ((max_len + 7) // 8) * 8)       # sublane-aligned padding
    ntot = 2 * npad

    # stacked, zero-padded node features: graph1 rows [0,n1), graph2 [npad,npad+n2)
    x = jnp.zeros((ntot, f0), jnp.float32)
    x = x.at[:n1, :].set(features_1.astype(jnp.float32))
    x = x.at[npad:npad + n2, :].set(features_2.astype(jnp.float32))

    # block-diagonal dense adjacency; adj[dst, src] = edge multiplicity
    adj = jnp.zeros((ntot, ntot), jnp.float32)
    adj = adj.at[edge_index_1[1], edge_index_1[0]].add(1.0)
    adj = adj.at[npad + edge_index_2[1], npad + edge_index_2[0]].add(1.0)

    # valid-row masks per graph
    ridx = jnp.arange(ntot)
    m1 = (ridx < n1).astype(jnp.float32)[:, None]
    m2 = ((ridx >= npad) & (ridx < npad + n2)).astype(jnp.float32)[:, None]

    # constant pair-index selectors (row r = i*npad + j) and softmax column mask
    pr = jnp.arange(npad * npad)
    i_idx = pr // npad
    j_idx = pr % npad
    cols = jnp.arange(npad)
    cols2 = jnp.arange(ntot)
    sel_pair = ((cols2[None, :] == i_idx[:, None]) |
                (cols2[None, :] == (npad + j_idx)[:, None])
                ).astype(jnp.float32)                               # (Np^2, 2Np)
    sel_j = (j_idx[:, None] == cols[None, :]).astype(jnp.float32)   # (Np^2, Np)
    sel_i_t = (i_idx[None, :] == cols[:, None]).astype(jnp.float32)  # (Np, Np^2)
    colbias = jnp.where(j_idx < max_len, 0.0, -1e30)
    colbias = colbias.astype(jnp.float32)[:, None]                  # (Np^2, 1)

    # NTN weight pre-arranged: ntn_w_r[a, k*32 + b] = W[a, b, k]
    ntn_w_r = jnp.transpose(params["ntn_w"], (0, 2, 1)).reshape(32, 16 * 32)
    tile_mat = jnp.tile(jnp.eye(32, dtype=jnp.float32), (1, 16))    # (32, 512)
    gsum_mat = jnp.kron(jnp.eye(16, dtype=jnp.float32),
                        jnp.ones((32, 1), jnp.float32))             # (512, 16)

    hb_arr = jnp.asarray(hb, jnp.float32).reshape(1, 1)

    p = params
    pre_ged, score = pl.pallas_call(
        _make_fused_kernel(npad, 1.0 / n1, 1.0 / n2, 1.0 / max_len),
        out_shape=(jax.ShapeDtypeStruct((1, 1), jnp.float32),
                   jax.ShapeDtypeStruct((1, 1), jnp.float32)),
        in_specs=[VMEM_SPEC] * 45,
        out_specs=(VMEM_SPEC, VMEM_SPEC),
    )(adj, x, m1, m2, sel_pair, sel_j, sel_i_t, colbias,
      p["g1_w1"], p["g1_b1"], p["g1_w2"], p["g1_b2"], p["g1_gamma"], p["g1_beta"],
      p["g2_w1"], p["g2_b1"], p["g2_w2"], p["g2_b2"], p["g2_gamma"], p["g2_beta"],
      p["g3_w1"], p["g3_b1"], p["g3_w2"], p["g3_b2"], p["g3_gamma"], p["g3_beta"],
      p["fc1_w"], p["fc2_w"], jnp.transpose(p["fc3_w"]), p["fc3_b"], p["att_w"],
      ntn_w_r, tile_mat, gsum_mat, p["ntn_block_t"], p["ntn_bias"],
      p["h1_w"], p["h1_b"], p["h2_w"], p["h2_b"], p["h3_w"], p["h3_b"],
      p["hs_w"], p["hs_b"], hb_arr)

    return pre_ged.reshape(-1), score.reshape(-1)


ged_gnn_forward_jit = jax.jit(ged_gnn_forward)


# ----------------------------------------------------------------------------
# Deterministic synthetic parameter initialization (shapes from __init__)
# ----------------------------------------------------------------------------
def init_params(num_labels, key):
    keys = iter(jax.random.split(key, 32))

    def w(shape, scale=0.1):
        return jax.random.normal(next(keys), shape, jnp.float32) * scale

    p = {}
    # GINConv MLPs (weights stored pre-transposed for x @ W)
    for name, din, h in [("g1", num_labels, 128), ("g2", 128, 64), ("g3", 64, 32)]:
        p[f"{name}_w1"] = w((din, h))
        p[f"{name}_b1"] = w((1, h))
        p[f"{name}_w2"] = w((h, h))
        p[f"{name}_b2"] = w((1, h))
        p[f"{name}_gamma"] = jnp.ones((1, h), jnp.float32)
        p[f"{name}_beta"] = jnp.zeros((1, h), jnp.float32)
    # pairwise-energy MLP (fully_cnnected_1/2 no bias, fully_cnnected_3 bias)
    p["fc1_w"] = w((32, 64))
    p["fc2_w"] = w((64, 32))
    p["fc3_w"] = w((32, 1))
    p["fc3_b"] = w((1, 1))
    # AttentionModule / TensorNetworkModule (SimGNN, filters_3=32, tensor_neurons=16)
    p["att_w"] = w((32, 32))
    p["ntn_w"] = w((32, 32, 16))
    p["ntn_block_t"] = w((64, 16))        # W_block (16,64) stored transposed
    p["ntn_bias"] = w((1, 16))
    # scoring head
    p["h1_w"] = w((16, 16)); p["h1_b"] = w((1, 16))
    p["h2_w"] = w((16, 8));  p["h2_b"] = w((1, 8))
    p["h3_w"] = w((8, 4));   p["h3_b"] = w((1, 4))
    p["hs_w"] = w((4, 1));   p["hs_b"] = w((1, 1))
    return p


if __name__ == "__main__":
    num_labels = 8
    n1, n2 = 10, 12

    key = jax.random.PRNGKey(0)
    params = init_params(num_labels, key)

    # deterministic small graphs (directed edge lists, both directions)
    ring1 = [(i, (i + 1) % n1) for i in range(n1)]
    edges1 = ring1 + [(b, a) for (a, b) in ring1]
    edge_index_1 = jnp.array(edges1, dtype=jnp.int32).T          # (2, 20)

    ring2 = [(i, (i + 1) % n2) for i in range(n2)] + [(0, 6)]
    edges2 = ring2 + [(b, a) for (a, b) in ring2]
    edge_index_2 = jnp.array(edges2, dtype=jnp.int32).T          # (2, 26)

    # one-hot node label features
    features_1 = jax.nn.one_hot(jnp.arange(n1) % num_labels, num_labels,
                                dtype=jnp.float32)               # (10, 8)
    features_2 = jax.nn.one_hot(jnp.arange(n2) % num_labels, num_labels,
                                dtype=jnp.float32)               # (12, 8)
    hb = jnp.float32(7.0)

    pre_ged, score = ged_gnn_forward_jit(params, edge_index_1, features_1,
                                         edge_index_2, features_2, hb)
    jax.block_until_ready((pre_ged, score))
    print("KERNEL_OK")
</pallas_src>

<mosaic_0001>
module attributes {stable_mosaic.version = 11 : i64} {
  func.func @kernel(%arg0: memref<32x32xf32, #tpu.memory_space<vmem>>, %arg1: memref<32x8xf32, #tpu.memory_space<vmem>>, %arg2: memref<32x1xf32, #tpu.memory_space<vmem>>, %arg3: memref<32x1xf32, #tpu.memory_space<vmem>>, %arg4: memref<256x32xf32, #tpu.memory_space<vmem>>, %arg5: memref<256x16xf32, #tpu.memory_space<vmem>>, %arg6: memref<16x256xf32, #tpu.memory_space<vmem>>, %arg7: memref<256x1xf32, #tpu.memory_space<vmem>>, %arg8: memref<8x128xf32, #tpu.memory_space<vmem>>, %arg9: memref<1x128xf32, #tpu.memory_space<vmem>>, %arg10: memref<128x128xf32, #tpu.memory_space<vmem>>, %arg11: memref<1x128xf32, #tpu.memory_space<vmem>>, %arg12: memref<1x128xf32, #tpu.memory_space<vmem>>, %arg13: memref<1x128xf32, #tpu.memory_space<vmem>>, %arg14: memref<128x64xf32, #tpu.memory_space<vmem>>, %arg15: memref<1x64xf32, #tpu.memory_space<vmem>>, %arg16: memref<64x64xf32, #tpu.memory_space<vmem>>, %arg17: memref<1x64xf32, #tpu.memory_space<vmem>>, %arg18: memref<1x64xf32, #tpu.memory_space<vmem>>, %arg19: memref<1x64xf32, #tpu.memory_space<vmem>>, %arg20: memref<64x32xf32, #tpu.memory_space<vmem>>, %arg21: memref<1x32xf32, #tpu.memory_space<vmem>>, %arg22: memref<32x32xf32, #tpu.memory_space<vmem>>, %arg23: memref<1x32xf32, #tpu.memory_space<vmem>>, %arg24: memref<1x32xf32, #tpu.memory_space<vmem>>, %arg25: memref<1x32xf32, #tpu.memory_space<vmem>>, %arg26: memref<32x64xf32, #tpu.memory_space<vmem>>, %arg27: memref<64x32xf32, #tpu.memory_space<vmem>>, %arg28: memref<1x32xf32, #tpu.memory_space<vmem>>, %arg29: memref<1x1xf32, #tpu.memory_space<vmem>>, %arg30: memref<32x32xf32, #tpu.memory_space<vmem>>, %arg31: memref<32x512xf32, #tpu.memory_space<vmem>>, %arg32: memref<32x512xf32, #tpu.memory_space<vmem>>, %arg33: memref<512x16xf32, #tpu.memory_space<vmem>>, %arg34: memref<64x16xf32, #tpu.memory_space<vmem>>, %arg35: memref<1x16xf32, #tpu.memory_space<vmem>>, %arg36: memref<16x16xf32, #tpu.memory_space<vmem>>, %arg37: memref<1x16xf32, #tpu.memory_space<vmem>>, %arg38: memref<16x8xf32, #tpu.memory_space<vmem>>, %arg39: memref<1x8xf32, #tpu.memory_space<vmem>>, %arg40: memref<8x4xf32, #tpu.memory_space<vmem>>, %arg41: memref<1x4xf32, #tpu.memory_space<vmem>>, %arg42: memref<4x1xf32, #tpu.memory_space<vmem>>, %arg43: memref<1x1xf32, #tpu.memory_space<vmem>>, %arg44: memref<1x1xf32, #tpu.memory_space<vmem>>, %arg45: memref<1x1xf32, #tpu.memory_space<vmem>>, %arg46: memref<1x1xf32, #tpu.memory_space<vmem>>) attributes {dimension_semantics = [], scalar_prefetch = 0 : i64, scratch_operands = 0 : i64, tpu.core_type = #tpu.core_type<tc>} {
    %c0 = arith.constant 0 : index
    %c0_0 = arith.constant 0 : index
    %0 = vector.load %arg0[%c0, %c0_0] : memref<32x32xf32, #tpu.memory_space<vmem>>, vector<32x32xf32>
    %c0_1 = arith.constant 0 : index
    %c0_2 = arith.constant 0 : index
    %1 = vector.load %arg2[%c0_1, %c0_2] : memref<32x1xf32, #tpu.memory_space<vmem>>, vector<32x1xf32>
    %c0_3 = arith.constant 0 : index
    %c0_4 = arith.constant 0 : index
    %2 = vector.load %arg3[%c0_3, %c0_4] : memref<32x1xf32, #tpu.memory_space<vmem>>, vector<32x1xf32>
    %3 = arith.addf %1, %2 : vector<32x1xf32>
    %c0_5 = arith.constant 0 : index
    %c0_6 = arith.constant 0 : index
    %4 = vector.load %arg1[%c0_5, %c0_6] : memref<32x8xf32, #tpu.memory_space<vmem>>, vector<32x8xf32>
    %cst = arith.constant dense<0.000000e+00> : vector<32x8xf32>
    %5 = tpu.matmul %0, %4, %cst {dimension_numbers = #tpu.dot_dimension_numbers<[1], [0], [0], [1], [0, 0, 1, 1], [], []>} : vector<32x32xf32>, vector<32x8xf32>, vector<32x8xf32> -> vector<32x8xf32>
    %cst_7 = arith.constant 1.000000e+00 : f32
    %6 = vector.broadcast %cst_7 : f32 to vector<32x8xf32>
    %7 = arith.mulf %6, %4 : vector<32x8xf32>
    %8 = arith.addf %7, %5 : vector<32x8xf32>
    %c0_8 = arith.constant 0 : index
    %c0_9 = arith.constant 0 : index
    %9 = vector.load %arg8[%c0_8, %c0_9] : memref<8x128xf32, #tpu.memory_space<vmem>>, vector<8x128xf32>
    %cst_10 = arith.constant dense<0.000000e+00> : vector<32x128xf32>
    %10 = tpu.matmul %8, %9, %cst_10 {dimension_numbers = #tpu.dot_dimension_numbers<[1], [0], [0], [1], [0, 0, 1, 1], [], []>} : vector<32x8xf32>, vector<8x128xf32>, vector<32x128xf32> -> vector<32x128xf32>
    %c0_11 = arith.constant 0 : index
    %c0_12 = arith.constant 0 : index
    %11 = vector.load %arg9[%c0_11, %c0_12] : memref<1x128xf32, #tpu.memory_space<vmem>>, vector<1x128xf32>
    %12 = vector.broadcast %11 : vector<1x128xf32> to vector<32x128xf32>
    %13 = arith.addf %10, %12 : vector<32x128xf32>
    %cst_13 = arith.constant 0.000000e+00 : f32
    %14 = vector.broadcast %cst_13 : f32 to vector<32x128xf32>
    %15 = arith.maximumf %13, %14 : vector<32x128xf32>
    %c0_14 = arith.constant 0 : index
    %c0_15 = arith.constant 0 : index
    %16 = vector.load %arg10[%c0_14, %c0_15] : memref<128x128xf32, #tpu.memory_space<vmem>>, vector<128x128xf32>
    %cst_16 = arith.constant dense<0.000000e+00> : vector<32x128xf32>
    %17 = tpu.matmul %15, %16, %cst_16 {dimension_numbers = #tpu.dot_dimension_numbers<[1], [0], [0], [1], [0, 0, 1, 1], [], []>} : vector<32x128xf32>, vector<128x128xf32>, vector<32x128xf32> -> vector<32x128xf32>
    %c0_17 = arith.constant 0 : index
    %c0_18 = arith.constant 0 : index
    %18 = vector.load %arg11[%c0_17, %c0_18] : memref<1x128xf32, #tpu.memory_space<vmem>>, vector<1x128xf32>
    %19 = vector.broadcast %18 : vector<1x128xf32> to vector<32x128xf32>
    %20 = arith.addf %17, %19 : vector<32x128xf32>
    %21 = vector.broadcast %1 : vector<32x1xf32> to vector<32x128xf32>
    %22 = arith.mulf %20, %21 : vector<32x128xf32>
    %cst_19 = arith.constant dense<0.000000e+00> : vector<128xf32>
    %23 = vector.multi_reduction <add>, %22, %cst_19 [0] : vector<32x128xf32> to vector<128xf32>
    %24 = vector.shape_cast %23 : vector<128xf32> to vector<1x128xf32>
    %cst_20 = arith.constant 1.000000e-01 : f32
    %25 = vector.broadcast %cst_20 : f32 to vector<1x128xf32>
    %26 = arith.mulf %24, %25 : vector<1x128xf32>
    %27 = vector.broadcast %2 : vector<32x1xf32> to vector<32x128xf32>
    %28 = arith.mulf %20, %27 : vector<32x128xf32>
    %cst_21 = arith.constant dense<0.000000e+00> : vector<128xf32>
    %29 = vector.multi_reduction <add>, %28, %cst_21 [0] : vector<32x128xf32> to vector<128xf32>
    %30 = vector.shape_cast %29 : vector<128xf32> to vector<1x128xf32>
    %cst_22 = arith.constant 0.0833333358 : f32
    %31 = vector.broadcast %cst_22 : f32 to vector<1x128xf32>
    %32 = arith.mulf %30, %31 : vector<1x128xf32>
    %33 = vector.broadcast %1 : vector<32x1xf32> to vector<32x128xf32>
    %34 = vector.broadcast %26 : vector<1x128xf32> to vector<32x128xf32>
    %35 = arith.mulf %33, %34 : vector<32x128xf32>
    %36 = vector.broadcast %2 : vector<32x1xf32> to vector<32x128xf32>
    %37 = vector.broadcast %32 : vector<1x128xf32> to vector<32x128xf32>
    %38 = arith.mulf %36, %37 : vector<32x128xf32>
    %39 = arith.addf %35, %38 : vector<32x128xf32>
    %40 = arith.subf %20, %39 : vector<32x128xf32>
    %41 = arith.mulf %40, %40 : vector<32x128xf32>
    %42 = vector.broadcast %1 : vector<32x1xf32> to vector<32x128xf32>
    %43 = arith.mulf %41, %42 : vector<32x128xf32>
    %cst_23 = arith.constant dense<0.000000e+00> : vector<128xf32>
    %44 = vector.multi_reduction <add>, %43, %cst_23 [0] : vector<32x128xf32> to vector<128xf32>
    %45 = vector.shape_cast %44 : vector<128xf32> to vector<1x128xf32>
    %cst_24 = arith.constant 1.000000e-01 : f32
    %46 = vector.broadcast %cst_24 : f32 to vector<1x128xf32>
    %47 = arith.mulf %45, %46 : vector<1x128xf32>
    %48 = arith.mulf %40, %40 : vector<32x128xf32>
    %49 = vector.broadcast %2 : vector<32x1xf32> to vector<32x128xf32>
    %50 = arith.mulf %48, %49 : vector<32x128xf32>
    %cst_25 = arith.constant dense<0.000000e+00> : vector<128xf32>
    %51 = vector.multi_reduction <add>, %50, %cst_25 [0] : vector<32x128xf32> to vector<128xf32>
    %52 = vector.shape_cast %51 : vector<128xf32> to vector<1x128xf32>
    %cst_26 = arith.constant 0.0833333358 : f32
    %53 = vector.broadcast %cst_26 : f32 to vector<1x128xf32>
    %54 = arith.mulf %52, %53 : vector<1x128xf32>
    %55 = vector.broadcast %1 : vector<32x1xf32> to vector<32x128xf32>
    %56 = vector.broadcast %47 : vector<1x128xf32> to vector<32x128xf32>
    %57 = arith.mulf %55, %56 : vector<32x128xf32>
    %58 = vector.broadcast %2 : vector<32x1xf32> to vector<32x128xf32>
    %59 = vector.broadcast %54 : vector<1x128xf32> to vector<32x128xf32>
    %60 = arith.mulf %58, %59 : vector<32x128xf32>
    %61 = arith.addf %57, %60 : vector<32x128xf32>
    %cst_27 = arith.constant 9.99999974E-6 : f32
    %62 = vector.broadcast %cst_27 : f32 to vector<32x128xf32>
    %63 = arith.addf %61, %62 : vector<32x128xf32>
    %64 = math.rsqrt %63 : vector<32x128xf32>
    %65 = arith.mulf %40, %64 : vector<32x128xf32>
    %c0_28 = arith.constant 0 : index
    %c0_29 = arith.constant 0 : index
    %66 = vector.load %arg12[%c0_28, %c0_29] : memref<1x128xf32, #tpu.memory_space<vmem>>, vector<1x128xf32>
    %67 = vector.broadcast %66 : vector<1x128xf32> to vector<32x128xf32>
    %68 = arith.mulf %65, %67 : vector<32x128xf32>
    %c0_30 = arith.constant 0 : index
    %c0_31 = arith.constant 0 : index
    %69 = vector.load %arg13[%c0_30, %c0_31] : memref<1x128xf32, #tpu.memory_space<vmem>>, vector<1x128xf32>
    %70 = vector.broadcast %69 : vector<1x128xf32> to vector<32x128xf32>
    %71 = arith.addf %68, %70 : vector<32x128xf32>
    %72 = vector.broadcast %3 : vector<32x1xf32> to vector<32x128xf32>
    %73 = arith.mulf %71, %72 : vector<32x128xf32>
    %cst_32 = arith.constant 0.000000e+00 : f32
    %74 = vector.broadcast %cst_32 : f32 to vector<32x128xf32>
    %75 = arith.maximumf %73, %74 : vector<32x128xf32>
    %cst_33 = arith.constant dense<0.000000e+00> : vector<32x128xf32>
    %76 = tpu.matmul %0, %75, %cst_33 {dimension_numbers = #tpu.dot_dimension_numbers<[1], [0], [0], [1], [0, 0, 1, 1], [], []>} : vector<32x32xf32>, vector<32x128xf32>, vector<32x128xf32> -> vector<32x128xf32>
    %cst_34 = arith.constant 1.000000e+00 : f32
    %77 = vector.broadcast %cst_34 : f32 to vector<32x128xf32>
    %78 = arith.mulf %77, %75 : vector<32x128xf32>
    %79 = arith.addf %78, %76 : vector<32x128xf32>
    %c0_35 = arith.constant 0 : index
    %c0_36 = arith.constant 0 : index
    %80 = vector.load %arg14[%c0_35, %c0_36] : memref<128x64xf32, #tpu.memory_space<vmem>>, vector<128x64xf32>
    %cst_37 = arith.constant dense<0.000000e+00> : vector<32x64xf32>
    %81 = tpu.matmul %79, %80, %cst_37 {dimension_numbers = #tpu.dot_dimension_numbers<[1], [0], [0], [1], [0, 0, 1, 1], [], []>} : vector<32x128xf32>, vector<128x64xf32>, vector<32x64xf32> -> vector<32x64xf32>
    %c0_38 = arith.constant 0 : index
    %c0_39 = arith.constant 0 : index
    %82 = vector.load %arg15[%c0_38, %c0_39] : memref<1x64xf32, #tpu.memory_space<vmem>>, vector<1x64xf32>
    %83 = vector.broadcast %82 : vector<1x64xf32> to vector<32x64xf32>
    %84 = arith.addf %81, %83 : vector<32x64xf32>
    %cst_40 = arith.constant 0.000000e+00 : f32
    %85 = vector.broadcast %cst_40 : f32 to vector<32x64xf32>
    %86 = arith.maximumf %84, %85 : vector<32x64xf32>
    %c0_41 = arith.constant 0 : index
    %c0_42 = arith.constant 0 : index
    %87 = vector.load %arg16[%c0_41, %c0_42] : memref<64x64xf32, #tpu.memory_space<vmem>>, vector<64x64xf32>
    %cst_43 = arith.constant dense<0.000000e+00> : vector<32x64xf32>
    %88 = tpu.matmul %86, %87, %cst_43 {dimension_numbers = #tpu.dot_dimension_numbers<[1], [0], [0], [1], [0, 0, 1, 1], [], []>} : vector<32x64xf32>, vector<64x64xf32>, vector<32x64xf32> -> vector<32x64xf32>
    %c0_44 = arith.constant 0 : index
    %c0_45 = arith.constant 0 : index
    %89 = vector.load %arg17[%c0_44, %c0_45] : memref<1x64xf32, #tpu.memory_space<vmem>>, vector<1x64xf32>
    %90 = vector.broadcast %89 : vector<1x64xf32> to vector<32x64xf32>
    %91 = arith.addf %88, %90 : vector<32x64xf32>
    %92 = vector.broadcast %1 : vector<32x1xf32> to vector<32x64xf32>
    %93 = arith.mulf %91, %92 : vector<32x64xf32>
    %cst_46 = arith.constant dense<0.000000e+00> : vector<64xf32>
    %94 = vector.multi_reduction <add>, %93, %cst_46 [0] : vector<32x64xf32> to vector<64xf32>
    %95 = vector.shape_cast %94 : vector<64xf32> to vector<1x64xf32>
    %cst_47 = arith.constant 1.000000e-01 : f32
    %96 = vector.broadcast %cst_47 : f32 to vector<1x64xf32>
    %97 = arith.mulf %95, %96 : vector<1x64xf32>
    %98 = vector.broadcast %2 : vector<32x1xf32> to vector<32x64xf32>
    %99 = arith.mulf %91, %98 : vector<32x64xf32>
    %cst_48 = arith.constant dense<0.000000e+00> : vector<64xf32>
    %100 = vector.multi_reduction <add>, %99, %cst_48 [0] : vector<32x64xf32> to vector<64xf32>
    %101 = vector.shape_cast %100 : vector<64xf32> to vector<1x64xf32>
    %cst_49 = arith.constant 0.0833333358 : f32
    %102 = vector.broadcast %cst_49 : f32 to vector<1x64xf32>
    %103 = arith.mulf %101, %102 : vector<1x64xf32>
    %104 = vector.broadcast %1 : vector<32x1xf32> to vector<32x64xf32>
    %105 = vector.broadcast %97 : vector<1x64xf32> to vector<32x64xf32>
    %106 = arith.mulf %104, %105 : vector<32x64xf32>
    %107 = vector.broadcast %2 : vector<32x1xf32> to vector<32x64xf32>
    %108 = vector.broadcast %103 : vector<1x64xf32> to vector<32x64xf32>
    %109 = arith.mulf %107, %108 : vector<32x64xf32>
    %110 = arith.addf %106, %109 : vector<32x64xf32>
    %111 = arith.subf %91, %110 : vector<32x64xf32>
    %112 = arith.mulf %111, %111 : vector<32x64xf32>
    %113 = vector.broadcast %1 : vector<32x1xf32> to vector<32x64xf32>
    %114 = arith.mulf %112, %113 : vector<32x64xf32>
    %cst_50 = arith.constant dense<0.000000e+00> : vector<64xf32>
    %115 = vector.multi_reduction <add>, %114, %cst_50 [0] : vector<32x64xf32> to vector<64xf32>
    %116 = vector.shape_cast %115 : vector<64xf32> to vector<1x64xf32>
    %cst_51 = arith.constant 1.000000e-01 : f32
    %117 = vector.broadcast %cst_51 : f32 to vector<1x64xf32>
    %118 = arith.mulf %116, %117 : vector<1x64xf32>
    %119 = arith.mulf %111, %111 : vector<32x64xf32>
    %120 = vector.broadcast %2 : vector<32x1xf32> to vector<32x64xf32>
    %121 = arith.mulf %119, %120 : vector<32x64xf32>
    %cst_52 = arith.constant dense<0.000000e+00> : vector<64xf32>
    %122 = vector.multi_reduction <add>, %121, %cst_52 [0] : vector<32x64xf32> to vector<64xf32>
    %123 = vector.shape_cast %122 : vector<64xf32> to vector<1x64xf32>
    %cst_53 = arith.constant 0.0833333358 : f32
    %124 = vector.broadcast %cst_53 : f32 to vector<1x64xf32>
    %125 = arith.mulf %123, %124 : vector<1x64xf32>
    %126 = vector.broadcast %1 : vector<32x1xf32> to vector<32x64xf32>
    %127 = vector.broadcast %118 : vector<1x64xf32> to vector<32x64xf32>
    %128 = arith.mulf %126, %127 : vector<32x64xf32>
    %129 = vector.broadcast %2 : vector<32x1xf32> to vector<32x64xf32>
    %130 = vector.broadcast %125 : vector<1x64xf32> to vector<32x64xf32>
    %131 = arith.mulf %129, %130 : vector<32x64xf32>
    %132 = arith.addf %128, %131 : vector<32x64xf32>
    %cst_54 = arith.constant 9.99999974E-6 : f32
    %133 = vector.broadcast %cst_54 : f32 to vector<32x64xf32>
    %134 = arith.addf %132, %133 : vector<32x64xf32>
    %135 = math.rsqrt %134 : vector<32x64xf32>
    %136 = arith.mulf %111, %135 : vector<32x64xf32>
    %c0_55 = arith.constant 0 : index
    %c0_56 = arith.constant 0 : index
    %137 = vector.load %arg18[%c0_55, %c0_56] : memref<1x64xf32, #tpu.memory_space<vmem>>, vector<1x64xf32>
    %138 = vector.broadcast %137 : vector<1x64xf32> to vector<32x64xf32>
    %139 = arith.mulf %136, %138 : vector<32x64xf32>
    %c0_57 = arith.constant 0 : index
    %c0_58 = arith.constant 0 : index
    %140 = vector.load %arg19[%c0_57, %c0_58] : memref<1x64xf32, #tpu.memory_space<vmem>>, vector<1x64xf32>
    %141 = vector.broadcast %140 : vector<1x64xf32> to vector<32x64xf32>
    %142 = arith.addf %139, %141 : vector<32x64xf32>
    %143 = vector.broadcast %3 : vector<32x1xf32> to vector<32x64xf32>
    %144 = arith.mulf %142, %143 : vector<32x64xf32>
    %cst_59 = arith.constant 0.000000e+00 : f32
    %145 = vector.broadcast %cst_59 : f32 to vector<32x64xf32>
    %146 = arith.maximumf %144, %145 : vector<32x64xf32>
    %cst_60 = arith.constant dense<0.000000e+00> : vector<32x64xf32>
    %147 = tpu.matmul %0, %146, %cst_60 {dimension_numbers = #tpu.dot_dimension_numbers<[1], [0], [0], [1], [0, 0, 1, 1], [], []>} : vector<32x32xf32>, vector<32x64xf32>, vector<32x64xf32> -> vector<32x64xf32>
    %cst_61 = arith.constant 1.000000e+00 : f32
    %148 = vector.broadcast %cst_61 : f32 to vector<32x64xf32>
    %149 = arith.mulf %148, %146 : vector<32x64xf32>
    %150 = arith.addf %149, %147 : vector<32x64xf32>
    %c0_62 = arith.constant 0 : index
    %c0_63 = arith.constant 0 : index
    %151 = vector.load %arg20[%c0_62, %c0_63] : memref<64x32xf32, #tpu.memory_space<vmem>>, vector<64x32xf32>
    %cst_64 = arith.constant dense<0.000000e+00> : vector<32x32xf32>
    %152 = tpu.matmul %150, %151, %cst_64 {dimension_numbers = #tpu.dot_dimension_numbers<[1], [0], [0], [1], [0, 0, 1, 1], [], []>} : vector<32x64xf32>, vector<64x32xf32>, vector<32x32xf32> -> vector<32x32xf32>
    %c0_65 = arith.constant 0 : index
    %c0_66 = arith.constant 0 : index
    %153 = vector.load %arg21[%c0_65, %c0_66] : memref<1x32xf32, #tpu.memory_space<vmem>>, vector<1x32xf32>
    %154 = vector.broadcast %153 : vector<1x32xf32> to vector<32x32xf32>
    %155 = arith.addf %152, %154 : vector<32x32xf32>
    %cst_67 = arith.constant 0.000000e+00 : f32
    %156 = vector.broadcast %cst_67 : f32 to vector<32x32xf32>
    %157 = arith.maximumf %155, %156 : vector<32x32xf32>
    %c0_68 = arith.constant 0 : index
    %c0_69 = arith.constant 0 : index
    %158 = vector.load %arg22[%c0_68, %c0_69] : memref<32x32xf32, #tpu.memory_space<vmem>>, vector<32x32xf32>
    %cst_70 = arith.constant dense<0.000000e+00> : vector<32x32xf32>
    %159 = tpu.matmul %157, %158, %cst_70 {dimension_numbers = #tpu.dot_dimension_numbers<[1], [0], [0], [1], [0, 0, 1, 1], [], []>} : vector<32x32xf32>, vector<32x32xf32>, vector<32x32xf32> -> vector<32x32xf32>
    %c0_71 = arith.constant 0 : index
    %c0_72 = arith.constant 0 : index
    %160 = vector.load %arg23[%c0_71, %c0_72] : memref<1x32xf32, #tpu.memory_space<vmem>>, vector<1x32xf32>
    %161 = vector.broadcast %160 : vector<1x32xf32> to vector<32x32xf32>
    %162 = arith.addf %159, %161 : vector<32x32xf32>
    %163 = vector.broadcast %1 : vector<32x1xf32> to vector<32x32xf32>
    %164 = arith.mulf %162, %163 : vector<32x32xf32>
    %cst_73 = arith.constant dense<0.000000e+00> : vector<32xf32>
    %165 = vector.multi_reduction <add>, %164, %cst_73 [0] : vector<32x32xf32> to vector<32xf32>
    %166 = vector.shape_cast %165 : vector<32xf32> to vector<1x32xf32>
    %cst_74 = arith.constant 1.000000e-01 : f32
    %167 = vector.broadcast %cst_74 : f32 to vector<1x32xf32>
    %168 = arith.mulf %166, %167 : vector<1x32xf32>
    %169 = vector.broadcast %2 : vector<32x1xf32> to vector<32x32xf32>
    %170 = arith.mulf %162, %169 : vector<32x32xf32>
    %cst_75 = arith.constant dense<0.000000e+00> : vector<32xf32>
    %171 = vector.multi_reduction <add>, %170, %cst_75 [0] : vector<32x32xf32> to vector<32xf32>
    %172 = vector.shape_cast %171 : vector<32xf32> to vector<1x32xf32>
    %cst_76 = arith.constant 0.0833333358 : f32
    %173 = vector.broadcast %cst_76 : f32 to vector<1x32xf32>
    %174 = arith.mulf %172, %173 : vector<1x32xf32>
    %175 = vector.broadcast %1 : vector<32x1xf32> to vector<32x32xf32>
    %176 = vector.broadcast %168 : vector<1x32xf32> to vector<32x32xf32>
    %177 = arith.mulf %175, %176 : vector<32x32xf32>
    %178 = vector.broadcast %2 : vector<32x1xf32> to vector<32x32xf32>
    %179 = vector.broadcast %174 : vector<1x32xf32> to vector<32x32xf32>
    %180 = arith.mulf %178, %179 : vector<32x32xf32>
    %181 = arith.addf %177, %180 : vector<32x32xf32>
    %182 = arith.subf %162, %181 : vector<32x32xf32>
    %183 = arith.mulf %182, %182 : vector<32x32xf32>
    %184 = vector.broadcast %1 : vector<32x1xf32> to vector<32x32xf32>
    %185 = arith.mulf %183, %184 : vector<32x32xf32>
    %cst_77 = arith.constant dense<0.000000e+00> : vector<32xf32>
    %186 = vector.multi_reduction <add>, %185, %cst_77 [0] : vector<32x32xf32> to vector<32xf32>
    %187 = vector.shape_cast %186 : vector<32xf32> to vector<1x32xf32>
    %cst_78 = arith.constant 1.000000e-01 : f32
    %188 = vector.broadcast %cst_78 : f32 to vector<1x32xf32>
    %189 = arith.mulf %187, %188 : vector<1x32xf32>
    %190 = arith.mulf %182, %182 : vector<32x32xf32>
    %191 = vector.broadcast %2 : vector<32x1xf32> to vector<32x32xf32>
    %192 = arith.mulf %190, %191 : vector<32x32xf32>
    %cst_79 = arith.constant dense<0.000000e+00> : vector<32xf32>
    %193 = vector.multi_reduction <add>, %192, %cst_79 [0] : vector<32x32xf32> to vector<32xf32>
    %194 = vector.shape_cast %193 : vector<32xf32> to vector<1x32xf32>
    %cst_80 = arith.constant 0.0833333358 : f32
    %195 = vector.broadcast %cst_80 : f32 to vector<1x32xf32>
    %196 = arith.mulf %194, %195 : vector<1x32xf32>
    %197 = vector.broadcast %1 : vector<32x1xf32> to vector<32x32xf32>
    %198 = vector.broadcast %189 : vector<1x32xf32> to vector<32x32xf32>
    %199 = arith.mulf %197, %198 : vector<32x32xf32>
    %200 = vector.broadcast %2 : vector<32x1xf32> to vector<32x32xf32>
    %201 = vector.broadcast %196 : vector<1x32xf32> to vector<32x32xf32>
    %202 = arith.mulf %200, %201 : vector<32x32xf32>
    %203 = arith.addf %199, %202 : vector<32x32xf32>
    %cst_81 = arith.constant 9.99999974E-6 : f32
    %204 = vector.broadcast %cst_81 : f32 to vector<32x32xf32>
    %205 = arith.addf %203, %204 : vector<32x32xf32>
    %206 = math.rsqrt %205 : vector<32x32xf32>
    %207 = arith.mulf %182, %206 : vector<32x32xf32>
    %c0_82 = arith.constant 0 : index
    %c0_83 = arith.constant 0 : index
    %208 = vector.load %arg24[%c0_82, %c0_83] : memref<1x32xf32, #tpu.memory_space<vmem>>, vector<1x32xf32>
    %209 = vector.broadcast %208 : vector<1x32xf32> to vector<32x32xf32>
    %210 = arith.mulf %207, %209 : vector<32x32xf32>
    %c0_84 = arith.constant 0 : index
    %c0_85 = arith.constant 0 : index
    %211 = vector.load %arg25[%c0_84, %c0_85] : memref<1x32xf32, #tpu.memory_space<vmem>>, vector<1x32xf32>
    %212 = vector.broadcast %211 : vector<1x32xf32> to vector<32x32xf32>
    %213 = arith.addf %210, %212 : vector<32x32xf32>
    %214 = vector.broadcast %3 : vector<32x1xf32> to vector<32x32xf32>
    %215 = arith.mulf %213, %214 : vector<32x32xf32>
    %216 = vector.extract_strided_slice %215 {offsets = [0, 0], sizes = [16, 32], strides = [1, 1]} : vector<32x32xf32> to vector<16x32xf32>
    %217 = vector.extract_strided_slice %215 {offsets = [16, 0], sizes = [16, 32], strides = [1, 1]} : vector<32x32xf32> to vector<16x32xf32>
    %c0_86 = arith.constant 0 : index
    %c0_87 = arith.constant 0 : index
    %218 = vector.load %arg26[%c0_86, %c0_87] : memref<32x64xf32, #tpu.memory_space<vmem>>, vector<32x64xf32>
    %cst_88 = arith.constant dense<0.000000e+00> : vector<32x64xf32>
    %219 = tpu.matmul %215, %218, %cst_88 {dimension_numbers = #tpu.dot_dimension_numbers<[1], [0], [0], [1], [0, 0, 1, 1], [], []>} : vector<32x32xf32>, vector<32x64xf32>, vector<32x64xf32> -> vector<32x64xf32>
    %c0_89 = arith.constant 0 : index
    %c0_90 = arith.constant 0 : index
    %220 = vector.load %arg4[%c0_89, %c0_90] : memref<256x32xf32, #tpu.memory_space<vmem>>, vector<256x32xf32>
    %cst_91 = arith.constant dense<0.000000e+00> : vector<256x64xf32>
    %221 = tpu.matmul %220, %219, %cst_91 {dimension_numbers = #tpu.dot_dimension_numbers<[1], [0], [0], [1], [0, 0, 1, 1], [], []>} : vector<256x32xf32>, vector<32x64xf32>, vector<256x64xf32> -> vector<256x64xf32>
    %cst_92 = arith.constant 0.000000e+00 : f32
    %222 = vector.broadcast %cst_92 : f32 to vector<256x64xf32>
    %223 = arith.maximumf %221, %222 : vector<256x64xf32>
    %c0_93 = arith.constant 0 : index
    %c0_94 = arith.constant 0 : index
    %224 = vector.load %arg27[%c0_93, %c0_94] : memref<64x32xf32, #tpu.memory_space<vmem>>, vector<64x32xf32>
    %cst_95 = arith.constant dense<0.000000e+00> : vector<256x32xf32>
    %225 = tpu.matmul %223, %224, %cst_95 {dimension_numbers = #tpu.dot_dimension_numbers<[1], [0], [0], [1], [0, 0, 1, 1], [], []>} : vector<256x64xf32>, vector<64x32xf32>, vector<256x32xf32> -> vector<256x32xf32>
    %cst_96 = arith.constant 0.000000e+00 : f32
    %226 = vector.broadcast %cst_96 : f32 to vector<256x32xf32>
    %227 = arith.maximumf %225, %226 : vector<256x32xf32>
    %c0_97 = arith.constant 0 : index
    %c0_98 = arith.constant 0 : index
    %228 = vector.load %arg28[%c0_97, %c0_98] : memref<1x32xf32, #tpu.memory_space<vmem>>, vector<1x32xf32>
    %229 = vector.broadcast %228 : vector<1x32xf32> to vector<256x32xf32>
    %230 = arith.mulf %227, %229 : vector<256x32xf32>
    %cst_99 = arith.constant dense<0.000000e+00> : vector<256xf32>
    %231 = vector.multi_reduction <add>, %230, %cst_99 [1] : vector<256x32xf32> to vector<256xf32>
    %232 = vector.shape_cast %231 : vector<256xf32> to vector<256x1xf32>
    %c0_100 = arith.constant 0 : index
    %c0_101 = arith.constant 0 : index
    %233 = vector.load %arg29[%c0_100, %c0_101] : memref<1x1xf32, #tpu.memory_space<vmem>>, vector<1x1xf32>
    %234 = vector.broadcast %233 : vector<1x1xf32> to vector<256x1xf32>
    %235 = arith.addf %232, %234 : vector<256x1xf32>
    %c0_102 = arith.constant 0 : index
    %c0_103 = arith.constant 0 : index
    %236 = vector.load %arg7[%c0_102, %c0_103] : memref<256x1xf32, #tpu.memory_space<vmem>>, vector<256x1xf32>
    %237 = arith.addf %235, %236 : vector<256x1xf32>
    %cst_104 = arith.constant dense<0xFF800000> : vector<1xf32>
    %238 = vector.multi_reduction <maximumf>, %237, %cst_104 [0] : vector<256x1xf32> to vector<1xf32>
    %239 = vector.shape_cast %238 : vector<1xf32> to vector<1x1xf32>
    %240 = vector.broadcast %239 : vector<1x1xf32> to vector<256x1xf32>
    %241 = arith.subf %237, %240 : vector<256x1xf32>
    %242 = math.exp %241 : vector<256x1xf32>
    %c0_105 = arith.constant 0 : index
    %c0_106 = arith.constant 0 : index
    %243 = vector.load %arg6[%c0_105, %c0_106] : memref<16x256xf32, #tpu.memory_space<vmem>>, vector<16x256xf32>
    %c0_107 = arith.constant 0 : index
    %c0_108 = arith.constant 0 : index
    %244 = vector.load %arg5[%c0_107, %c0_108] : memref<256x16xf32, #tpu.memory_space<vmem>>, vector<256x16xf32>
    %245 = vector.broadcast %242 : vector<256x1xf32> to vector<256x16xf32>
    %246 = arith.mulf %245, %244 : vector<256x16xf32>
    %cst_109 = arith.constant dense<0.000000e+00> : vector<16x16xf32>
    %247 = tpu.matmul %243, %246, %cst_109 {dimension_numbers = #tpu.dot_dimension_numbers<[1], [0], [0], [1], [0, 0, 1, 1], [], []>} : vector<16x256xf32>, vector<256x16xf32>, vector<16x16xf32> -> vector<16x16xf32>
    %cst_110 = arith.constant dense<0.000000e+00> : vector<16xf32>
    %248 = vector.multi_reduction <add>, %247, %cst_110 [1] : vector<16x16xf32> to vector<16xf32>
    %249 = vector.shape_cast %248 : vector<16xf32> to vector<16x1xf32>
    %cst_111 = arith.constant dense<0.000000e+00> : vector<16x32xf32>
    %250 = tpu.matmul %247, %216, %cst_111 {dimension_numbers = #tpu.dot_dimension_numbers<[1], [0], [0], [1], [0, 0, 1, 1], [], []>} : vector<16x16xf32>, vector<16x32xf32>, vector<16x32xf32> -> vector<16x32xf32>
    %251 = arith.mulf %250, %217 : vector<16x32xf32>
    %cst_112 = arith.constant dense<0.000000e+00> : vector<16xf32>
    %252 = vector.multi_reduction <add>, %251, %cst_112 [1] : vector<16x32xf32> to vector<16xf32>
    %253 = vector.shape_cast %252 : vector<16xf32> to vector<16x1xf32>
    %cst_113 = arith.constant 1.000000e-30 : f32
    %254 = vector.broadcast %cst_113 : f32 to vector<16x1xf32>
    %255 = arith.addf %249, %254 : vector<16x1xf32>
    %256 = arith.divf %253, %255 : vector<16x1xf32>
    %cst_114 = arith.constant dense<0.000000e+00> : vector<1xf32>
    %257 = vector.multi_reduction <add>, %256, %cst_114 [0] : vector<16x1xf32> to vector<1xf32>
    %258 = vector.shape_cast %257 : vector<1xf32> to vector<1x1xf32>
    %c0_115 = arith.constant 0 : index
    %c0_116 = arith.constant 0 : index
    %259 = vector.load %arg30[%c0_115, %c0_116] : memref<32x32xf32, #tpu.memory_space<vmem>>, vector<32x32xf32>
    %cst_117 = arith.constant dense<0.000000e+00> : vector<16x32xf32>
    %260 = tpu.matmul %216, %259, %cst_117 {dimension_numbers = #tpu.dot_dimension_numbers<[1], [0], [0], [1], [0, 0, 1, 1], [], []>} : vector<16x32xf32>, vector<32x32xf32>, vector<16x32xf32> -> vector<16x32xf32>
    %cst_118 = arith.constant dense<0.000000e+00> : vector<32xf32>
    %261 = vector.multi_reduction <add>, %260, %cst_118 [0] : vector<16x32xf32> to vector<32xf32>
    %262 = vector.shape_cast %261 : vector<32xf32> to vector<1x32xf32>
    %cst_119 = arith.constant 0.0833333358 : f32
    %263 = vector.broadcast %cst_119 : f32 to vector<1x32xf32>
    %264 = arith.mulf %262, %263 : vector<1x32xf32>
    %265 = math.tanh %264 : vector<1x32xf32>
    %266 = vector.broadcast %265 : vector<1x32xf32> to vector<16x32xf32>
    %267 = arith.mulf %216, %266 : vector<16x32xf32>
    %cst_120 = arith.constant dense<0.000000e+00> : vector<16xf32>
    %268 = vector.multi_reduction <add>, %267, %cst_120 [1] : vector<16x32xf32> to vector<16xf32>
    %269 = vector.shape_cast %268 : vector<16xf32> to vector<16x1xf32>
    %270 = arith.negf %269 : vector<16x1xf32>
    %271 = math.exp %270 : vector<16x1xf32>
    %cst_121 = arith.constant 1.000000e+00 : f32
    %272 = vector.broadcast %cst_121 : f32 to vector<16x1xf32>
    %273 = arith.addf %272, %271 : vector<16x1xf32>
    %274 = arith.divf %272, %273 : vector<16x1xf32>
    %275 = vector.broadcast %274 : vector<16x1xf32> to vector<16x32xf32>
    %276 = arith.mulf %275, %216 : vector<16x32xf32>
    %cst_122 = arith.constant dense<0.000000e+00> : vector<32xf32>
    %277 = vector.multi_reduction <add>, %276, %cst_122 [0] : vector<16x32xf32> to vector<32xf32>
    %278 = vector.shape_cast %277 : vector<32xf32> to vector<1x32xf32>
    %cst_123 = arith.constant dense<0.000000e+00> : vector<16x32xf32>
    %279 = tpu.matmul %217, %259, %cst_123 {dimension_numbers = #tpu.dot_dimension_numbers<[1], [0], [0], [1], [0, 0, 1, 1], [], []>} : vector<16x32xf32>, vector<32x32xf32>, vector<16x32xf32> -> vector<16x32xf32>
    %cst_124 = arith.constant dense<0.000000e+00> : vector<32xf32>
    %280 = vector.multi_reduction <add>, %279, %cst_124 [0] : vector<16x32xf32> to vector<32xf32>
    %281 = vector.shape_cast %280 : vector<32xf32> to vector<1x32xf32>
    %cst_125 = arith.constant 0.0833333358 : f32
    %282 = vector.broadcast %cst_125 : f32 to vector<1x32xf32>
    %283 = arith.mulf %281, %282 : vector<1x32xf32>
    %284 = math.tanh %283 : vector<1x32xf32>
    %285 = vector.broadcast %284 : vector<1x32xf32> to vector<16x32xf32>
    %286 = arith.mulf %217, %285 : vector<16x32xf32>
    %cst_126 = arith.constant dense<0.000000e+00> : vector<16xf32>
    %287 = vector.multi_reduction <add>, %286, %cst_126 [1] : vector<16x32xf32> to vector<16xf32>
    %288 = vector.shape_cast %287 : vector<16xf32> to vector<16x1xf32>
    %289 = arith.negf %288 : vector<16x1xf32>
    %290 = math.exp %289 : vector<16x1xf32>
    %cst_127 = arith.constant 1.000000e+00 : f32
    %291 = vector.broadcast %cst_127 : f32 to vector<16x1xf32>
    %292 = arith.addf %291, %290 : vector<16x1xf32>
    %293 = arith.divf %291, %292 : vector<16x1xf32>
    %294 = vector.broadcast %293 : vector<16x1xf32> to vector<16x32xf32>
    %295 = arith.mulf %294, %217 : vector<16x32xf32>
    %cst_128 = arith.constant dense<0.000000e+00> : vector<32xf32>
    %296 = vector.multi_reduction <add>, %295, %cst_128 [0] : vector<16x32xf32> to vector<32xf32>
    %297 = vector.shape_cast %296 : vector<32xf32> to vector<1x32xf32>
    %c0_129 = arith.constant 0 : index
    %c0_130 = arith.constant 0 : index
    %298 = vector.load %arg31[%c0_129, %c0_130] : memref<32x512xf32, #tpu.memory_space<vmem>>, vector<32x512xf32>
    %cst_131 = arith.constant dense<0.000000e+00> : vector<1x512xf32>
    %299 = tpu.matmul %278, %298, %cst_131 {dimension_numbers = #tpu.dot_dimension_numbers<[1], [0], [0], [1], [0, 0, 1, 1], [], []>} : vector<1x32xf32>, vector<32x512xf32>, vector<1x512xf32> -> vector<1x512xf32>
    %c0_132 = arith.constant 0 : index
    %c0_133 = arith.constant 0 : index
    %300 = vector.load %arg32[%c0_132, %c0_133] : memref<32x512xf32, #tpu.memory_space<vmem>>, vector<32x512xf32>
    %cst_134 = arith.constant dense<0.000000e+00> : vector<1x512xf32>
    %301 = tpu.matmul %297, %300, %cst_134 {dimension_numbers = #tpu.dot_dimension_numbers<[1], [0], [0], [1], [0, 0, 1, 1], [], []>} : vector<1x32xf32>, vector<32x512xf32>, vector<1x512xf32> -> vector<1x512xf32>
    %302 = arith.mulf %299, %301 : vector<1x512xf32>
    %c0_135 = arith.constant 0 : index
    %c0_136 = arith.constant 0 : index
    %303 = vector.load %arg33[%c0_135, %c0_136] : memref<512x16xf32, #tpu.memory_space<vmem>>, vector<512x16xf32>
    %cst_137 = arith.constant dense<0.000000e+00> : vector<1x16xf32>
    %304 = tpu.matmul %302, %303, %cst_137 {dimension_numbers = #tpu.dot_dimension_numbers<[1], [0], [0], [1], [0, 0, 1, 1], [], []>} : vector<1x512xf32>, vector<512x16xf32>, vector<1x16xf32> -> vector<1x16xf32>
    %c0_138 = arith.constant 0 : index
    %c0_139 = arith.constant 0 : index
    %305 = vector.load %arg34[%c0_138, %c0_139] : memref<64x16xf32, #tpu.memory_space<vmem>>, vector<32x16xf32>
    %cst_140 = arith.constant dense<0.000000e+00> : vector<1x16xf32>
    %306 = tpu.matmul %278, %305, %cst_140 {dimension_numbers = #tpu.dot_dimension_numbers<[1], [0], [0], [1], [0, 0, 1, 1], [], []>} : vector<1x32xf32>, vector<32x16xf32>, vector<1x16xf32> -> vector<1x16xf32>
    %c32 = arith.constant 32 : index
    %c0_141 = arith.constant 0 : index
    %307 = vector.load %arg34[%c32, %c0_141] : memref<64x16xf32, #tpu.memory_space<vmem>>, vector<32x16xf32>
    %cst_142 = arith.constant dense<0.000000e+00> : vector<1x16xf32>
    %308 = tpu.matmul %297, %307, %cst_142 {dimension_numbers = #tpu.dot_dimension_numbers<[1], [0], [0], [1], [0, 0, 1, 1], [], []>} : vector<1x32xf32>, vector<32x16xf32>, vector<1x16xf32> -> vector<1x16xf32>
    %309 = arith.addf %306, %308 : vector<1x16xf32>
    %310 = arith.addf %304, %309 : vector<1x16xf32>
    %c0_143 = arith.constant 0 : index
    %c0_144 = arith.constant 0 : index
    %311 = vector.load %arg35[%c0_143, %c0_144] : memref<1x16xf32, #tpu.memory_space<vmem>>, vector<1x16xf32>
    %312 = arith.addf %310, %311 : vector<1x16xf32>
    %cst_145 = arith.constant 0.000000e+00 : f32
    %313 = vector.broadcast %cst_145 : f32 to vector<1x16xf32>
    %314 = arith.maximumf %312, %313 : vector<1x16xf32>
    %c0_146 = arith.constant 0 : index
    %c0_147 = arith.constant 0 : index
    %315 = vector.load %arg36[%c0_146, %c0_147] : memref<16x16xf32, #tpu.memory_space<vmem>>, vector<16x16xf32>
    %cst_148 = arith.constant dense<0.000000e+00> : vector<1x16xf32>
    %316 = tpu.matmul %314, %315, %cst_148 {dimension_numbers = #tpu.dot_dimension_numbers<[1], [0], [0], [1], [0, 0, 1, 1], [], []>} : vector<1x16xf32>, vector<16x16xf32>, vector<1x16xf32> -> vector<1x16xf32>
    %c0_149 = arith.constant 0 : index
    %c0_150 = arith.constant 0 : index
    %317 = vector.load %arg37[%c0_149, %c0_150] : memref<1x16xf32, #tpu.memory_space<vmem>>, vector<1x16xf32>
    %318 = arith.addf %316, %317 : vector<1x16xf32>
    %cst_151 = arith.constant 0.000000e+00 : f32
    %319 = vector.broadcast %cst_151 : f32 to vector<1x16xf32>
    %320 = arith.maximumf %318, %319 : vector<1x16xf32>
    %c0_152 = arith.constant 0 : index
    %c0_153 = arith.constant 0 : index
    %321 = vector.load %arg38[%c0_152, %c0_153] : memref<16x8xf32, #tpu.memory_space<vmem>>, vector<16x8xf32>
    %cst_154 = arith.constant dense<0.000000e+00> : vector<1x8xf32>
    %322 = tpu.matmul %320, %321, %cst_154 {dimension_numbers = #tpu.dot_dimension_numbers<[1], [0], [0], [1], [0, 0, 1, 1], [], []>} : vector<1x16xf32>, vector<16x8xf32>, vector<1x8xf32> -> vector<1x8xf32>
    %c0_155 = arith.constant 0 : index
    %c0_156 = arith.constant 0 : index
    %323 = vector.load %arg39[%c0_155, %c0_156] : memref<1x8xf32, #tpu.memory_space<vmem>>, vector<1x8xf32>
    %324 = arith.addf %322, %323 : vector<1x8xf32>
    %cst_157 = arith.constant 0.000000e+00 : f32
    %325 = vector.broadcast %cst_157 : f32 to vector<1x8xf32>
    %326 = arith.maximumf %324, %325 : vector<1x8xf32>
    %c0_158 = arith.constant 0 : index
    %c0_159 = arith.constant 0 : index
    %327 = vector.load %arg40[%c0_158, %c0_159] : memref<8x4xf32, #tpu.memory_space<vmem>>, vector<8x4xf32>
    %cst_160 = arith.constant dense<0.000000e+00> : vector<1x4xf32>
    %328 = tpu.matmul %326, %327, %cst_160 {dimension_numbers = #tpu.dot_dimension_numbers<[1], [0], [0], [1], [0, 0, 1, 1], [], []>} : vector<1x8xf32>, vector<8x4xf32>, vector<1x4xf32> -> vector<1x4xf32>
    %c0_161 = arith.constant 0 : index
    %c0_162 = arith.constant 0 : index
    %329 = vector.load %arg41[%c0_161, %c0_162] : memref<1x4xf32, #tpu.memory_space<vmem>>, vector<1x4xf32>
    %330 = arith.addf %328, %329 : vector<1x4xf32>
    %cst_163 = arith.constant 0.000000e+00 : f32
    %331 = vector.broadcast %cst_163 : f32 to vector<1x4xf32>
    %332 = arith.maximumf %330, %331 : vector<1x4xf32>
    %c0_164 = arith.constant 0 : index
    %c0_165 = arith.constant 0 : index
    %333 = vector.load %arg42[%c0_164, %c0_165] : memref<4x1xf32, #tpu.memory_space<vmem>>, vector<4x1xf32>
    %cst_166 = arith.constant dense<0.000000e+00> : vector<1x1xf32>
    %334 = tpu.matmul %332, %333, %cst_166 {dimension_numbers = #tpu.dot_dimension_numbers<[1], [0], [0], [1], [0, 0, 1, 1], [], []>} : vector<1x4xf32>, vector<4x1xf32>, vector<1x1xf32> -> vector<1x1xf32>
    %c0_167 = arith.constant 0 : index
    %c0_168 = arith.constant 0 : index
    %335 = vector.load %arg43[%c0_167, %c0_168] : memref<1x1xf32, #tpu.memory_space<vmem>>, vector<1x1xf32>
    %336 = arith.addf %334, %335 : vector<1x1xf32>
    %337 = arith.addf %258, %336 : vector<1x1xf32>
    %338 = arith.negf %337 : vector<1x1xf32>
    %339 = math.exp %338 : vector<1x1xf32>
    %cst_169 = arith.constant 1.000000e+00 : f32
    %340 = vector.broadcast %cst_169 : f32 to vector<1x1xf32>
    %341 = arith.addf %340, %339 : vector<1x1xf32>
    %342 = arith.divf %340, %341 : vector<1x1xf32>
    %c0_170 = arith.constant 0 : index
    %c0_171 = arith.constant 0 : index
    %343 = vector.load %arg46[%c0_170, %c0_171] : memref<1x1xf32, #tpu.memory_space<vmem>>, vector<1x1xf32>
    tpu.vector_store %arg46[%c0_170, %c0_171], %342 {strides = array<i32>} : memref<1x1xf32, #tpu.memory_space<vmem>>, vector<1x1xf32>,
    %c0_172 = arith.constant 0 : index
    %c0_173 = arith.constant 0 : index
    %344 = vector.load %arg44[%c0_172, %c0_173] : memref<1x1xf32, #tpu.memory_space<vmem>>, vector<1x1xf32>
    %345 = arith.mulf %342, %344 : vector<1x1xf32>
    %c0_174 = arith.constant 0 : index
    %c0_175 = arith.constant 0 : index
    %346 = vector.load %arg45[%c0_174, %c0_175] : memref<1x1xf32, #tpu.memory_space<vmem>>, vector<1x1xf32>
    tpu.vector_store %arg45[%c0_174, %c0_175], %345 {strides = array<i32>} : memref<1x1xf32, #tpu.memory_space<vmem>>, vector<1x1xf32>,
    return
  }
}

</mosaic_0001>

<llo_original>
// kernel: tile.9
$region0: #{tile.9}
  %s0 = inlined_call_operand.vmem [shape: f32[32,16,32], index: 0, kind: input, shape index: {}]
  %s1 = inlined_call_operand.vmem [shape: f32[32,512], index: 1, kind: output, shape index: {}]
  %v2 = vld [vmem:[%s0] ss:$4 sm:$0xff]
  %vm3 = vcmask 261120
  %4 = vst.msk [vmem:[%s1] ss:$8 sm:$0xf] %vm3, %v2
  %s5 = scalar_lea.vmem %s1, 4294967265
  %6 = vst.msk [vmem:[%s5] ss:$8 sm:$0xf0] %vm3, %v2
  %s7 = scalar_lea.vmem %s0, 32
  %v8 = vld [vmem:[%s7] ss:$4 sm:$0xff]
  %vm9 = vcmask 261120
  %s10 = scalar_lea.vmem %s1, 2
  %11 = vst.msk [vmem:[%s10] ss:$8 sm:$0xf] %vm9, %v8
  %s12 = scalar_lea.vmem %s1, 4294967267
  %13 = vst.msk [vmem:[%s12] ss:$8 sm:$0xf0] %vm9, %v8
  %s14 = scalar_lea.vmem %s0, 64
  %v15 = vld [vmem:[%s14] ss:$4 sm:$0xff]
  %vm16 = vcmask 261120
  %s17 = scalar_lea.vmem %s1, 4
  %18 = vst.msk [vmem:[%s17] ss:$8 sm:$0xf] %vm16, %v15
  %s19 = scalar_lea.vmem %s1, 4294967269
  %20 = vst.msk [vmem:[%s19] ss:$8 sm:$0xf0] %vm16, %v15
  %s21 = scalar_lea.vmem %s0, 96
  %v22 = vld [vmem:[%s21] ss:$4 sm:$0xff]
  %vm23 = vcmask 261120
  %s24 = scalar_lea.vmem %s1, 6
  %25 = vst.msk [vmem:[%s24] ss:$8 sm:$0xf] %vm23, %v22
  %s26 = scalar_lea.vmem %s1, 4294967271
  %27 = vst.msk [vmem:[%s26] ss:$8 sm:$0xf0] %vm23, %v22
  %s28 = scalar_lea.vmem %s0, 128
  %v29 = vld [vmem:[%s28] ss:$4 sm:$0xff]
  %vm30 = vcmask 261120
  %s31 = scalar_lea.vmem %s1, 32
  %32 = vst.msk [vmem:[%s31] ss:$8 sm:$0xf] %vm30, %v29
  %s33 = scalar_lea.vmem %s1, 1
  %34 = vst.msk [vmem:[%s33] ss:$8 sm:$0xf0] %vm30, %v29
  %s35 = scalar_lea.vmem %s0, 160
  %v36 = vld [vmem:[%s35] ss:$4 sm:$0xff]
  %vm37 = vcmask 261120
  %s38 = scalar_lea.vmem %s1, 34
  %39 = vst.msk [vmem:[%s38] ss:$8 sm:$0xf] %vm37, %v36
  %s40 = scalar_lea.vmem %s1, 3
  %41 = vst.msk [vmem:[%s40] ss:$8 sm:$0xf0] %vm37, %v36
  %s42 = scalar_lea.vmem %s0, 192
  %v43 = vld [vmem:[%s42] ss:$4 sm:$0xff]
  %vm44 = vcmask 261120
  %s45 = scalar_lea.vmem %s1, 36
  %46 = vst.msk [vmem:[%s45] ss:$8 sm:$0xf] %vm44, %v43
  %s47 = scalar_lea.vmem %s1, 5
  %48 = vst.msk [vmem:[%s47] ss:$8 sm:$0xf0] %vm44, %v43
  %s49 = scalar_lea.vmem %s0, 224
  %v50 = vld [vmem:[%s49] ss:$4 sm:$0xff]
  %vm51 = vcmask 261120
  %s52 = scalar_lea.vmem %s1, 38
  %53 = vst.msk [vmem:[%s52] ss:$8 sm:$0xf] %vm51, %v50
  %s54 = scalar_lea.vmem %s1, 7
  %55 = vst.msk [vmem:[%s54] ss:$8 sm:$0xf0] %vm51, %v50
  %s56 = scalar_lea.vmem %s0, 256
  %v57 = vld [vmem:[%s56] ss:$4 sm:$0xff]
  %vm58 = vcmask 261120
  %s59 = scalar_lea.vmem %s1, 64
  %60 = vst.msk [vmem:[%s59] ss:$8 sm:$0xf] %vm58, %v57
  %s61 = scalar_lea.vmem %s1, 33
  %62 = vst.msk [vmem:[%s61] ss:$8 sm:$0xf0] %vm58, %v57
  %s63 = scalar_lea.vmem %s0, 288
  %v64 = vld [vmem:[%s63] ss:$4 sm:$0xff]
  %vm65 = vcmask 261120
  %s66 = scalar_lea.vmem %s1, 66
  %67 = vst.msk [vmem:[%s66] ss:$8 sm:$0xf] %vm65, %v64
  %s68 = scalar_lea.vmem %s1, 35
  %69 = vst.msk [vmem:[%s68] ss:$8 sm:$0xf0] %vm65, %v64
  %s70 = scalar_lea.vmem %s0, 320
  %v71 = vld [vmem:[%s70] ss:$4 sm:$0xff]
  %vm72 = vcmask 261120
  %s73 = scalar_lea.vmem %s1, 68
  %74 = vst.msk [vmem:[%s73] ss:$8 sm:$0xf] %vm72, %v71
  %s75 = scalar_lea.vmem %s1, 37
  %76 = vst.msk [vmem:[%s75] ss:$8 sm:$0xf0] %vm72, %v71
  %s77 = scalar_lea.vmem %s0, 352
  %v78 = vld [vmem:[%s77] ss:$4 sm:$0xff]
  %vm79 = vcmask 261120
  %s80 = scalar_lea.vmem %s1, 70
  %81 = vst.msk [vmem:[%s80] ss:$8 sm:$0xf] %vm79, %v78
  %s82 = scalar_lea.vmem %s1, 39
  %83 = vst.msk [vmem:[%s82] ss:$8 sm:$0xf0] %vm79, %v78
  %s84 = scalar_lea.vmem %s0, 384
  %v85 = vld [vmem:[%s84] ss:$4 sm:$0xff]
  %vm86 = vcmask 261120
  %s87 = scalar_lea.vmem %s1, 96
  %88 = vst.msk [vmem:[%s87] ss:$8 sm:$0xf] %vm86, %v85
  %s89 = scalar_lea.vmem %s1, 65
  %90 = vst.msk [vmem:[%s89] ss:$8 sm:$0xf0] %vm86, %v85
  %s91 = scalar_lea.vmem %s0, 416
  %v92 = vld [vmem:[%s91] ss:$4 sm:$0xff]
  %vm93 = vcmask 261120
  %s94 = scalar_lea.vmem %s1, 98
  %95 = vst.msk [vmem:[%s94] ss:$8 sm:$0xf] %vm93, %v92
  %s96 = scalar_lea.vmem %s1, 67
  %97 = vst.msk [vmem:[%s96] ss:$8 sm:$0xf0] %vm93, %v92
  %s98 = scalar_lea.vmem %s0, 448
  %v99 = vld [vmem:[%s98] ss:$4 sm:$0xff]
  %vm100 = vcmask 261120
  %s101 = scalar_lea.vmem %s1, 100
  %102 = vst.msk [vmem:[%s101] ss:$8 sm:$0xf] %vm100, %v99
  %s103 = scalar_lea.vmem %s1, 69
  %104 = vst.msk [vmem:[%s103] ss:$8 sm:$0xf0] %vm100, %v99
  %s105 = scalar_lea.vmem %s0, 480
  %v106 = vld [vmem:[%s105] ss:$4 sm:$0xff]
  %vm107 = vcmask 261120
  %s108 = scalar_lea.vmem %s1, 102
  %109 = vst.msk [vmem:[%s108] ss:$8 sm:$0xf] %vm107, %v106
  %s110 = scalar_lea.vmem %s1, 71
  %111 = vst.msk [vmem:[%s110] ss:$8 sm:$0xf0] %vm107, %v106
  %s112 = scalar_lea.vmem %s0, 3
  %s113 = smov 3
  %v114 = vld [vmem:[%s112] ss:$16 sm:%s113]
  %s115 = scalar_lea.vmem %s0, 3
  %s116 = smov 12
  %v117 = vld [vmem:[%s115] ss:$16 sm:%s116]
  %vm118 = vcmask 1043458
  %v119 = vsel %vm118, %v117, %v114
  %s120 = scalar_lea.vmem %s0, 3
  %s121 = smov 48
  %v122 = vld [vmem:[%s120] ss:$16 sm:%s121]
  %vm123 = vcmask 1045508
  %v124 = vsel %vm123, %v122, %v119
  %s125 = scalar_lea.vmem %s0, 3
  %s126 = smov 192
  %v127 = vld [vmem:[%s125] ss:$16 sm:%s126]
  %vm128 = vcmask 1047558
  %v129 = vsel %vm128, %v127, %v124
  %130 = vrot.lane.b32.xlu0 %v129, 96
  %v131 = vpop.permute.xlu0 %130
  %vm132 = vcmask 1048320
  %133 = vst.msk [vmem:[%s1] sm:$0xff] %vm132, %v131
  %s134 = scalar_lea.vmem %s0, 131
  %s135 = smov 3
  %v136 = vld [vmem:[%s134] ss:$16 sm:%s135]
  %s137 = scalar_lea.vmem %s0, 131
  %s138 = smov 12
  %v139 = vld [vmem:[%s137] ss:$16 sm:%s138]
  %vm140 = vcmask 1043458
  %v141 = vsel %vm140, %v139, %v136
  %s142 = scalar_lea.vmem %s0, 131
  %s143 = smov 48
  %v144 = vld [vmem:[%s142] ss:$16 sm:%s143]
  %vm145 = vcmask 1045508
  %v146 = vsel %vm145, %v144, %v141
  %s147 = scalar_lea.vmem %s0, 131
  %s148 = smov 192
  %v149 = vld [vmem:[%s147] ss:$16 sm:%s148]
  %vm150 = vcmask 1047558
  %v151 = vsel %vm150, %v149, %v146
  %152 = vrot.lane.b32.xlu0 %v151, 96
  %v153 = vpop.permute.xlu0 %152
  %vm154 = vcmask 1048320
  %s155 = scalar_lea.vmem %s1, 32
  %156 = vst.msk [vmem:[%s155] sm:$0xff] %vm154, %v153
  %s157 = scalar_lea.vmem %s0, 259
  %s158 = smov 3
  %v159 = vld [vmem:[%s157] ss:$16 sm:%s158]
  %s160 = scalar_lea.vmem %s0, 259
  %s161 = smov 12
  %v162 = vld [vmem:[%s160] ss:$16 sm:%s161]
  %vm163 = vcmask 1043458
  %v164 = vsel %vm163, %v162, %v159
  %s165 = scalar_lea.vmem %s0, 259
  %s166 = smov 48
  %v167 = vld [vmem:[%s165] ss:$16 sm:%s166]
  %vm168 = vcmask 1045508
  %v169 = vsel %vm168, %v167, %v164
  %s170 = scalar_lea.vmem %s0, 259
  %s171 = smov 192
  %v172 = vld [vmem:[%s170] ss:$16 sm:%s171]
  %vm173 = vcmask 1047558
  %v174 = vsel %vm173, %v172, %v169
  %175 = vrot.lane.b32.xlu0 %v174, 96
  %v176 = vpop.permute.xlu0 %175
  %vm177 = vcmask 1048320
  %s178 = scalar_lea.vmem %s1, 64
  %179 = vst.msk [vmem:[%s178] sm:$0xff] %vm177, %v176
  %s180 = scalar_lea.vmem %s0, 387
  %s181 = smov 3
  %v182 = vld [vmem:[%s180] ss:$16 sm:%s181]
  %s183 = scalar_lea.vmem %s0, 387
  %s184 = smov 12
  %v185 = vld [vmem:[%s183] ss:$16 sm:%s184]
  %vm186 = vcmask 1043458
  %v187 = vsel %vm186, %v185, %v182
  %s188 = scalar_lea.vmem %s0, 387
  %s189 = smov 48
  %v190 = vld [vmem:[%s188] ss:$16 sm:%s189]
  %vm191 = vcmask 1045508
  %v192 = vsel %vm191, %v190, %v187
  %s193 = scalar_lea.vmem %s0, 387
  %s194 = smov 192
  %v195 = vld [vmem:[%s193] ss:$16 sm:%s194]
  %vm196 = vcmask 1047558
  %v197 = vsel %vm196, %v195, %v192
  %198 = vrot.lane.b32.xlu0 %v197, 96
  %v199 = vpop.permute.xlu0 %198
  %vm200 = vcmask 1048320
  %s201 = scalar_lea.vmem %s1, 96
  %202 = vst.msk [vmem:[%s201] sm:$0xff] %vm200, %v199
  %s203 = scalar_lea.vmem %s0, 7
  %s204 = smov 3
  %v205 = vld [vmem:[%s203] ss:$16 sm:%s204]
  %s206 = scalar_lea.vmem %s0, 7
  %s207 = smov 12
  %v208 = vld [vmem:[%s206] ss:$16 sm:%s207]
  %vm209 = vcmask 1043458
  %v210 = vsel %vm209, %v208, %v205
  %s211 = scalar_lea.vmem %s0, 7
  %s212 = smov 48
  %v213 = vld [vmem:[%s211] ss:$16 sm:%s212]
  %vm214 = vcmask 1045508
  %v215 = vsel %vm214, %v213, %v210
  %s216 = scalar_lea.vmem %s0, 7
  %s217 = smov 192
  %v218 = vld [vmem:[%s216] ss:$16 sm:%s217]
  %vm219 = vcmask 1047558
  %v220 = vsel %vm219, %v218, %v215
  %221 = vrot.lane.b32.xlu0 %v220, 96
  %v222 = vpop.permute.xlu0 %221
  %vm223 = vcmask 1048320
  %s224 = scalar_lea.vmem %s1, 8
  %225 = vst.msk [vmem:[%s224] sm:$0xff] %vm223, %v222
  %s226 = scalar_lea.vmem %s0, 135
  %s227 = smov 3
  %v228 = vld [vmem:[%s226] ss:$16 sm:%s227]
  %s229 = scalar_lea.vmem %s0, 135
  %s230 = smov 12
  %v231 = vld [vmem:[%s229] ss:$16 sm:%s230]
  %vm232 = vcmask 1043458
  %v233 = vsel %vm232, %v231, %v228
  %s234 = scalar_lea.vmem %s0, 135
  %s235 = smov 48
  %v236 = vld [vmem:[%s234] ss:$16 sm:%s235]
  %vm237 = vcmask 1045508
  %v238 = vsel %vm237, %v236, %v233
  %s239 = scalar_lea.vmem %s0, 135
  %s240 = smov 192
  %v241 = vld [vmem:[%s239] ss:$16 sm:%s240]
  %vm242 = vcmask 1047558
  %v243 = vsel %vm242, %v241, %v238
  %244 = vrot.lane.b32.xlu0 %v243, 96
  %v245 = vpop.permute.xlu0 %244
  %vm246 = vcmask 1048320
  %s247 = scalar_lea.vmem %s1, 40
  %248 = vst.msk [vmem:[%s247] sm:$0xff] %vm246, %v245
  %s249 = scalar_lea.vmem %s0, 263
  %s250 = smov 3
  %v251 = vld [vmem:[%s249] ss:$16 sm:%s250]
  %s252 = scalar_lea.vmem %s0, 263
  %s253 = smov 12
  %v254 = vld [vmem:[%s252] ss:$16 sm:%s253]
  %vm255 = vcmask 1043458
  %v256 = vsel %vm255, %v254, %v251
  %s257 = scalar_lea.vmem %s0, 263
  %s258 = smov 48
  %v259 = vld [vmem:[%s257] ss:$16 sm:%s258]
  %vm260 = vcmask 1045508
  %v261 = vsel %vm260, %v259, %v256
  %s262 = scalar_lea.vmem %s0, 263
  %s263 = smov 192
  %v264 = vld [vmem:[%s262] ss:$16 sm:%s263]
  %vm265 = vcmask 1047558
  %v266 = vsel %vm265, %v264, %v261
  %267 = vrot.lane.b32.xlu0 %v266, 96
  %v268 = vpop.permute.xlu0 %267
  %vm269 = vcmask 1048320
  %s270 = scalar_lea.vmem %s1, 72
  %271 = vst.msk [vmem:[%s270] sm:$0xff] %vm269, %v268
  %s272 = scalar_lea.vmem %s0, 391
  %s273 = smov 3
  %v274 = vld [vmem:[%s272] ss:$16 sm:%s273]
  %s275 = scalar_lea.vmem %s0, 391
  %s276 = smov 12
  %v277 = vld [vmem:[%s275] ss:$16 sm:%s276]
  %vm278 = vcmask 1043458
  %v279 = vsel %vm278, %v277, %v274
  %s280 = scalar_lea.vmem %s0, 391
  %s281 = smov 48
  %v282 = vld [vmem:[%s280] ss:$16 sm:%s281]
  %vm283 = vcmask 1045508
  %v284 = vsel %vm283, %v282, %v279
  %s285 = scalar_lea.vmem %s0, 391
  %s286 = smov 192
  %v287 = vld [vmem:[%s285] ss:$16 sm:%s286]
  %vm288 = vcmask 1047558
  %v289 = vsel %vm288, %v287, %v284
  %290 = vrot.lane.b32.xlu0 %v289, 96
  %v291 = vpop.permute.xlu0 %290
  %vm292 = vcmask 1048320
  %s293 = scalar_lea.vmem %s1, 104
  %294 = vst.msk [vmem:[%s293] sm:$0xff] %vm292, %v291
  %s295 = scalar_lea.vmem %s0, 11
  %s296 = smov 3
  %v297 = vld [vmem:[%s295] ss:$16 sm:%s296]
  %s298 = scalar_lea.vmem %s0, 11
  %s299 = smov 12
  %v300 = vld [vmem:[%s298] ss:$16 sm:%s299]
  %vm301 = vcmask 1043458
  %v302 = vsel %vm301, %v300, %v297
  %s303 = scalar_lea.vmem %s0, 11
  %s304 = smov 48
  %v305 = vld [vmem:[%s303] ss:$16 sm:%s304]
  %vm306 = vcmask 1045508
  %v307 = vsel %vm306, %v305, %v302
  %s308 = scalar_lea.vmem %s0, 11
  %s309 = smov 192
  %v310 = vld [vmem:[%s308] ss:$16 sm:%s309]
  %vm311 = vcmask 1047558
  %v312 = vsel %vm311, %v310, %v307
  %313 = vrot.lane.b32.xlu0 %v312, 96
  %v314 = vpop.permute.xlu0 %313
  %vm315 = vcmask 1048320
  %s316 = scalar_lea.vmem %s1, 16
  %317 = vst.msk [vmem:[%s316] sm:$0xff] %vm315, %v314
  %s318 = scalar_lea.vmem %s0, 139
  %s319 = smov 3
  %v320 = vld [vmem:[%s318] ss:$16 sm:%s319]
  %s321 = scalar_lea.vmem %s0, 139
  %s322 = smov 12
  %v323 = vld [vmem:[%s321] ss:$16 sm:%s322]
  %vm324 = vcmask 1043458
  %v325 = vsel %vm324, %v323, %v320
  %s326 = scalar_lea.vmem %s0, 139
  %s327 = smov 48
  %v328 = vld [vmem:[%s326] ss:$16 sm:%s327]
  %vm329 = vcmask 1045508
  %v330 = vsel %vm329, %v328, %v325
  %s331 = scalar_lea.vmem %s0, 139
  %s332 = smov 192
  %v333 = vld [vmem:[%s331] ss:$16 sm:%s332]
  %vm334 = vcmask 1047558
  %v335 = vsel %vm334, %v333, %v330
  %336 = vrot.lane.b32.xlu0 %v335, 96
  %v337 = vpop.permute.xlu0 %336
  %vm338 = vcmask 1048320
  %s339 = scalar_lea.vmem %s1, 48
  %340 = vst.msk [vmem:[%s339] sm:$0xff] %vm338, %v337
  %s341 = scalar_lea.vmem %s0, 267
  %s342 = smov 3
  %v343 = vld [vmem:[%s341] ss:$16 sm:%s342]
  %s344 = scalar_lea.vmem %s0, 267
  %s345 = smov 12
  %v346 = vld [vmem:[%s344] ss:$16 sm:%s345]
  %vm347 = vcmask 1043458
  %v348 = vsel %vm347, %v346, %v343
  %s349 = scalar_lea.vmem %s0, 267
  %s350 = smov 48
  %v351 = vld [vmem:[%s349] ss:$16 sm:%s350]
  %vm352 = vcmask 1045508
  %v353 = vsel %vm352, %v351, %v348
  %s354 = scalar_lea.vmem %s0, 267
  %s355 = smov 192
  %v356 = vld [vmem:[%s354] ss:$16 sm:%s355]
  %vm357 = vcmask 1047558
  %v358 = vsel %vm357, %v356, %v353
  %359 = vrot.lane.b32.xlu0 %v358, 96
  %v360 = vpop.permute.xlu0 %359
  %vm361 = vcmask 1048320
  %s362 = scalar_lea.vmem %s1, 80
  %363 = vst.msk [vmem:[%s362] sm:$0xff] %vm361, %v360
  %s364 = scalar_lea.vmem %s0, 395
  %s365 = smov 3
  %v366 = vld [vmem:[%s364] ss:$16 sm:%s365]
  %s367 = scalar_lea.vmem %s0, 395
  %s368 = smov 12
  %v369 = vld [vmem:[%s367] ss:$16 sm:%s368]
  %vm370 = vcmask 1043458
  %v371 = vsel %vm370, %v369, %v366
  %s372 = scalar_lea.vmem %s0, 395
  %s373 = smov 48
  %v374 = vld [vmem:[%s372] ss:$16 sm:%s373]
  %vm375 = vcmask 1045508
  %v376 = vsel %vm375, %v374, %v371
  %s377 = scalar_lea.vmem %s0, 395
  %s378 = smov 192
  %v379 = vld [vmem:[%s377] ss:$16 sm:%s378]
  %vm380 = vcmask 1047558
  %v381 = vsel %vm380, %v379, %v376
  %382 = vrot.lane.b32.xlu0 %v381, 96
  %v383 = vpop.permute.xlu0 %382
  %vm384 = vcmask 1048320
  %s385 = scalar_lea.vmem %s1, 112
  %386 = vst.msk [vmem:[%s385] sm:$0xff] %vm384, %v383
  %s387 = scalar_lea.vmem %s0, 15
  %s388 = smov 3
  %v389 = vld [vmem:[%s387] ss:$16 sm:%s388]
  %s390 = scalar_lea.vmem %s0, 15
  %s391 = smov 12
  %v392 = vld [vmem:[%s390] ss:$16 sm:%s391]
  %vm393 = vcmask 1043458
  %v394 = vsel %vm393, %v392, %v389
  %s395 = scalar_lea.vmem %s0, 15
  %s396 = smov 48
  %v397 = vld [vmem:[%s395] ss:$16 sm:%s396]
  %vm398 = vcmask 1045508
  %v399 = vsel %vm398, %v397, %v394
  %s400 = scalar_lea.vmem %s0, 15
  %s401 = smov 192
  %v402 = vld [vmem:[%s400] ss:$16 sm:%s401]
  %vm403 = vcmask 1047558
  %v404 = vsel %vm403, %v402, %v399
  %405 = vrot.lane.b32.xlu0 %v404, 96
  %v406 = vpop.permute.xlu0 %405
  %vm407 = vcmask 1048320
  %s408 = scalar_lea.vmem %s1, 24
  %409 = vst.msk [vmem:[%s408] sm:$0xff] %vm407, %v406
  %s410 = scalar_lea.vmem %s0, 143
  %s411 = smov 3
  %v412 = vld [vmem:[%s410] ss:$16 sm:%s411]
  %s413 = scalar_lea.vmem %s0, 143
  %s414 = smov 12
  %v415 = vld [vmem:[%s413] ss:$16 sm:%s414]
  %vm416 = vcmask 1043458
  %v417 = vsel %vm416, %v415, %v412
  %s418 = scalar_lea.vmem %s0, 143
  %s419 = smov 48
  %v420 = vld [vmem:[%s418] ss:$16 sm:%s419]
  %vm421 = vcmask 1045508
  %v422 = vsel %vm421, %v420, %v417
  %s423 = scalar_lea.vmem %s0, 143
  %s424 = smov 192
  %v425 = vld [vmem:[%s423] ss:$16 sm:%s424]
  %vm426 = vcmask 1047558
  %v427 = vsel %vm426, %v425, %v422
  %428 = vrot.lane.b32.xlu0 %v427, 96
  %v429 = vpop.permute.xlu0 %428
  %vm430 = vcmask 1048320
  %s431 = scalar_lea.vmem %s1, 56
  %432 = vst.msk [vmem:[%s431] sm:$0xff] %vm430, %v429
  %s433 = scalar_lea.vmem %s0, 271
  %s434 = smov 3
  %v435 = vld [vmem:[%s433] ss:$16 sm:%s434]
  %s436 = scalar_lea.vmem %s0, 271
  %s437 = smov 12
  %v438 = vld [vmem:[%s436] ss:$16 sm:%s437]
  %vm439 = vcmask 1043458
  %v440 = vsel %vm439, %v438, %v435
  %s441 = scalar_lea.vmem %s0, 271
  %s442 = smov 48
  %v443 = vld [vmem:[%s441] ss:$16 sm:%s442]
  %vm444 = vcmask 1045508
  %v445 = vsel %vm444, %v443, %v440
  %s446 = scalar_lea.vmem %s0, 271
  %s447 = smov 192
  %v448 = vld [vmem:[%s446] ss:$16 sm:%s447]
  %vm449 = vcmask 1047558
  %v450 = vsel %vm449, %v448, %v445
  %451 = vrot.lane.b32.xlu0 %v450, 96
  %v452 = vpop.permute.xlu0 %451
  %vm453 = vcmask 1048320
  %s454 = scalar_lea.vmem %s1, 88
  %455 = vst.msk [vmem:[%s454] sm:$0xff] %vm453, %v452
  %s456 = scalar_lea.vmem %s0, 399
  %s457 = smov 3
  %v458 = vld [vmem:[%s456] ss:$16 sm:%s457]
  %s459 = scalar_lea.vmem %s0, 399
  %s460 = smov 12
  %v461 = vld [vmem:[%s459] ss:$16 sm:%s460]
  %vm462 = vcmask 1043458
  %v463 = vsel %vm462, %v461, %v458
  %s464 = scalar_lea.vmem %s0, 399
  %s465 = smov 48
  %v466 = vld [vmem:[%s464] ss:$16 sm:%s465]
  %vm467 = vcmask 1045508
  %v468 = vsel %vm467, %v466, %v463
  %s469 = scalar_lea.vmem %s0, 399
  %s470 = smov 192
  %v471 = vld [vmem:[%s469] ss:$16 sm:%s470]
  %vm472 = vcmask 1047558
  %v473 = vsel %vm472, %v471, %v468
  %474 = vrot.lane.b32.xlu0 %v473, 96
  %v475 = vpop.permute.xlu0 %474
  %vm476 = vcmask 1048320
  %s477 = scalar_lea.vmem %s1, 120
  %478 = vst.msk [vmem:[%s477] sm:$0xff] %vm476, %v475
  %s479 = scalar_lea.vmem %s0, 2
  %s480 = smov 3
  %v481 = vld [vmem:[%s479] ss:$16 sm:%s480]
  %s482 = scalar_lea.vmem %s0, 2
  %s483 = smov 12
  %v484 = vld [vmem:[%s482] ss:$16 sm:%s483]
  %vm485 = vcmask 1043458
  %v486 = vsel %vm485, %v484, %v481
  %s487 = scalar_lea.vmem %s0, 2
  %s488 = smov 48
  %v489 = vld [vmem:[%s487] ss:$16 sm:%s488]
  %vm490 = vcmask 1045508
  %v491 = vsel %vm490, %v489, %v486
  %s492 = scalar_lea.vmem %s0, 2
  %s493 = smov 192
  %v494 = vld [vmem:[%s492] ss:$16 sm:%s493]
  %vm495 = vcmask 1047558
  %v496 = vsel %vm495, %v494, %v491
  %497 = vrot.lane.b32.xlu0 %v496, 64
  %v498 = vpop.permute.xlu0 %497
  %vm499 = vcmask 785920
  %500 = vst.msk [vmem:[%s1] sm:$0xff] %vm499, %v498
  %s501 = scalar_lea.vmem %s0, 130
  %s502 = smov 3
  %v503 = vld [vmem:[%s501] ss:$16 sm:%s502]
  %s504 = scalar_lea.vmem %s0, 130
  %s505 = smov 12
  %v506 = vld [vmem:[%s504] ss:$16 sm:%s505]
  %vm507 = vcmask 1043458
  %v508 = vsel %vm507, %v506, %v503
  %s509 = scalar_lea.vmem %s0, 130
  %s510 = smov 48
  %v511 = vld [vmem:[%s509] ss:$16 sm:%s510]
  %vm512 = vcmask 1045508
  %v513 = vsel %vm512, %v511, %v508
  %s514 = scalar_lea.vmem %s0, 130
  %s515 = smov 192
  %v516 = vld [vmem:[%s514] ss:$16 sm:%s515]
  %vm517 = vcmask 1047558
  %v518 = vsel %vm517, %v516, %v513
  %519 = vrot.lane.b32.xlu0 %v518, 64
  %v520 = vpop.permute.xlu0 %519
  %vm521 = vcmask 785920
  %s522 = scalar_lea.vmem %s1, 32
  %523 = vst.msk [vmem:[%s522] sm:$0xff] %vm521, %v520
  %s524 = scalar_lea.vmem %s0, 258
  %s525 = smov 3
  %v526 = vld [vmem:[%s524] ss:$16 sm:%s525]
  %s527 = scalar_lea.vmem %s0, 258
  %s528 = smov 12
  %v529 = vld [vmem:[%s527] ss:$16 sm:%s528]
  %vm530 = vcmask 1043458
  %v531 = vsel %vm530, %v529, %v526
  %s532 = scalar_lea.vmem %s0, 258
  %s533 = smov 48
  %v534 = vld [vmem:[%s532] ss:$16 sm:%s533]
  %vm535 = vcmask 1045508
  %v536 = vsel %vm535, %v534, %v531
  %s537 = scalar_lea.vmem %s0, 258
  %s538 = smov 192
  %v539 = vld [vmem:[%s537] ss:$16 sm:%s538]
  %vm540 = vcmask 1047558
  %v541 = vsel %vm540, %v539, %v536
  %542 = vrot.lane.b32.xlu0 %v541, 64
  %v543 = vpop.permute.xlu0 %542
  %vm544 = vcmask 785920
  %s545 = scalar_lea.vmem %s1, 64
  %546 = vst.msk [vmem:[%s545] sm:$0xff] %vm544, %v543
  %s547 = scalar_lea.vmem %s0, 386
  %s548 = smov 3
  %v549 = vld [vmem:[%s547] ss:$16 sm:%s548]
  %s550 = scalar_lea.vmem %s0, 386
  %s551 = smov 12
  %v552 = vld [vmem:[%s550] ss:$16 sm:%s551]
  %vm553 = vcmask 1043458
  %v554 = vsel %vm553, %v552, %v549
  %s555 = scalar_lea.vmem %s0, 386
  %s556 = smov 48
  %v557 = vld [vmem:[%s555] ss:$16 sm:%s556]
  %vm558 = vcmask 1045508
  %v559 = vsel %vm558, %v557, %v554
  %s560 = scalar_lea.vmem %s0, 386
  %s561 = smov 192
  %v562 = vld [vmem:[%s560] ss:$16 sm:%s561]
  %vm563 = vcmask 1047558
  %v564 = vsel %vm563, %v562, %v559
  %565 = vrot.lane.b32.xlu0 %v564, 64
  %v566 = vpop.permute.xlu0 %565
  %vm567 = vcmask 785920
  %s568 = scalar_lea.vmem %s1, 96
  %569 = vst.msk [vmem:[%s568] sm:$0xff] %vm567, %v566
  %s570 = scalar_lea.vmem %s0, 6
  %s571 = smov 3
  %v572 = vld [vmem:[%s570] ss:$16 sm:%s571]
  %s573 = scalar_lea.vmem %s0, 6
  %s574 = smov 12
  %v575 = vld [vmem:[%s573] ss:$16 sm:%s574]
  %vm576 = vcmask 1043458
  %v577 = vsel %vm576, %v575, %v572
  %s578 = scalar_lea.vmem %s0, 6
  %s579 = smov 48
  %v580 = vld [vmem:[%s578] ss:$16 sm:%s579]
  %vm581 = vcmask 1045508
  %v582 = vsel %vm581, %v580, %v577
  %s583 = scalar_lea.vmem %s0, 6
  %s584 = smov 192
  %v585 = vld [vmem:[%s583] ss:$16 sm:%s584]
  %vm586 = vcmask 1047558
  %v587 = vsel %vm586, %v585, %v582
  %588 = vrot.lane.b32.xlu0 %v587, 64
  %v589 = vpop.permute.xlu0 %588
  %vm590 = vcmask 785920
  %s591 = scalar_lea.vmem %s1, 8
  %592 = vst.msk [vmem:[%s591] sm:$0xff] %vm590, %v589
  %s593 = scalar_lea.vmem %s0, 134
  %s594 = smov 3
  %v595 = vld [vmem:[%s593] ss:$16 sm:%s594]
  %s596 = scalar_lea.vmem %s0, 134
  %s597 = smov 12
  %v598 = vld [vmem:[%s596] ss:$16 sm:%s597]
  %vm599 = vcmask 1043458
  %v600 = vsel %vm599, %v598, %v595
  %s601 = scalar_lea.vmem %s0, 134
  %s602 = smov 48
  %v603 = vld [vmem:[%s601] ss:$16 sm:%s602]
  %vm604 = vcmask 1045508
  %v605 = vsel %vm604, %v603, %v600
  %s606 = scalar_lea.vmem %s0, 134
  %s607 = smov 192
  %v608 = vld [vmem:[%s606] ss:$16 sm:%s607]
  %vm609 = vcmask 1047558
  %v610 = vsel %vm609, %v608, %v605
  %611 = vrot.lane.b32.xlu0 %v610, 64
  %v612 = vpop.permute.xlu0 %611
  %vm613 = vcmask 785920
  %s614 = scalar_lea.vmem %s1, 40
  %615 = vst.msk [vmem:[%s614] sm:$0xff] %vm613, %v612
  %s616 = scalar_lea.vmem %s0, 262
  %s617 = smov 3
  %v618 = vld [vmem:[%s616] ss:$16 sm:%s617]
  %s619 = scalar_lea.vmem %s0, 262
  %s620 = smov 12
  %v621 = vld [vmem:[%s619] ss:$16 sm:%s620]
  %vm622 = vcmask 1043458
  %v623 = vsel %vm622, %v621, %v618
  %s624 = scalar_lea.vmem %s0, 262
  %s625 = smov 48
  %v626 = vld [vmem:[%s624] ss:$16 sm:%s625]
  %vm627 = vcmask 1045508
  %v628 = vsel %vm627, %v626, %v623
  %s629 = scalar_lea.vmem %s0, 262
  %s630 = smov 192
  %v631 = vld [vmem:[%s629] ss:$16 sm:%s630]
  %vm632 = vcmask 1047558
  %v633 = vsel %vm632, %v631, %v628
  %634 = vrot.lane.b32.xlu0 %v633, 64
  %v635 = vpop.permute.xlu0 %634
  %vm636 = vcmask 785920
  %s637 = scalar_lea.vmem %s1, 72
  %638 = vst.msk [vmem:[%s637] sm:$0xff] %vm636, %v635
  %s639 = scalar_lea.vmem %s0, 390
  %s640 = smov 3
  %v641 = vld [vmem:[%s639] ss:$16 sm:%s640]
  %s642 = scalar_lea.vmem %s0, 390
  %s643 = smov 12
  %v644 = vld [vmem:[%s642] ss:$16 sm:%s643]
  %vm645 = vcmask 1043458
  %v646 = vsel %vm645, %v644, %v641
  %s647 = scalar_lea.vmem %s0, 390
  %s648 = smov 48
  %v649 = vld [vmem:[%s647] ss:$16 sm:%s648]
  %vm650 = vcmask 1045508
  %v651 = vsel %vm650, %v649, %v646
  %s652 = scalar_lea.vmem %s0, 390
  %s653 = smov 192
  %v654 = vld [vmem:[%s652] ss:$16 sm:%s653]
  %vm655 = vcmask 1047558
  %v656 = vsel %vm655, %v654, %v651
  %657 = vrot.lane.b32.xlu0 %v656, 64
  %v658 = vpop.permute.xlu0 %657
  %vm659 = vcmask 785920
  %s660 = scalar_lea.vmem %s1, 104
  %661 = vst.msk [vmem:[%s660] sm:$0xff] %vm659, %v658
  %s662 = scalar_lea.vmem %s0, 10
  %s663 = smov 3
  %v664 = vld [vmem:[%s662] ss:$16 sm:%s663]
  %s665 = scalar_lea.vmem %s0, 10
  %s666 = smov 12
  %v667 = vld [vmem:[%s665] ss:$16 sm:%s666]
  %vm668 = vcmask 1043458
  %v669 = vsel %vm668, %v667, %v664
  %s670 = scalar_lea.vmem %s0, 10
  %s671 = smov 48
  %v672 = vld [vmem:[%s670] ss:$16 sm:%s671]
  %vm673 = vcmask 1045508
  %v674 = vsel %vm673, %v672, %v669
  %s675 = scalar_lea.vmem %s0, 10
  %s676 = smov 192
  %v677 = vld [vmem:[%s675] ss:$16 sm:%s676]
  %vm678 = vcmask 1047558
  %v679 = vsel %vm678, %v677, %v674
  %680 = vrot.lane.b32.xlu0 %v679, 64
  %v681 = vpop.permute.xlu0 %680
  %vm682 = vcmask 785920
  %s683 = scalar_lea.vmem %s1, 16
  %684 = vst.msk [vmem:[%s683] sm:$0xff] %vm682, %v681
  %s685 = scalar_lea.vmem %s0, 138
  %s686 = smov 3
  %v687 = vld [vmem:[%s685] ss:$16 sm:%s686]
  %s688 = scalar_lea.vmem %s0, 138
  %s689 = smov 12
  %v690 = vld [vmem:[%s688] ss:$16 sm:%s689]
  %vm691 = vcmask 1043458
  %v692 = vsel %vm691, %v690, %v687
  %s693 = scalar_lea.vmem %s0, 138
  %s694 = smov 48
  %v695 = vld [vmem:[%s693] ss:$16 sm:%s694]
  %vm696 = vcmask 1045508
  %v697 = vsel %vm696, %v695, %v692
  %s698 = scalar_lea.vmem %s0, 138
  %s699 = smov 192
  %v700 = vld [vmem:[%s698] ss:$16 sm:%s699]
  %vm701 = vcmask 1047558
  %v702 = vsel %vm701, %v700, %v697
  %703 = vrot.lane.b32.xlu0 %v702, 64
  %v704 = vpop.permute.xlu0 %703
  %vm705 = vcmask 785920
  %s706 = scalar_lea.vmem %s1, 48
  %707 = vst.msk [vmem:[%s706] sm:$0xff] %vm705, %v704
  %s708 = scalar_lea.vmem %s0, 266
  %s709 = smov 3
  %v710 = vld [vmem:[%s708] ss:$16 sm:%s709]
  %s711 = scalar_lea.vmem %s0, 266
  %s712 = smov 12
  %v713 = vld [vmem:[%s711] ss:$16 sm:%s712]
  %vm714 = vcmask 1043458
  %v715 = vsel %vm714, %v713, %v710
  %s716 = scalar_lea.vmem %s0, 266
  %s717 = smov 48
  %v718 = vld [vmem:[%s716] ss:$16 sm:%s717]
  %vm719 = vcmask 1045508
  %v720 = vsel %vm719, %v718, %v715
  %s721 = scalar_lea.vmem %s0, 266
  %s722 = smov 192
  %v723 = vld [vmem:[%s721] ss:$16 sm:%s722]
  %vm724 = vcmask 1047558
  %v725 = vsel %vm724, %v723, %v720
  %726 = vrot.lane.b32.xlu0 %v725, 64
  %v727 = vpop.permute.xlu0 %726
  %vm728 = vcmask 785920
  %s729 = scalar_lea.vmem %s1, 80
  %730 = vst.msk [vmem:[%s729] sm:$0xff] %vm728, %v727
  %s731 = scalar_lea.vmem %s0, 394
  %s732 = smov 3
  %v733 = vld [vmem:[%s731] ss:$16 sm:%s732]
  %s734 = scalar_lea.vmem %s0, 394
  %s735 = smov 12
  %v736 = vld [vmem:[%s734] ss:$16 sm:%s735]
  %vm737 = vcmask 1043458
  %v738 = vsel %vm737, %v736, %v733
  %s739 = scalar_lea.vmem %s0, 394
  %s740 = smov 48
  %v741 = vld [vmem:[%s739] ss:$16 sm:%s740]
  %vm742 = vcmask 1045508
  %v743 = vsel %vm742, %v741, %v738
  %s744 = scalar_lea.vmem %s0, 394
  %s745 = smov 192
  %v746 = vld [vmem:[%s744] ss:$16 sm:%s745]
  %vm747 = vcmask 1047558
  %v748 = vsel %vm747, %v746, %v743
  %749 = vrot.lane.b32.xlu0 %v748, 64
  %v750 = vpop.permute.xlu0 %749
  %vm751 = vcmask 785920
  %s752 = scalar_lea.vmem %s1, 112
  %753 = vst.msk [vmem:[%s752] sm:$0xff] %vm751, %v750
  %s754 = scalar_lea.vmem %s0, 14
  %s755 = smov 3
  %v756 = vld [vmem:[%s754] ss:$16 sm:%s755]
  %s757 = scalar_lea.vmem %s0, 14
  %s758 = smov 12
  %v759 = vld [vmem:[%s757] ss:$16 sm:%s758]
  %vm760 = vcmask 1043458
  %v761 = vsel %vm760, %v759, %v756
  %s762 = scalar_lea.vmem %s0, 14
  %s763 = smov 48
  %v764 = vld [vmem:[%s762] ss:$16 sm:%s763]
  %vm765 = vcmask 1045508
  %v766 = vsel %vm765, %v764, %v761
  %s767 = scalar_lea.vmem %s0, 14
  %s768 = smov 192
  %v769 = vld [vmem:[%s767] ss:$16 sm:%s768]
  %vm770 = vcmask 1047558
  %v771 = vsel %vm770, %v769, %v766
  %772 = vrot.lane.b32.xlu0 %v771, 64
  %v773 = vpop.permute.xlu0 %772
  %vm774 = vcmask 785920
  %s775 = scalar_lea.vmem %s1, 24
  %776 = vst.msk [vmem:[%s775] sm:$0xff] %vm774, %v773
  %s777 = scalar_lea.vmem %s0, 142
  %s778 = smov 3
  %v779 = vld [vmem:[%s777] ss:$16 sm:%s778]
  %s780 = scalar_lea.vmem %s0, 142
  %s781 = smov 12
  %v782 = vld [vmem:[%s780] ss:$16 sm:%s781]
  %vm783 = vcmask 1043458
  %v784 = vsel %vm783, %v782, %v779
  %s785 = scalar_lea.vmem %s0, 142
  %s786 = smov 48
  %v787 = vld [vmem:[%s785] ss:$16 sm:%s786]
  %vm788 = vcmask 1045508
  %v789 = vsel %vm788, %v787, %v784
  %s790 = scalar_lea.vmem %s0, 142
  %s791 = smov 192
  %v792 = vld [vmem:[%s790] ss:$16 sm:%s791]
  %vm793 = vcmask 1047558
  %v794 = vsel %vm793, %v792, %v789
  %795 = vrot.lane.b32.xlu0 %v794, 64
  %v796 = vpop.permute.xlu0 %795
  %vm797 = vcmask 785920
  %s798 = scalar_lea.vmem %s1, 56
  %799 = vst.msk [vmem:[%s798] sm:$0xff] %vm797, %v796
  %s800 = scalar_lea.vmem %s0, 270
  %s801 = smov 3
  %v802 = vld [vmem:[%s800] ss:$16 sm:%s801]
  %s803 = scalar_lea.vmem %s0, 270
  %s804 = smov 12
  %v805 = vld [vmem:[%s803] ss:$16 sm:%s804]
  %vm806 = vcmask 1043458
  %v807 = vsel %vm806, %v805, %v802
  %s808 = scalar_lea.vmem %s0, 270
  %s809 = smov 48
  %v810 = vld [vmem:[%s808] ss:$16 sm:%s809]
  %vm811 = vcmask 1045508
  %v812 = vsel %vm811, %v810, %v807
  %s813 = scalar_lea.vmem %s0, 270
  %s814 = smov 192
  %v815 = vld [vmem:[%s813] ss:$16 sm:%s814]
  %vm816 = vcmask 1047558
  %v817 = vsel %vm816, %v815, %v812
  %818 = vrot.lane.b32.xlu0 %v817, 64
  %v819 = vpop.permute.xlu0 %818
  %vm820 = vcmask 785920
  %s821 = scalar_lea.vmem %s1, 88
  %822 = vst.msk [vmem:[%s821] sm:$0xff] %vm820, %v819
  %s823 = scalar_lea.vmem %s0, 398
  %s824 = smov 3
  %v825 = vld [vmem:[%s823] ss:$16 sm:%s824]
  %s826 = scalar_lea.vmem %s0, 398
  %s827 = smov 12
  %v828 = vld [vmem:[%s826] ss:$16 sm:%s827]
  %vm829 = vcmask 1043458
  %v830 = vsel %vm829, %v828, %v825
  %s831 = scalar_lea.vmem %s0, 398
  %s832 = smov 48
  %v833 = vld [vmem:[%s831] ss:$16 sm:%s832]
  %vm834 = vcmask 1045508
  %v835 = vsel %vm834, %v833, %v830
  %s836 = scalar_lea.vmem %s0, 398
  %s837 = smov 192
  %v838 = vld [vmem:[%s836] ss:$16 sm:%s837]
  %vm839 = vcmask 1047558
  %v840 = vsel %vm839, %v838, %v835
  %841 = vrot.lane.b32.xlu0 %v840, 64
  %v842 = vpop.permute.xlu0 %841
  %vm843 = vcmask 785920
  %s844 = scalar_lea.vmem %s1, 120
  %845 = vst.msk [vmem:[%s844] sm:$0xff] %vm843, %v842
  %s846 = scalar_lea.vmem %s0, 1
  %s847 = smov 3
  %v848 = vld [vmem:[%s846] ss:$16 sm:%s847]
  %s849 = scalar_lea.vmem %s0, 1
  %s850 = smov 12
  %v851 = vld [vmem:[%s849] ss:$16 sm:%s850]
  %vm852 = vcmask 1043458
  %v853 = vsel %vm852, %v851, %v848
  %s854 = scalar_lea.vmem %s0, 1
  %s855 = smov 48
  %v856 = vld [vmem:[%s854] ss:$16 sm:%s855]
  %vm857 = vcmask 1045508
  %v858 = vsel %vm857, %v856, %v853
  %s859 = scalar_lea.vmem %s0, 1
  %s860 = smov 192
  %v861 = vld [vmem:[%s859] ss:$16 sm:%s860]
  %vm862 = vcmask 1047558
  %v863 = vsel %vm862, %v861, %v858
  %864 = vrot.lane.b32.xlu0 %v863, 32
  %v865 = vpop.permute.xlu0 %864
  %vm866 = vcmask 523520
  %867 = vst.msk [vmem:[%s1] sm:$0xff] %vm866, %v865
  %s868 = scalar_lea.vmem %s0, 129
  %s869 = smov 3
  %v870 = vld [vmem:[%s868] ss:$16 sm:%s869]
  %s871 = scalar_lea.vmem %s0, 129
  %s872 = smov 12
  %v873 = vld [vmem:[%s871] ss:$16 sm:%s872]
  %vm874 = vcmask 1043458
  %v875 = vsel %vm874, %v873, %v870
  %s876 = scalar_lea.vmem %s0, 129
  %s877 = smov 48
  %v878 = vld [vmem:[%s876] ss:$16 sm:%s877]
  %vm879 = vcmask 1045508
  %v880 = vsel %vm879, %v878, %v875
  %s881 = scalar_lea.vmem %s0, 129
  %s882 = smov 192
  %v883 = vld [vmem:[%s881] ss:$16 sm:%s882]
  %vm884 = vcmask 1047558
  %v885 = vsel %vm884, %v883, %v880
  %886 = vrot.lane.b32.xlu0 %v885, 32
  %v887 = vpop.permute.xlu0 %886
  %vm888 = vcmask 523520
  %s889 = scalar_lea.vmem %s1, 32
  %890 = vst.msk [vmem:[%s889] sm:$0xff] %vm888, %v887
  %s891 = scalar_lea.vmem %s0, 257
  %s892 = smov 3
  %v893 = vld [vmem:[%s891] ss:$16 sm:%s892]
  %s894 = scalar_lea.vmem %s0, 257
  %s895 = smov 12
  %v896 = vld [vmem:[%s894] ss:$16 sm:%s895]
  %vm897 = vcmask 1043458
  %v898 = vsel %vm897, %v896, %v893
  %s899 = scalar_lea.vmem %s0, 257
  %s900 = smov 48
  %v901 = vld [vmem:[%s899] ss:$16 sm:%s900]
  %vm902 = vcmask 1045508
  %v903 = vsel %vm902, %v901, %v898
  %s904 = scalar_lea.vmem %s0, 257
  %s905 = smov 192
  %v906 = vld [vmem:[%s904] ss:$16 sm:%s905]
  %vm907 = vcmask 1047558
  %v908 = vsel %vm907, %v906, %v903
  %909 = vrot.lane.b32.xlu0 %v908, 32
  %v910 = vpop.permute.xlu0 %909
  %vm911 = vcmask 523520
  %s912 = scalar_lea.vmem %s1, 64
  %913 = vst.msk [vmem:[%s912] sm:$0xff] %vm911, %v910
  %s914 = scalar_lea.vmem %s0, 385
  %s915 = smov 3
  %v916 = vld [vmem:[%s914] ss:$16 sm:%s915]
  %s917 = scalar_lea.vmem %s0, 385
  %s918 = smov 12
  %v919 = vld [vmem:[%s917] ss:$16 sm:%s918]
  %vm920 = vcmask 1043458
  %v921 = vsel %vm920, %v919, %v916
  %s922 = scalar_lea.vmem %s0, 385
  %s923 = smov 48
  %v924 = vld [vmem:[%s922] ss:$16 sm:%s923]
  %vm925 = vcmask 1045508
  %v926 = vsel %vm925, %v924, %v921
  %s927 = scalar_lea.vmem %s0, 385
  %s928 = smov 192
  %v929 = vld [vmem:[%s927] ss:$16 sm:%s928]
  %vm930 = vcmask 1047558
  %v931 = vsel %vm930, %v929, %v926
  %932 = vrot.lane.b32.xlu0 %v931, 32
  %v933 = vpop.permute.xlu0 %932
  %vm934 = vcmask 523520
  %s935 = scalar_lea.vmem %s1, 96
  %936 = vst.msk [vmem:[%s935] sm:$0xff] %vm934, %v933
  %s937 = scalar_lea.vmem %s0, 5
  %s938 = smov 3
  %v939 = vld [vmem:[%s937] ss:$16 sm:%s938]
  %s940 = scalar_lea.vmem %s0, 5
  %s941 = smov 12
  %v942 = vld [vmem:[%s940] ss:$16 sm:%s941]
  %vm943 = vcmask 1043458
  %v944 = vsel %vm943, %v942, %v939
  %s945 = scalar_lea.vmem %s0, 5
  %s946 = smov 48
  %v947 = vld [vmem:[%s945] ss:$16 sm:%s946]
  %vm948 = vcmask 1045508
  %v949 = vsel %vm948, %v947, %v944
  %s950 = scalar_lea.vmem %s0, 5
  %s951 = smov 192
  %v952 = vld [vmem:[%s950] ss:$16 sm:%s951]
  %vm953 = vcmask 1047558
  %v954 = vsel %vm953, %v952, %v949
  %955 = vrot.lane.b32.xlu0 %v954, 32
  %v956 = vpop.permute.xlu0 %955
  %vm957 = vcmask 523520
  %s958 = scalar_lea.vmem %s1, 8
  %959 = vst.msk [vmem:[%s958] sm:$0xff] %vm957, %v956
  %s960 = scalar_lea.vmem %s0, 133
  %s961 = smov 3
  %v962 = vld [vmem:[%s960] ss:$16 sm:%s961]
  %s963 = scalar_lea.vmem %s0, 133
  %s964 = smov 12
  %v965 = vld [vmem:[%s963] ss:$16 sm:%s964]
  %vm966 = vcmask 1043458
  %v967 = vsel %vm966, %v965, %v962
  %s968 = scalar_lea.vmem %s0, 133
  %s969 = smov 48
  %v970 = vld [vmem:[%s968] ss:$16 sm:%s969]
  %vm971 = vcmask 1045508
  %v972 = vsel %vm971, %v970, %v967
  %s973 = scalar_lea.vmem %s0, 133
  %s974 = smov 192
  %v975 = vld [vmem:[%s973] ss:$16 sm:%s974]
  %vm976 = vcmask 1047558
  %v977 = vsel %vm976, %v975, %v972
  %978 = vrot.lane.b32.xlu0 %v977, 32
  %v979 = vpop.permute.xlu0 %978
  %vm980 = vcmask 523520
  %s981 = scalar_lea.vmem %s1, 40
  %982 = vst.msk [vmem:[%s981] sm:$0xff] %vm980, %v979
  %s983 = scalar_lea.vmem %s0, 261
  %s984 = smov 3
  %v985 = vld [vmem:[%s983] ss:$16 sm:%s984]
  %s986 = scalar_lea.vmem %s0, 261
  %s987 = smov 12
  %v988 = vld [vmem:[%s986] ss:$16 sm:%s987]
  %vm989 = vcmask 1043458
  %v990 = vsel %vm989, %v988, %v985
  %s991 = scalar_lea.vmem %s0, 261
  %s992 = smov 48
  %v993 = vld [vmem:[%s991] ss:$16 sm:%s992]
  %vm994 = vcmask 1045508
  %v995 = vsel %vm994, %v993, %v990
  %s996 = scalar_lea.vmem %s0, 261
  %s997 = smov 192
  %v998 = vld [vmem:[%s996] ss:$16 sm:%s997]
  %vm999 = vcmask 1047558
  %v1000 = vsel %vm999, %v998, %v995
  %1001 = vrot.lane.b32.xlu0 %v1000, 32
  %v1002 = vpop.permute.xlu0 %1001
  %vm1003 = vcmask 523520
  %s1004 = scalar_lea.vmem %s1, 72
  %1005 = vst.msk [vmem:[%s1004] sm:$0xff] %vm1003, %v1002
  %s1006 = scalar_lea.vmem %s0, 389
  %s1007 = smov 3
  %v1008 = vld [vmem:[%s1006] ss:$16 sm:%s1007]
  %s1009 = scalar_lea.vmem %s0, 389
  %s1010 = smov 12
  %v1011 = vld [vmem:[%s1009] ss:$16 sm:%s1010]
  %vm1012 = vcmask 1043458
  %v1013 = vsel %vm1012, %v1011, %v1008
  %s1014 = scalar_lea.vmem %s0, 389
  %s1015 = smov 48
  %v1016 = vld [vmem:[%s1014] ss:$16 sm:%s1015]
  %vm1017 = vcmask 1045508
  %v1018 = vsel %vm1017, %v1016, %v1013
  %s1019 = scalar_lea.vmem %s0, 389
  %s1020 = smov 192
  %v1021 = vld [vmem:[%s1019] ss:$16 sm:%s1020]
  %vm1022 = vcmask 1047558
  %v1023 = vsel %vm1022, %v1021, %v1018
  %1024 = vrot.lane.b32.xlu0 %v1023, 32
  %v1025 = vpop.permute.xlu0 %1024
  %vm1026 = vcmask 523520
  %s1027 = scalar_lea.vmem %s1, 104
  %1028 = vst.msk [vmem:[%s1027] sm:$0xff] %vm1026, %v1025
  %s1029 = scalar_lea.vmem %s0, 9
  %s1030 = smov 3
  %v1031 = vld [vmem:[%s1029] ss:$16 sm:%s1030]
  %s1032 = scalar_lea.vmem %s0, 9
  %s1033 = smov 12
  %v1034 = vld [vmem:[%s1032] ss:$16 sm:%s1033]
  %vm1035 = vcmask 1043458
  %v1036 = vsel %vm1035, %v1034, %v1031
  %s1037 = scalar_lea.vmem %s0, 9
  %s1038 = smov 48
  %v1039 = vld [vmem:[%s1037] ss:$16 sm:%s1038]
  %vm1040 = vcmask 1045508
  %v1041 = vsel %vm1040, %v1039, %v1036
  %s1042 = scalar_lea.vmem %s0, 9
  %s1043 = smov 192
  %v1044 = vld [vmem:[%s1042] ss:$16 sm:%s1043]
  %vm1045 = vcmask 1047558
  %v1046 = vsel %vm1045, %v1044, %v1041
  %1047 = vrot.lane.b32.xlu0 %v1046, 32
  %v1048 = vpop.permute.xlu0 %1047
  %vm1049 = vcmask 523520
  %s1050 = scalar_lea.vmem %s1, 16
  %1051 = vst.msk [vmem:[%s1050] sm:$0xff] %vm1049, %v1048
  %s1052 = scalar_lea.vmem %s0, 137
  %s1053 = smov 3
  %v1054 = vld [vmem:[%s1052] ss:$16 sm:%s1053]
  %s1055 = scalar_lea.vmem %s0, 137
  %s1056 = smov 12
  %v1057 = vld [vmem:[%s1055] ss:$16 sm:%s1056]
  %vm1058 = vcmask 1043458
  %v1059 = vsel %vm1058, %v1057, %v1054
  %s1060 = scalar_lea.vmem %s0, 137
  %s1061 = smov 48
  %v1062 = vld [vmem:[%s1060] ss:$16 sm:%s1061]
  %vm1063 = vcmask 1045508
  %v1064 = vsel %vm1063, %v1062, %v1059
  %s1065 = scalar_lea.vmem %s0, 137
  %s1066 = smov 192
  %v1067 = vld [vmem:[%s1065] ss:$16 sm:%s1066]
  %vm1068 = vcmask 1047558
  %v1069 = vsel %vm1068, %v1067, %v1064
  %1070 = vrot.lane.b32.xlu0 %v1069, 32
  %v1071 = vpop.permute.xlu0 %1070
  %vm1072 = vcmask 523520
  %s1073 = scalar_lea.vmem %s1, 48
  %1074 = vst.msk [vmem:[%s1073] sm:$0xff] %vm1072, %v1071
  %s1075 = scalar_lea.vmem %s0, 265
  %s1076 = smov 3
  %v1077 = vld [vmem:[%s1075] ss:$16 sm:%s1076]
  %s1078 = scalar_lea.vmem %s0, 265
  %s1079 = smov 12
  %v1080 = vld [vmem:[%s1078] ss:$16 sm:%s1079]
  %vm1081 = vcmask 1043458
  %v1082 = vsel %vm1081, %v1080, %v1077
  %s1083 = scalar_lea.vmem %s0, 265
  %s1084 = smov 48
  %v1085 = vld [vmem:[%s1083] ss:$16 sm:%s1084]
  %vm1086 = vcmask 1045508
  %v1087 = vsel %vm1086, %v1085, %v1082
  %s1088 = scalar_lea.vmem %s0, 265
  %s1089 = smov 192
  %v1090 = vld [vmem:[%s1088] ss:$16 sm:%s1089]
  %vm1091 = vcmask 1047558
  %v1092 = vsel %vm1091, %v1090, %v1087
  %1093 = vrot.lane.b32.xlu0 %v1092, 32
  %v1094 = vpop.permute.xlu0 %1093
  %vm1095 = vcmask 523520
  %s1096 = scalar_lea.vmem %s1, 80
  %1097 = vst.msk [vmem:[%s1096] sm:$0xff] %vm1095, %v1094
  %s1098 = scalar_lea.vmem %s0, 393
  %s1099 = smov 3
  %v1100 = vld [vmem:[%s1098] ss:$16 sm:%s1099]
  %s1101 = scalar_lea.vmem %s0, 393
  %s1102 = smov 12
  %v1103 = vld [vmem:[%s1101] ss:$16 sm:%s1102]
  %vm1104 = vcmask 1043458
  %v1105 = vsel %vm1104, %v1103, %v1100
  %s1106 = scalar_lea.vmem %s0, 393
  %s1107 = smov 48
  %v1108 = vld [vmem:[%s1106] ss:$16 sm:%s1107]
  %vm1109 = vcmask 1045508
  %v1110 = vsel %vm1109, %v1108, %v1105
  %s1111 = scalar_lea.vmem %s0, 393
  %s1112 = smov 192
  %v1113 = vld [vmem:[%s1111] ss:$16 sm:%s1112]
  %vm1114 = vcmask 1047558
  %v1115 = vsel %vm1114, %v1113, %v1110
  %1116 = vrot.lane.b32.xlu0 %v1115, 32
  %v1117 = vpop.permute.xlu0 %1116
  %vm1118 = vcmask 523520
  %s1119 = scalar_lea.vmem %s1, 112
  %1120 = vst.msk [vmem:[%s1119] sm:$0xff] %vm1118, %v1117
  %s1121 = scalar_lea.vmem %s0, 13
  %s1122 = smov 3
  %v1123 = vld [vmem:[%s1121] ss:$16 sm:%s1122]
  %s1124 = scalar_lea.vmem %s0, 13
  %s1125 = smov 12
  %v1126 = vld [vmem:[%s1124] ss:$16 sm:%s1125]
  %vm1127 = vcmask 1043458
  %v1128 = vsel %vm1127, %v1126, %v1123
  %s1129 = scalar_lea.vmem %s0, 13
  %s1130 = smov 48
  %v1131 = vld [vmem:[%s1129] ss:$16 sm:%s1130]
  %vm1132 = vcmask 1045508
  %v1133 = vsel %vm1132, %v1131, %v1128
  %s1134 = scalar_lea.vmem %s0, 13
  %s1135 = smov 192
  %v1136 = vld [vmem:[%s1134] ss:$16 sm:%s1135]
  %vm1137 = vcmask 1047558
  %v1138 = vsel %vm1137, %v1136, %v1133
  %1139 = vrot.lane.b32.xlu0 %v1138, 32
  %v1140 = vpop.permute.xlu0 %1139
  %vm1141 = vcmask 523520
  %s1142 = scalar_lea.vmem %s1, 24
  %1143 = vst.msk [vmem:[%s1142] sm:$0xff] %vm1141, %v1140
  %s1144 = scalar_lea.vmem %s0, 141
  %s1145 = smov 3
  %v1146 = vld [vmem:[%s1144] ss:$16 sm:%s1145]
  %s1147 = scalar_lea.vmem %s0, 141
  %s1148 = smov 12
  %v1149 = vld [vmem:[%s1147] ss:$16 sm:%s1148]
  %vm1150 = vcmask 1043458
  %v1151 = vsel %vm1150, %v1149, %v1146
  %s1152 = scalar_lea.vmem %s0, 141
  %s1153 = smov 48
  %v1154 = vld [vmem:[%s1152] ss:$16 sm:%s1153]
  %vm1155 = vcmask 1045508
  %v1156 = vsel %vm1155, %v1154, %v1151
  %s1157 = scalar_lea.vmem %s0, 141
  %s1158 = smov 192
  %v1159 = vld [vmem:[%s1157] ss:$16 sm:%s1158]
  %vm1160 = vcmask 1047558
  %v1161 = vsel %vm1160, %v1159, %v1156
  %1162 = vrot.lane.b32.xlu0 %v1161, 32
  %v1163 = vpop.permute.xlu0 %1162
  %vm1164 = vcmask 523520
  %s1165 = scalar_lea.vmem %s1, 56
  %1166 = vst.msk [vmem:[%s1165] sm:$0xff] %vm1164, %v1163
  %s1167 = scalar_lea.vmem %s0, 269
  %s1168 = smov 3
  %v1169 = vld [vmem:[%s1167] ss:$16 sm:%s1168]
  %s1170 = scalar_lea.vmem %s0, 269
  %s1171 = smov 12
  %v1172 = vld [vmem:[%s1170] ss:$16 sm:%s1171]
  %vm1173 = vcmask 1043458
  %v1174 = vsel %vm1173, %v1172, %v1169
  %s1175 = scalar_lea.vmem %s0, 269
  %s1176 = smov 48
  %v1177 = vld [vmem:[%s1175] ss:$16 sm:%s1176]
  %vm1178 = vcmask 1045508
  %v1179 = vsel %vm1178, %v1177, %v1174
  %s1180 = scalar_lea.vmem %s0, 269
  %s1181 = smov 192
  %v1182 = vld [vmem:[%s1180] ss:$16 sm:%s1181]
  %vm1183 = vcmask 1047558
  %v1184 = vsel %vm1183, %v1182, %v1179
  %1185 = vrot.lane.b32.xlu0 %v1184, 32
  %v1186 = vpop.permute.xlu0 %1185
  %vm1187 = vcmask 523520
  %s1188 = scalar_lea.vmem %s1, 88
  %1189 = vst.msk [vmem:[%s1188] sm:$0xff] %vm1187, %v1186
  %s1190 = scalar_lea.vmem %s0, 397
  %s1191 = smov 3
  %v1192 = vld [vmem:[%s1190] ss:$16 sm:%s1191]
  %s1193 = scalar_lea.vmem %s0, 397
  %s1194 = smov 12
  %v1195 = vld [vmem:[%s1193] ss:$16 sm:%s1194]
  %vm1196 = vcmask 1043458
  %v1197 = vsel %vm1196, %v1195, %v1192
  %s1198 = scalar_lea.vmem %s0, 397
  %s1199 = smov 48
  %v1200 = vld [vmem:[%s1198] ss:$16 sm:%s1199]
  %vm1201 = vcmask 1045508
  %v1202 = vsel %vm1201, %v1200, %v1197
  %s1203 = scalar_lea.vmem %s0, 397
  %s1204 = smov 192
  %v1205 = vld [vmem:[%s1203] ss:$16 sm:%s1204]
  %vm1206 = vcmask 1047558
  %v1207 = vsel %vm1206, %v1205, %v1202
  %1208 = vrot.lane.b32.xlu0 %v1207, 32
  %v1209 = vpop.permute.xlu0 %1208
  %vm1210 = vcmask 523520
  %s1211 = scalar_lea.vmem %s1, 120
  %1212 = vst.msk [vmem:[%s1211] sm:$0xff] %vm1210, %v1209

// kernel: ged_gnn_forward.1
$region0: #{ged_gnn_forward.1}
  #allocation0 [shape = 'u32[]', space=smem, size = 0x4, offset = 0x4, fixed_abs, tag = 'smem constant byte address 0x4 - core index']
  #allocation1 [shape = 'u32[144,128]{1,0:T(1,128)}', space=vmem, size = 0x12000, scoped, tag = 'internal scratch']
  #allocation2 [shape = 'f32[1,1]{1,0:T(1,128)S(1)}', space=vmem, size = 0x200, scoped, tag = 'scoped memory for ged_gnn_forward.1']
  #allocation3 [shape = 'f32[1,1]{1,0:T(1,128)S(1)}', space=vmem, size = 0x200, scoped, tag = 'scoped memory for ged_gnn_forward.1']
  #allocation4 [shape = 'f32[1,1]{1,0:T(1,128)S(1)}', space=vmem, size = 0x200, scoped, tag = 'scoped memory for ged_gnn_forward.1']
  %s0 = inlined_call_operand.smem [shape: u32[47], index: -1, kind: input, shape index: {}]
  %s1 = sld [smem:[%s0]]
  %s2 = scalar_lea.smem %s0, 1
  %s3 = sld [smem:[%s2]]
  %s4 = scalar_lea.smem %s0, 2
  %s5 = sld [smem:[%s4]]
  %s6 = scalar_lea.smem %s0, 3
  %s7 = sld [smem:[%s6]]
  %s8 = scalar_lea.smem %s0, 4
  %s9 = sld [smem:[%s8]]
  %s10 = scalar_lea.smem %s0, 5
  %s11 = sld [smem:[%s10]]
  %s12 = scalar_lea.smem %s0, 6
  %s13 = sld [smem:[%s12]]
  %s14 = scalar_lea.smem %s0, 7
  %s15 = sld [smem:[%s14]]
  %s16 = scalar_lea.smem %s0, 8
  %s17 = sld [smem:[%s16]]
  %s18 = scalar_lea.smem %s0, 9
  %s19 = sld [smem:[%s18]]
  %s20 = scalar_lea.smem %s0, 10
  %s21 = sld [smem:[%s20]]
  %s22 = scalar_lea.smem %s0, 11
  %s23 = sld [smem:[%s22]]
  %s24 = scalar_lea.smem %s0, 12
  %s25 = sld [smem:[%s24]]
  %s26 = scalar_lea.smem %s0, 13
  %s27 = sld [smem:[%s26]]
  %s28 = scalar_lea.smem %s0, 14
  %s29 = sld [smem:[%s28]]
  %s30 = scalar_lea.smem %s0, 15
  %s31 = sld [smem:[%s30]]
  %s32 = scalar_lea.smem %s0, 16
  %s33 = sld [smem:[%s32]]
  %s34 = scalar_lea.smem %s0, 17
  %s35 = sld [smem:[%s34]]
  %s36 = scalar_lea.smem %s0, 18
  %s37 = sld [smem:[%s36]]
  %s38 = scalar_lea.smem %s0, 19
  %s39 = sld [smem:[%s38]]
  %s40 = scalar_lea.smem %s0, 20
  %s41 = sld [smem:[%s40]]
  %s42 = scalar_lea.smem %s0, 21
  %s43 = sld [smem:[%s42]]
  %s44 = scalar_lea.smem %s0, 22
  %s45 = sld [smem:[%s44]]
  %s46 = scalar_lea.smem %s0, 23
  %s47 = sld [smem:[%s46]]
  %s48 = scalar_lea.smem %s0, 24
  %s49 = sld [smem:[%s48]]
  %s50 = scalar_lea.smem %s0, 25
  %s51 = sld [smem:[%s50]]
  %s52 = scalar_lea.smem %s0, 26
  %s53 = sld [smem:[%s52]]
  %s54 = scalar_lea.smem %s0, 27
  %s55 = sld [smem:[%s54]]
  %s56 = scalar_lea.smem %s0, 28
  %s57 = sld [smem:[%s56]]
  %s58 = scalar_lea.smem %s0, 29
  %s59 = sld [smem:[%s58]]
  %s60 = scalar_lea.smem %s0, 30
  %s61 = sld [smem:[%s60]]
  %s62 = scalar_lea.smem %s0, 31
  %s63 = sld [smem:[%s62]]
  %s64 = scalar_lea.smem %s0, 32
  %s65 = sld [smem:[%s64]]
  %s66 = scalar_lea.smem %s0, 33
  %s67 = sld [smem:[%s66]]
  %s68 = scalar_lea.smem %s0, 34
  %s69 = sld [smem:[%s68]]
  %s70 = scalar_lea.smem %s0, 35
  %s71 = sld [smem:[%s70]]
  %s72 = scalar_lea.smem %s0, 36
  %s73 = sld [smem:[%s72]]
  %s74 = scalar_lea.smem %s0, 37
  %s75 = sld [smem:[%s74]]
  %s76 = scalar_lea.smem %s0, 38
  %s77 = sld [smem:[%s76]]
  %s78 = scalar_lea.smem %s0, 39
  %s79 = sld [smem:[%s78]]
  %s80 = scalar_lea.smem %s0, 40
  %s81 = sld [smem:[%s80]]
  %s82 = scalar_lea.smem %s0, 41
  %s83 = sld [smem:[%s82]]
  %s84 = scalar_lea.smem %s0, 42
  %s85 = sld [smem:[%s84]]
  %s86 = scalar_lea.smem %s0, 43
  %s87 = sld [smem:[%s86]]
  %s88 = scalar_lea.smem %s0, 44
  %s89 = sld [smem:[%s88]]
  %s90 = scalar_lea.smem %s0, 45
  %s91 = sld [smem:[%s90]]
  %s92 = scalar_lea.smem %s0, 46
  %s93 = sld [smem:[%s92]]
  %94 = xla_tuple %s91, %s93
  %s95 = sld [smem:[#allocation0]]
  $region198: #{ged_gnn_forward.1} parent=0
    _
  %s97 = ssub.s32 1, %s95
  %s98 = scalar_select 0, %s97, %s95
  %v99 = vstv %s59
  %100 = vst [vmem:[#allocation2] sm:$0x1] %v99
  %v101 = vstv %s87
  %102 = vst [vmem:[#allocation3] sm:$0x1] %v101
  %v103 = vstv %s89
  %104 = vst [vmem:[#allocation4] sm:$0x1] %v103
  $region1: #{ged_gnn_forward.1} parent=0
    #allocation5 [shape = 'u8[512]{0}', space=vmem, size = 0x400, scoped, tag = 'output window, operand 0, single buffered']
    #allocation6 [shape = 's32[1]{0}', space=sflag, size = 0x4, scoped, tag = 'scoped memory for ged_gnn_forward.1']
    #allocation7 [shape = 'u8[512]{0}', space=vmem, size = 0x400, scoped, tag = 'output window, operand 1, single buffered']
    #allocation8 [shape = 's32[1]{0}', space=sflag, size = 0x4, scoped, tag = 'scoped memory for ged_gnn_forward.1']
    %105 = vsyncpa [#allocation6], 0
    %106 = vsyncpa [#allocation8], 0
    // Predicated region
    $region2: #{ged_gnn_forward.1} parent=1 // pred_check
      _
    $region3: #{ged_gnn_forward.1} parent=1 // pred_check_branch
      %108 = sbr.rel (0) target = $region5
    $region4: #{ged_gnn_forward.1} parent=1 // pred_region
      _
    $region5: #{ged_gnn_forward.1} parent=1 // pred_fallthru
      _
    // Predicated region
    $region6: #{ged_gnn_forward.1} parent=1 // pred_check
      _
    $region7: #{ged_gnn_forward.1} parent=1 // pred_check_branch
      %110 = sbr.rel (0) target = $region9
    $region8: #{ged_gnn_forward.1} parent=1 // pred_region
      _
    $region9: #{ged_gnn_forward.1} parent=1 // pred_fallthru
      _
    // Predicated region
    $region10: #{ged_gnn_forward.1} parent=1 // pred_check
      _
    $region11: #{ged_gnn_forward.1} parent=1 // pred_check_branch
      %112 = sbr.rel (0) target = $region13
    $region12: #{ged_gnn_forward.1} parent=1 // pred_region
      _
    $region13: #{ged_gnn_forward.1} parent=1 // pred_fallthru
      _
    // Predicated region
    $region14: #{ged_gnn_forward.1} parent=1 // pred_check
      _
    $region15: #{ged_gnn_forward.1} parent=1 // pred_check_branch
      %114 = sbr.rel (0) target = $region17
    $region16: #{ged_gnn_forward.1} parent=1 // pred_region
      _
    $region17: #{ged_gnn_forward.1} parent=1 // pred_fallthru
      _
    // Predicated region
    $region18: #{ged_gnn_forward.1} parent=1 // pred_check
      _
    $region19: #{ged_gnn_forward.1} parent=1 // pred_check_branch
      %116 = sbr.rel (0) target = $region21
    $region20: #{ged_gnn_forward.1} parent=1 // pred_region
      _
    $region21: #{ged_gnn_forward.1} parent=1 // pred_fallthru
      _
    // Predicated region
    $region22: #{ged_gnn_forward.1} parent=1 // pred_check
      _
    $region23: #{ged_gnn_forward.1} parent=1 // pred_check_branch
      %118 = sbr.rel (0) target = $region25
    $region24: #{ged_gnn_forward.1} parent=1 // pred_region
      _
    $region25: #{ged_gnn_forward.1} parent=1 // pred_fallthru
      _
    // Predicated region
    $region26: #{ged_gnn_forward.1} parent=1 // pred_check
      _
    $region27: #{ged_gnn_forward.1} parent=1 // pred_check_branch
      %120 = sbr.rel (0) target = $region29
    $region28: #{ged_gnn_forward.1} parent=1 // pred_region
      _
    $region29: #{ged_gnn_forward.1} parent=1 // pred_fallthru
      _
    // Predicated region
    $region30: #{ged_gnn_forward.1} parent=1 // pred_check
      _
    $region31: #{ged_gnn_forward.1} parent=1 // pred_check_branch
      %122 = sbr.rel (0) target = $region33
    $region32: #{ged_gnn_forward.1} parent=1 // pred_region
      _
    $region33: #{ged_gnn_forward.1} parent=1 // pred_fallthru
      _
    // Predicated region
    $region34: #{ged_gnn_forward.1} parent=1 // pred_check
      _
    $region35: #{ged_gnn_forward.1} parent=1 // pred_check_branch
      %124 = sbr.rel (0) target = $region37
    $region36: #{ged_gnn_forward.1} parent=1 // pred_region
      _
    $region37: #{ged_gnn_forward.1} parent=1 // pred_fallthru
      _
    // Predicated region
    $region38: #{ged_gnn_forward.1} parent=1 // pred_check
      _
    $region39: #{ged_gnn_forward.1} parent=1 // pred_check_branch
      %126 = sbr.rel (0) target = $region41
    $region40: #{ged_gnn_forward.1} parent=1 // pred_region
      _
    $region41: #{ged_gnn_forward.1} parent=1 // pred_fallthru
      _
    // Predicated region
    $region42: #{ged_gnn_forward.1} parent=1 // pred_check
      _
    $region43: #{ged_gnn_forward.1} parent=1 // pred_check_branch
      %128 = sbr.rel (0) target = $region45
    $region44: #{ged_gnn_forward.1} parent=1 // pred_region
      _
    $region45: #{ged_gnn_forward.1} parent=1 // pred_fallthru
      _
    // Predicated region
    $region46: #{ged_gnn_forward.1} parent=1 // pred_check
      _
    $region47: #{ged_gnn_forward.1} parent=1 // pred_check_branch
      %130 = sbr.rel (0) target = $region49
    $region48: #{ged_gnn_forward.1} parent=1 // pred_region
      _
    $region49: #{ged_gnn_forward.1} parent=1 // pred_fallthru
      _
    // Predicated region
    $region50: #{ged_gnn_forward.1} parent=1 // pred_check
      _
    $region51: #{ged_gnn_forward.1} parent=1 // pred_check_branch
      %132 = sbr.rel (0) target = $region53
    $region52: #{ged_gnn_forward.1} parent=1 // pred_region
      _
    $region53: #{ged_gnn_forward.1} parent=1 // pred_fallthru
      _
    // Predicated region
    $region54: #{ged_gnn_forward.1} parent=1 // pred_check
      _
    $region55: #{ged_gnn_forward.1} parent=1 // pred_check_branch
      %134 = sbr.rel (0) target = $region57
    $region56: #{ged_gnn_forward.1} parent=1 // pred_region
      _
    $region57: #{ged_gnn_forward.1} parent=1 // pred_fallthru
      _
    // Predicated region
    $region58: #{ged_gnn_forward.1} parent=1 // pred_check
      _
    $region59: #{ged_gnn_forward.1} parent=1 // pred_check_branch
      %136 = sbr.rel (0) target = $region61
    $region60: #{ged_gnn_forward.1} parent=1 // pred_region
      _
    $region61: #{ged_gnn_forward.1} parent=1 // pred_fallthru
      _
    // Predicated region
    $region62: #{ged_gnn_forward.1} parent=1 // pred_check
      _
    $region63: #{ged_gnn_forward.1} parent=1 // pred_check_branch
      %138 = sbr.rel (0) target = $region65
    $region64: #{ged_gnn_forward.1} parent=1 // pred_region
      _
    $region65: #{ged_gnn_forward.1} parent=1 // pred_fallthru
      _
    // Predicated region
    $region66: #{ged_gnn_forward.1} parent=1 // pred_check
      _
    $region67: #{ged_gnn_forward.1} parent=1 // pred_check_branch
      %140 = sbr.rel (0) target = $region69
    $region68: #{ged_gnn_forward.1} parent=1 // pred_region
      _
    $region69: #{ged_gnn_forward.1} parent=1 // pred_fallthru
      _
    // Predicated region
    $region70: #{ged_gnn_forward.1} parent=1 // pred_check
      _
    $region71: #{ged_gnn_forward.1} parent=1 // pred_check_branch
      %142 = sbr.rel (0) target = $region73
    $region72: #{ged_gnn_forward.1} parent=1 // pred_region
      _
    $region73: #{ged_gnn_forward.1} parent=1 // pred_fallthru
      _
    // Predicated region
    $region74: #{ged_gnn_forward.1} parent=1 // pred_check
      _
    $region75: #{ged_gnn_forward.1} parent=1 // pred_check_branch
      %144 = sbr.rel (0) target = $region77
    $region76: #{ged_gnn_forward.1} parent=1 // pred_region
      _
    $region77: #{ged_gnn_forward.1} parent=1 // pred_fallthru
      _
    // Predicated region
    $region78: #{ged_gnn_forward.1} parent=1 // pred_check
      _
    $region79: #{ged_gnn_forward.1} parent=1 // pred_check_branch
      %146 = sbr.rel (0) target = $region81
    $region80: #{ged_gnn_forward.1} parent=1 // pred_region
      _
    $region81: #{ged_gnn_forward.1} parent=1 // pred_fallthru
      _
    // Predicated region
    $region82: #{ged_gnn_forward.1} parent=1 // pred_check
      _
    $region83: #{ged_gnn_forward.1} parent=1 // pred_check_branch
      %148 = sbr.rel (0) target = $region85
    $region84: #{ged_gnn_forward.1} parent=1 // pred_region
      _
    $region85: #{ged_gnn_forward.1} parent=1 // pred_fallthru
      _
    // Predicated region
    $region86: #{ged_gnn_forward.1} parent=1 // pred_check
      _
    $region87: #{ged_gnn_forward.1} parent=1 // pred_check_branch
      %150 = sbr.rel (0) target = $region89
    $region88: #{ged_gnn_forward.1} parent=1 // pred_region
      _
    $region89: #{ged_gnn_forward.1} parent=1 // pred_fallthru
      _
    // Predicated region
    $region90: #{ged_gnn_forward.1} parent=1 // pred_check
      _
    $region91: #{ged_gnn_forward.1} parent=1 // pred_check_branch
      %152 = sbr.rel (0) target = $region93
    $region92: #{ged_gnn_forward.1} parent=1 // pred_region
      _
    $region93: #{ged_gnn_forward.1} parent=1 // pred_fallthru
      _
    // Predicated region
    $region94: #{ged_gnn_forward.1} parent=1 // pred_check
      _
    $region95: #{ged_gnn_forward.1} parent=1 // pred_check_branch
      %154 = sbr.rel (0) target = $region97
    $region96: #{ged_gnn_forward.1} parent=1 // pred_region
      _
    $region97: #{ged_gnn_forward.1} parent=1 // pred_fallthru
      _
    // Predicated region
    $region98: #{ged_gnn_forward.1} parent=1 // pred_check
      _
    $region99: #{ged_gnn_forward.1} parent=1 // pred_check_branch
      %156 = sbr.rel (0) target = $region101
    $region100: #{ged_gnn_forward.1} parent=1 // pred_region
      _
    $region101: #{ged_gnn_forward.1} parent=1 // pred_fallthru
      _
    // Predicated region
    $region102: #{ged_gnn_forward.1} parent=1 // pred_check
      _
    $region103: #{ged_gnn_forward.1} parent=1 // pred_check_branch
      %158 = sbr.rel (0) target = $region105
    $region104: #{ged_gnn_forward.1} parent=1 // pred_region
      _
    $region105: #{ged_gnn_forward.1} parent=1 // pred_fallthru
      _
    // Predicated region
    $region106: #{ged_gnn_forward.1} parent=1 // pred_check
      _
    $region107: #{ged_gnn_forward.1} parent=1 // pred_check_branch
      %160 = sbr.rel (0) target = $region109
    $region108: #{ged_gnn_forward.1} parent=1 // pred_region
      _
    $region109: #{ged_gnn_forward.1} parent=1 // pred_fallthru
      _
    // Predicated region
    $region110: #{ged_gnn_forward.1} parent=1 // pred_check
      _
    $region111: #{ged_gnn_forward.1} parent=1 // pred_check_branch
      %162 = sbr.rel (0) target = $region113
    $region112: #{ged_gnn_forward.1} parent=1 // pred_region
      _
    $region113: #{ged_gnn_forward.1} parent=1 // pred_fallthru
      _
    // Predicated region
    $region114: #{ged_gnn_forward.1} parent=1 // pred_check
      _
    $region115: #{ged_gnn_forward.1} parent=1 // pred_check_branch
      %164 = sbr.rel (0) target = $region117
    $region116: #{ged_gnn_forward.1} parent=1 // pred_region
      _
    $region117: #{ged_gnn_forward.1} parent=1 // pred_fallthru
      _
    // Predicated region
    $region118: #{ged_gnn_forward.1} parent=1 // pred_check
      _
    $region119: #{ged_gnn_forward.1} parent=1 // pred_check_branch
      %166 = sbr.rel (0) target = $region121
    $region120: #{ged_gnn_forward.1} parent=1 // pred_region
      _
    $region121: #{ged_gnn_forward.1} parent=1 // pred_fallthru
      _
    // Predicated region
    $region122: #{ged_gnn_forward.1} parent=1 // pred_check
      _
    $region123: #{ged_gnn_forward.1} parent=1 // pred_check_branch
      %168 = sbr.rel (0) target = $region125
    $region124: #{ged_gnn_forward.1} parent=1 // pred_region
      _
    $region125: #{ged_gnn_forward.1} parent=1 // pred_fallthru
      _
    // Predicated region
    $region126: #{ged_gnn_forward.1} parent=1 // pred_check
      _
    $region127: #{ged_gnn_forward.1} parent=1 // pred_check_branch
      %170 = sbr.rel (0) target = $region129
    $region128: #{ged_gnn_forward.1} parent=1 // pred_region
      _
    $region129: #{ged_gnn_forward.1} parent=1 // pred_fallthru
      _
    // Predicated region
    $region130: #{ged_gnn_forward.1} parent=1 // pred_check
      _
    $region131: #{ged_gnn_forward.1} parent=1 // pred_check_branch
      %172 = sbr.rel (0) target = $region133
    $region132: #{ged_gnn_forward.1} parent=1 // pred_region
      _
    $region133: #{ged_gnn_forward.1} parent=1 // pred_fallthru
      _
    // Predicated region
    $region134: #{ged_gnn_forward.1} parent=1 // pred_check
      _
    $region135: #{ged_gnn_forward.1} parent=1 // pred_check_branch
      %174 = sbr.rel (0) target = $region137
    $region136: #{ged_gnn_forward.1} parent=1 // pred_region
      _
    $region137: #{ged_gnn_forward.1} parent=1 // pred_fallthru
      _
    // Predicated region
    $region138: #{ged_gnn_forward.1} parent=1 // pred_check
      _
    $region139: #{ged_gnn_forward.1} parent=1 // pred_check_branch
      %176 = sbr.rel (0) target = $region141
    $region140: #{ged_gnn_forward.1} parent=1 // pred_region
      _
    $region141: #{ged_gnn_forward.1} parent=1 // pred_fallthru
      _
    // Predicated region
    $region142: #{ged_gnn_forward.1} parent=1 // pred_check
      _
    $region143: #{ged_gnn_forward.1} parent=1 // pred_check_branch
      %178 = sbr.rel (0) target = $region145
    $region144: #{ged_gnn_forward.1} parent=1 // pred_region
      _
    $region145: #{ged_gnn_forward.1} parent=1 // pred_fallthru
      _
    // Predicated region
    $region146: #{ged_gnn_forward.1} parent=1 // pred_check
      _
    $region147: #{ged_gnn_forward.1} parent=1 // pred_check_branch
      %180 = sbr.rel (0) target = $region149
    $region148: #{ged_gnn_forward.1} parent=1 // pred_region
      _
    $region149: #{ged_gnn_forward.1} parent=1 // pred_fallthru
      _
    // Predicated region
    $region150: #{ged_gnn_forward.1} parent=1 // pred_check
      _
    $region151: #{ged_gnn_forward.1} parent=1 // pred_check_branch
      %182 = sbr.rel (0) target = $region153
    $region152: #{ged_gnn_forward.1} parent=1 // pred_region
      _
    $region153: #{ged_gnn_forward.1} parent=1 // pred_fallthru
      _
    // Predicated region
    $region154: #{ged_gnn_forward.1} parent=1 // pred_check
      _
    $region155: #{ged_gnn_forward.1} parent=1 // pred_check_branch
      %184 = sbr.rel (0) target = $region157
    $region156: #{ged_gnn_forward.1} parent=1 // pred_region
      _
    $region157: #{ged_gnn_forward.1} parent=1 // pred_fallthru
      _
    // Predicated region
    $region158: #{ged_gnn_forward.1} parent=1 // pred_check
      _
    $region159: #{ged_gnn_forward.1} parent=1 // pred_check_branch
      %186 = sbr.rel (0) target = $region161
    $region160: #{ged_gnn_forward.1} parent=1 // pred_region
      _
    $region161: #{ged_gnn_forward.1} parent=1 // pred_fallthru
      _
    // Predicated region
    $region162: #{ged_gnn_forward.1} parent=1 // pred_check
      _
    $region163: #{ged_gnn_forward.1} parent=1 // pred_check_branch
      %188 = sbr.rel (0) target = $region165
    $region164: #{ged_gnn_forward.1} parent=1 // pred_region
      _
    $region165: #{ged_gnn_forward.1} parent=1 // pred_fallthru
      _
    // Predicated region
    $region166: #{ged_gnn_forward.1} parent=1 // pred_check
      _
    $region167: #{ged_gnn_forward.1} parent=1 // pred_check_branch
      %190 = sbr.rel (0) target = $region169
    $region168: #{ged_gnn_forward.1} parent=1 // pred_region
      _
    $region169: #{ged_gnn_forward.1} parent=1 // pred_fallthru
      _
    // Predicated region
    $region170: #{ged_gnn_forward.1} parent=1 // pred_check
      _
    $region171: #{ged_gnn_forward.1} parent=1 // pred_check_branch
      %192 = sbr.rel (0) target = $region173
    $region172: #{ged_gnn_forward.1} parent=1 // pred_region
      _
    $region173: #{ged_gnn_forward.1} parent=1 // pred_fallthru
      _
    // Predicated region
    $region174: #{ged_gnn_forward.1} parent=1 // pred_check
      _
    $region175: #{ged_gnn_forward.1} parent=1 // pred_check_branch
      %194 = sbr.rel (0) target = $region177
    $region176: #{ged_gnn_forward.1} parent=1 // pred_region
      _
    $region177: #{ged_gnn_forward.1} parent=1 // pred_fallthru
      _
    // Predicated region
    $region178: #{ged_gnn_forward.1} parent=1 // pred_check
      _
    $region179: #{ged_gnn_forward.1} parent=1 // pred_check_branch
      %196 = sbr.rel (0) target = $region181
    $region180: #{ged_gnn_forward.1} parent=1 // pred_region
      _
    $region181: #{ged_gnn_forward.1} parent=1 // pred_fallthru
      _
    %v197 = vld [vmem:[%s1] sm:$0xff]
    %v198 = vld [vmem:[%s1 + $0x8] sm:$0xff]
    %v199 = vld [vmem:[%s1 + $0x10] sm:$0xff]
    %v200 = vld [vmem:[%s1 + $0x18] sm:$0xff]
    %v201 = vld [vmem:[%s5] sm:$0xff]
    %v202 = vld [vmem:[%s5 + $0x8] sm:$0xff]
    %v203 = vld [vmem:[%s5 + $0x10] sm:$0xff]
    %v204 = vld [vmem:[%s5 + $0x18] sm:$0xff]
    %v205 = vld [vmem:[%s7] sm:$0xff]
    %v206 = vld [vmem:[%s7 + $0x8] sm:$0xff]
    %v207 = vld [vmem:[%s7 + $0x10] sm:$0xff]
    %v208 = vld [vmem:[%s7 + $0x18] sm:$0xff]
    %v209 = vadd.f32 %v201, %v205
    %v210 = vadd.f32 %v202, %v206
    %v211 = vadd.f32 %v203, %v207
    %v212 = vadd.f32 %v204, %v208
    %v213 = vld [vmem:[%s3] sm:$0xff]
    %v214 = vld [vmem:[%s3 + $0x8] sm:$0xff]
    %v215 = vld [vmem:[%s3 + $0x10] sm:$0xff]
    %v216 = vld [vmem:[%s3 + $0x18] sm:$0xff]
    %vm217 = vcmask 261120
    %v219 = vsel %vm217, %v197, 0
    %v222 = vsel %vm217, %v198, 0
    %v225 = vsel %vm217, %v199, 0
    %v228 = vsel %vm217, %v200, 0
    %230 = vmatprep.subr.mxu0 0.0
    %231 = vmatpush1.msra.mxu0 %v213
    %232 = vmatprep.subr.mxu0 0.0
    %233 = vmatpush1.msra.mxu0 %v214
    %234 = vmatprep.subr.mxu0 0.0
    %235 = vmatpush1.msra.mxu0 %v215
    %236 = vmatprep.subr.mxu0 0.0
    %237 = vmatpush1.msra.mxu0 %v216
    %238 = vmatprep.subr.mxu0 0.0
    %239 = vmatpush1.msra.mxu0 0.0
    %240 = vmatprep.subr.mxu0 0.0
    %241 = vmatpush1.msra.mxu0 0.0
    %242 = vmatprep.subr.mxu0 0.0
    %243 = vmatpush1.msra.mxu0 0.0
    %244 = vmatprep.subr.mxu0 0.0
    %245 = vmatpush1.msra.mxu0 0.0
    %246 = vmatprep.subr.mxu0 0.0
    %247 = vmatpush1.msra.mxu0 0.0
    %248 = vmatprep.subr.mxu0 0.0
    %249 = vmatpush1.msra.mxu0 0.0
    %250 = vmatprep.subr.mxu0 0.0
    %251 = vmatpush1.msra.mxu0 0.0
    %252 = vmatprep.subr.mxu0 0.0
    %253 = vmatpush1.msra.mxu0 0.0
    %254 = vmatprep.subr.mxu0 0.0
    %255 = vmatpush1.msra.mxu0 0.0
    %256 = vmatprep.subr.mxu0 0.0
    %257 = vmatpush1.msra.mxu0 0.0
    %258 = vmatprep.subr.mxu0 0.0
    %259 = vmatpush1.msra.mxu0 0.0
    %260 = vmatprep.subr.mxu0 0.0
    %261 = vmatpush1.msra.mxu0 0.0
    %262 = vmatprep.subr.mxu0 0.0
    %263 = vmatpush1.msra.mxu0 0.0
    %264 = vmatprep.subr.mxu0 0.0
    %265 = vmatpush1.msra.mxu0 0.0
    %266 = vmatprep.subr.mxu0 0.0
    %267 = vmatpush1.msra.mxu0 0.0
    %268 = vmatprep.subr.mxu0 0.0
    %269 = vmatpush1.msra.mxu0 0.0
    %270 = vmatprep.subr.mxu0 0.0
    %271 = vmatpush1.msra.mxu0 0.0
    %272 = vmatprep.subr.mxu0 0.0
    %273 = vmatpush1.msra.mxu0 0.0
    %274 = vmatprep.subr.mxu0 0.0
    %275 = vmatpush1.msra.mxu0 0.0
    %276 = vmatprep.subr.mxu0 0.0
    %277 = vmatpush1.msra.mxu0 0.0
    %278 = vmatprep.subr.mxu0 0.0
    %279 = vmatpush1.msra.mxu0 0.0
    %280 = vmatprep.subr.mxu0 0.0
    %281 = vmatpush1.msra.mxu0 0.0
    %282 = vmatprep.subr.mxu0 0.0
    %283 = vmatpush1.msra.mxu0 0.0
    %284 = vmatprep.subr.mxu0 0.0
    %285 = vmatpush1.msra.mxu0 0.0
    %286 = vmatprep.subr.mxu0 0.0
    %287 = vmatpush1.msra.mxu0 0.0
    %288 = vmatprep.subr.mxu0 0.0
    %289 = vmatpush1.msra.mxu0 0.0
    %290 = vmatprep.subr.mxu0 0.0
    %291 = vmatpush1.msra.mxu0 0.0
    %292 = vmatprep.subr.mxu0 0.0
    %293 = vmatpush1.msra.mxu0 0.0
    %294 = vmatprep.mubr.f32.mxu0 0.0
    %295 = vmatmul.mubr.f32.gmra.mrb[0].mxu0 %v219
    %v296 = vpop.f32.mrb[0].mxu0
    %v297 = vadd.f32 0.0, %v296
    %v298 = vpop.f32.mrb[0].mxu0
    %299 = vmatprep.mubr.f32.mxu0 0.0
    %300 = vmatmul.mubr.f32.gmra.mrb[0].mxu0 %v222
    %v301 = vpop.f32.mrb[0].mxu0
    %v302 = vadd.f32 0.0, %v301
    %v303 = vpop.f32.mrb[0].mxu0
    %304 = vmatprep.mubr.f32.mxu0 0.0
    %305 = vmatmul.mubr.f32.gmra.mrb[0].mxu0 %v225
    %v306 = vpop.f32.mrb[0].mxu0
    %v307 = vadd.f32 0.0, %v306
    %v308 = vpop.f32.mrb[0].mxu0
    %309 = vmatprep.mubr.f32.mxu0 0.0
    %310 = vmatmul.mubr.f32.gmra.mrb[0].mxu0 %v228
    %v311 = vpop.f32.mrb[0].mxu0
    %v312 = vadd.f32 0.0, %v311
    %v313 = vpop.f32.mrb[0].mxu0
    %314 = vdwg.mxu0
    %v315 = vadd.f32 %v213, %v297
    %v316 = vadd.f32 %v214, %v302
    %v317 = vadd.f32 %v215, %v307
    %v318 = vadd.f32 %v216, %v312
    %v319 = vld [vmem:[%s17] sm:$0xff]
    %v320 = vld [vmem:[%s19] sm:$0x1]
    %v322 = vlaneseq
    %v323 = vshrl.u32 %v322, 7
    %v324 = vsub.s32 0, %v323
    %v325 = vrot.slane %v320, %v324
    %vm327 = vcmask 64512
    %v329 = vsel %vm327, %v315, 0
    %v332 = vsel %vm327, %v316, 0
    %v335 = vsel %vm327, %v317, 0
    %v338 = vsel %vm327, %v318, 0
    %340 = vmatprep.subr.mxu0 0.0
    %341 = vmatpush1.msra.mxu0 %v319
    %342 = vmatprep.subr.mxu0 0.0
    %343 = vmatpush1.msra.mxu0 0.0
    %344 = vmatprep.subr.mxu0 0.0
    %345 = vmatpush1.msra.mxu0 0.0
    %346 = vmatprep.subr.mxu0 0.0
    %347 = vmatpush1.msra.mxu0 0.0
    %348 = vmatprep.subr.mxu0 0.0
    %349 = vmatpush1.msra.mxu0 0.0
    %350 = vmatprep.subr.mxu0 0.0
    %351 = vmatpush1.msra.mxu0 0.0
    %352 = vmatprep.subr.mxu0 0.0
    %353 = vmatpush1.msra.mxu0 0.0
    %354 = vmatprep.subr.mxu0 0.0
    %355 = vmatpush1.msra.mxu0 0.0
    %356 = vmatprep.subr.mxu0 0.0
    %357 = vmatpush1.msra.mxu0 0.0
    %358 = vmatprep.subr.mxu0 0.0
    %359 = vmatpush1.msra.mxu0 0.0
    %360 = vmatprep.subr.mxu0 0.0
    %361 = vmatpush1.msra.mxu0 0.0
    %362 = vmatprep.subr.mxu0 0.0
    %363 = vmatpush1.msra.mxu0 0.0
    %364 = vmatprep.subr.mxu0 0.0
    %365 = vmatpush1.msra.mxu0 0.0
    %366 = vmatprep.subr.mxu0 0.0
    %367 = vmatpush1.msra.mxu0 0.0
    %368 = vmatprep.subr.mxu0 0.0
    %369 = vmatpush1.msra.mxu0 0.0
    %370 = vmatprep.subr.mxu0 0.0
    %371 = vmatpush1.msra.mxu0 0.0
    %372 = vmatprep.subr.mxu0 0.0
    %373 = vmatpush1.msra.mxu0 0.0
    %374 = vmatprep.subr.mxu0 0.0
    %375 = vmatpush1.msra.mxu0 0.0
    %376 = vmatprep.subr.mxu0 0.0
    %377 = vmatpush1.msra.mxu0 0.0
    %378 = vmatprep.subr.mxu0 0.0
    %379 = vmatpush1.msra.mxu0 0.0
    %380 = vmatprep.subr.mxu0 0.0
    %381 = vmatpush1.msra.mxu0 0.0
    %382 = vmatprep.subr.mxu0 0.0
    %383 = vmatpush1.msra.mxu0 0.0
    %384 = vmatprep.subr.mxu0 0.0
    %385 = vmatpush1.msra.mxu0 0.0
    %386 = vmatprep.subr.mxu0 0.0
    %387 = vmatpush1.msra.mxu0 0.0
    %388 = vmatprep.subr.mxu0 0.0
    %389 = vmatpush1.msra.mxu0 0.0
    %390 = vmatprep.subr.mxu0 0.0
    %391 = vmatpush1.msra.mxu0 0.0
    %392 = vmatprep.subr.mxu0 0.0
    %393 = vmatpush1.msra.mxu0 0.0
    %394 = vmatprep.subr.mxu0 0.0
    %395 = vmatpush1.msra.mxu0 0.0
    %396 = vmatprep.subr.mxu0 0.0
    %397 = vmatpush1.msra.mxu0 0.0
    %398 = vmatprep.subr.mxu0 0.0
    %399 = vmatpush1.msra.mxu0 0.0
    %400 = vmatprep.subr.mxu0 0.0
    %401 = vmatpush1.msra.mxu0 0.0
    %402 = vmatprep.subr.mxu0 0.0
    %403 = vmatpush1.msra.mxu0 0.0
    %404 = vmatprep.mubr.f32.mxu0 0.0
    %405 = vmatmul.mubr.f32.gmra.mrb[0].mxu0 %v329
    %v406 = vpop.f32.mrb[0].mxu0
    %v407 = vadd.f32 %v325, %v406
    %v408 = vpop.f32.mrb[0].mxu0
    %409 = vmatprep.mubr.f32.mxu0 0.0
    %410 = vmatmul.mubr.f32.gmra.mrb[0].mxu0 %v332
    %v411 = vpop.f32.mrb[0].mxu0
    %v412 = vadd.f32 %v325, %v411
    %v413 = vpop.f32.mrb[0].mxu0
    %414 = vmatprep.mubr.f32.mxu0 0.0
    %415 = vmatmul.mubr.f32.gmra.mrb[0].mxu0 %v335
    %v416 = vpop.f32.mrb[0].mxu0
    %v417 = vadd.f32 %v325, %v416
    %v418 = vpop.f32.mrb[0].mxu0
    %419 = vmatprep.mubr.f32.mxu0 0.0
    %420 = vmatmul.mubr.f32.gmra.mrb[0].mxu0 %v338
    %v421 = vpop.f32.mrb[0].mxu0
    %v422 = vadd.f32 %v325, %v421
    %v423 = vpop.f32.mrb[0].mxu0
    %424 = vdwg.mxu0
    %v425 = vmax.f32 %v407, 0.0
    %v426 = vmax.f32 %v412, 0.0
    %v427 = vmax.f32 %v417, 0.0
    %v428 = vmax.f32 %v422, 0.0
    %v429 = vld [vmem:[%s21] sm:$0xff]
    %v430 = vld [vmem:[%s21 + $0x8] sm:$0xff]
    %v431 = vld [vmem:[%s21 + $0x10] sm:$0xff]
    %v432 = vld [vmem:[%s21 + $0x18] sm:$0xff]
    %v433 = vld [vmem:[%s21 + $0x20] sm:$0xff]
    %v434 = vld [vmem:[%s21 + $0x28] sm:$0xff]
    %v435 = vld [vmem:[%s21 + $0x30] sm:$0xff]
    %v436 = vld [vmem:[%s21 + $0x38] sm:$0xff]
    %v437 = vld [vmem:[%s21 + $0x40] sm:$0xff]
    %v438 = vld [vmem:[%s21 + $0x48] sm:$0xff]
    %v439 = vld [vmem:[%s21 + $0x50] sm:$0xff]
    %v440 = vld [vmem:[%s21 + $0x58] sm:$0xff]
    %v441 = vld [vmem:[%s21 + $0x60] sm:$0xff]
    %v442 = vld [vmem:[%s21 + $0x68] sm:$0xff]
    %v443 = vld [vmem:[%s21 + $0x70] sm:$0xff]
    %v444 = vld [vmem:[%s21 + $0x78] sm:$0xff]
    %v445 = vld [vmem:[%s23] sm:$0x1]
    %v447 = vlaneseq
    %v448 = vshrl.u32 %v447, 7
    %v449 = vsub.s32 0, %v448
    %v450 = vrot.slane %v445, %v449
    %452 = vmatprep.subr.mxu0 0.0
    %453 = vmatpush1.msra.mxu0 %v429
    %454 = vmatprep.subr.mxu0 0.0
    %455 = vmatpush1.msra.mxu0 %v430
    %456 = vmatprep.subr.mxu0 0.0
    %457 = vmatpush1.msra.mxu0 %v431
    %458 = vmatprep.subr.mxu0 0.0
    %459 = vmatpush1.msra.mxu0 %v432
    %460 = vmatprep.subr.mxu0 0.0
    %461 = vmatpush1.msra.mxu0 %v433
    %462 = vmatprep.subr.mxu0 0.0
    %463 = vmatpush1.msra.mxu0 %v434
    %464 = vmatprep.subr.mxu0 0.0
    %465 = vmatpush1.msra.mxu0 %v435
    %466 = vmatprep.subr.mxu0 0.0
    %467 = vmatpush1.msra.mxu0 %v436
    %468 = vmatprep.subr.mxu0 0.0
    %469 = vmatpush1.msra.mxu0 %v437
    %470 = vmatprep.subr.mxu0 0.0
    %471 = vmatpush1.msra.mxu0 %v438
    %472 = vmatprep.subr.mxu0 0.0
    %473 = vmatpush1.msra.mxu0 %v439
    %474 = vmatprep.subr.mxu0 0.0
    %475 = vmatpush1.msra.mxu0 %v440
    %476 = vmatprep.subr.mxu0 0.0
    %477 = vmatpush1.msra.mxu0 %v441
    %478 = vmatprep.subr.mxu0 0.0
    %479 = vmatpush1.msra.mxu0 %v442
    %480 = vmatprep.subr.mxu0 0.0
    %481 = vmatpush1.msra.mxu0 %v443
    %482 = vmatprep.subr.mxu0 0.0
    %483 = vmatpush1.msra.mxu0 %v444
    %484 = vmatprep.subr.mxu0 0.0
    %485 = vmatpush1.msra.mxu0 0.0
    %486 = vmatprep.subr.mxu0 0.0
    %487 = vmatpush1.msra.mxu0 0.0
    %488 = vmatprep.subr.mxu0 0.0
    %489 = vmatpush1.msra.mxu0 0.0
    %490 = vmatprep.subr.mxu0 0.0
    %491 = vmatpush1.msra.mxu0 0.0
    %492 = vmatprep.subr.mxu0 0.0
    %493 = vmatpush1.msra.mxu0 0.0
    %494 = vmatprep.subr.mxu0 0.0
    %495 = vmatpush1.msra.mxu0 0.0
    %496 = vmatprep.subr.mxu0 0.0
    %497 = vmatpush1.msra.mxu0 0.0
    %498 = vmatprep.subr.mxu0 0.0
    %499 = vmatpush1.msra.mxu0 0.0
    %500 = vmatprep.subr.mxu0 0.0
    %501 = vmatpush1.msra.mxu0 0.0
    %502 = vmatprep.subr.mxu0 0.0
    %503 = vmatpush1.msra.mxu0 0.0
    %504 = vmatprep.subr.mxu0 0.0
    %505 = vmatpush1.msra.mxu0 0.0
    %506 = vmatprep.subr.mxu0 0.0
    %507 = vmatpush1.msra.mxu0 0.0
    %508 = vmatprep.subr.mxu0 0.0
    %509 = vmatpush1.msra.mxu0 0.0
    %510 = vmatprep.subr.mxu0 0.0
    %511 = vmatpush1.msra.mxu0 0.0
    %512 = vmatprep.subr.mxu0 0.0
    %513 = vmatpush1.msra.mxu0 0.0
    %514 = vmatprep.subr.mxu0 0.0
    %515 = vmatpush1.msra.mxu0 0.0
    %516 = vmatprep.mubr.f32.mxu0 0.0
    %517 = vmatmul.mubr.f32.gmra.mrb[0].mxu0 %v425
    %v518 = vpop.f32.mrb[0].mxu0
    %v519 = vadd.f32 %v450, %v518
    %v520 = vpop.f32.mrb[0].mxu0
    %521 = vmatprep.mubr.f32.mxu0 0.0
    %522 = vmatmul.mubr.f32.gmra.mrb[0].mxu0 %v426
    %v523 = vpop.f32.mrb[0].mxu0
    %v524 = vadd.f32 %v450, %v523
    %v525 = vpop.f32.mrb[0].mxu0
    %526 = vmatprep.mubr.f32.mxu0 0.0
    %527 = vmatmul.mubr.f32.gmra.mrb[0].mxu0 %v427
    %v528 = vpop.f32.mrb[0].mxu0
    %v529 = vadd.f32 %v450, %v528
    %v530 = vpop.f32.mrb[0].mxu0
    %531 = vmatprep.mubr.f32.mxu0 0.0
    %532 = vmatmul.mubr.f32.gmra.mrb[0].mxu0 %v428
    %v533 = vpop.f32.mrb[0].mxu0
    %v534 = vadd.f32 %v450, %v533
    %v535 = vpop.f32.mrb[0].mxu0
    %536 = vdwg.mxu0
    %538 = vset.pattern.permute.xlu0 0
    %539 = vperm.xlu0 %538, %v201
    %v540 = vpop.permute.xlu0 %539
    %543 = vset.pattern.permute.xlu0 0
    %544 = vperm.xlu0 %543, %v202
    %v545 = vpop.permute.xlu0 %544
    %548 = vset.pattern.permute.xlu0 0
    %549 = vperm.xlu0 %548, %v203
    %v550 = vpop.permute.xlu0 %549
    %553 = vset.pattern.permute.xlu0 0
    %554 = vperm.xlu0 %553, %v204
    %v555 = vpop.permute.xlu0 %554
    %v557 = vmul.f32 %v519, %v540
    %v558 = vmul.f32 %v524, %v545
    %v559 = vmul.f32 %v529, %v550
    %v560 = vmul.f32 %v534, %v555
    %v561 = vadd.f32 %v557, %v558
    %v562 = vadd.f32 %v561, %v559
    %v563 = vadd.f32 %v562, %v560
    %v564 = vrot.slane %v563, 4
    %v565 = vadd.f32 %v563, %v564
    %v566 = vrot.slane %v565, 2
    %v567 = vadd.f32 %v565, %v566
    %v568 = vrot.slane %v567, 1
    %v569 = vadd.f32 %v567, %v568
    %v570 = vmul.f32 %v569, 0.1
    %572 = vset.pattern.permute.xlu0 0
    %573 = vperm.xlu0 %572, %v205
    %v574 = vpop.permute.xlu0 %573
    %577 = vset.pattern.permute.xlu0 0
    %578 = vperm.xlu0 %577, %v206
    %v579 = vpop.permute.xlu0 %578
    %582 = vset.pattern.permute.xlu0 0
    %583 = vperm.xlu0 %582, %v207
    %v584 = vpop.permute.xlu0 %583
    %587 = vset.pattern.permute.xlu0 0
    %588 = vperm.xlu0 %587, %v208
    %v589 = vpop.permute.xlu0 %588
    %v591 = vmul.f32 %v519, %v574
    %v592 = vmul.f32 %v524, %v579
    %v593 = vmul.f32 %v529, %v584
    %v594 = vmul.f32 %v534, %v589
    %v595 = vadd.f32 %v591, %v592
    %v596 = vadd.f32 %v595, %v593
    %v597 = vadd.f32 %v596, %v594
    %v598 = vrot.slane %v597, 4
    %v599 = vadd.f32 %v597, %v598
    %v600 = vrot.slane %v599, 2
    %v601 = vadd.f32 %v599, %v600
    %v602 = vrot.slane %v601, 1
    %v603 = vadd.f32 %v601, %v602
    %v604 = vmul.f32 %v603, 0.083333336
    %v605 = vmul.f32 %v540, %v570
    %v606 = vmul.f32 %v545, %v570
    %v607 = vmul.f32 %v550, %v570
    %v608 = vmul.f32 %v555, %v570
    %v609 = vmul.f32 %v574, %v604
    %v610 = vmul.f32 %v579, %v604
    %v611 = vmul.f32 %v584, %v604
    %v612 = vmul.f32 %v589, %v604
    %v613 = vadd.f32 %v605, %v609
    %v614 = vadd.f32 %v606, %v610
    %v615 = vadd.f32 %v607, %v611
    %v616 = vadd.f32 %v608, %v612
    %v617 = vsub.f32 %v519, %v613
    %v618 = vsub.f32 %v524, %v614
    %v619 = vsub.f32 %v529, %v615
    %v620 = vsub.f32 %v534, %v616
    %v621 = vmul.f32 %v617, %v617
    %v622 = vmul.f32 %v618, %v618
    %v623 = vmul.f32 %v619, %v619
    %v624 = vmul.f32 %v620, %v620
    %v625 = vmul.f32 %v621, %v540
    %v626 = vmul.f32 %v622, %v545
    %v627 = vmul.f32 %v623, %v550
    %v628 = vmul.f32 %v624, %v555
    %v629 = vadd.f32 %v625, %v626
    %v630 = vadd.f32 %v629, %v627
    %v631 = vadd.f32 %v630, %v628
    %v632 = vrot.slane %v631, 4
    %v633 = vadd.f32 %v631, %v632
    %v634 = vrot.slane %v633, 2
    %v635 = vadd.f32 %v633, %v634
    %v636 = vrot.slane %v635, 1
    %v637 = vadd.f32 %v635, %v636
    %v638 = vmul.f32 %v637, 0.1
    %v639 = vmul.f32 %v621, %v574
    %v640 = vmul.f32 %v622, %v579
    %v641 = vmul.f32 %v623, %v584
    %v642 = vmul.f32 %v624, %v589
    %v643 = vadd.f32 %v639, %v640
    %v644 = vadd.f32 %v643, %v641
    %v645 = vadd.f32 %v644, %v642
    %v646 = vrot.slane %v645, 4
    %v647 = vadd.f32 %v645, %v646
    %v648 = vrot.slane %v647, 2
    %v649 = vadd.f32 %v647, %v648
    %v650 = vrot.slane %v649, 1
    %v651 = vadd.f32 %v649, %v650
    %v652 = vmul.f32 %v651, 0.083333336
    %v653 = vmul.f32 %v540, %v638
    %v654 = vmul.f32 %v545, %v638
    %v655 = vmul.f32 %v550, %v638
    %v656 = vmul.f32 %v555, %v638
    %v657 = vmul.f32 %v574, %v652
    %v658 = vmul.f32 %v579, %v652
    %v659 = vmul.f32 %v584, %v652
    %v660 = vmul.f32 %v589, %v652
    %v661 = vadd.f32 %v653, %v657
    %v662 = vadd.f32 %v654, %v658
    %v663 = vadd.f32 %v655, %v659
    %v664 = vadd.f32 %v656, %v660
    %v665 = vadd.f32 %v661, 1e-05
    %v666 = vadd.f32 %v662, 1e-05
    %v667 = vadd.f32 %v663, 1e-05
    %v668 = vadd.f32 %v664, 1e-05
    %v669 = vrsqrt.pop %v665
    %v670 = vrsqrt.pop %v666
    %v671 = vrsqrt.pop %v667
    %v672 = vrsqrt.pop %v668
    %v673 = vmul.f32 %v617, %v669
    %v674 = vmul.f32 %v618, %v670
    %v675 = vmul.f32 %v619, %v671
    %v676 = vmul.f32 %v620, %v672
    %v677 = vld [vmem:[%s25] sm:$0x1]
    %v679 = vlaneseq
    %v680 = vshrl.u32 %v679, 7
    %v681 = vsub.s32 0, %v680
    %v682 = vrot.slane %v677, %v681
    %v684 = vmul.f32 %v673, %v682
    %v685 = vmul.f32 %v674, %v682
    %v686 = vmul.f32 %v675, %v682
    %v687 = vmul.f32 %v676, %v682
    %v688 = vld [vmem:[%s27] sm:$0x1]
    %v690 = vlaneseq
    %v691 = vshrl.u32 %v690, 7
    %v692 = vsub.s32 0, %v691
    %v693 = vrot.slane %v688, %v692
    %v695 = vadd.f32 %v684, %v693
    %v696 = vadd.f32 %v685, %v693
    %v697 = vadd.f32 %v686, %v693
    %v698 = vadd.f32 %v687, %v693
    %700 = vset.pattern.permute.xlu0 0
    %701 = vperm.xlu0 %700, %v209
    %v702 = vpop.permute.xlu0 %701
    %705 = vset.pattern.permute.xlu0 0
    %706 = vperm.xlu0 %705, %v210
    %v707 = vpop.permute.xlu0 %706
    %710 = vset.pattern.permute.xlu0 0
    %711 = vperm.xlu0 %710, %v211
    %v712 = vpop.permute.xlu0 %711
    %715 = vset.pattern.permute.xlu0 0
    %716 = vperm.xlu0 %715, %v212
    %v717 = vpop.permute.xlu0 %716
    %v719 = vmul.f32 %v695, %v702
    %v720 = vmul.f32 %v696, %v707
    %v721 = vmul.f32 %v697, %v712
    %v722 = vmul.f32 %v698, %v717
    %v723 = vmax.f32 %v719, 0.0
    %v724 = vmax.f32 %v720, 0.0
    %v725 = vmax.f32 %v721, 0.0
    %v726 = vmax.f32 %v722, 0.0
    %727 = vmatprep.subr.mxu0 0.0
    %728 = vmatpush1.msra.mxu0 %v723
    %729 = vmatprep.subr.mxu0 0.0
    %730 = vmatpush1.msra.mxu0 %v724
    %731 = vmatprep.subr.mxu0 0.0
    %732 = vmatpush1.msra.mxu0 %v725
    %733 = vmatprep.subr.mxu0 0.0
    %734 = vmatpush1.msra.mxu0 %v726
    %735 = vmatprep.subr.mxu0 0.0
    %736 = vmatpush1.msra.mxu0 0.0
    %737 = vmatprep.subr.mxu0 0.0
    %738 = vmatpush1.msra.mxu0 0.0
    %739 = vmatprep.subr.mxu0 0.0
    %740 = vmatpush1.msra.mxu0 0.0
    %741 = vmatprep.subr.mxu0 0.0
    %742 = vmatpush1.msra.mxu0 0.0
    %743 = vmatprep.subr.mxu0 0.0
    %744 = vmatpush1.msra.mxu0 0.0
    %745 = vmatprep.subr.mxu0 0.0
    %746 = vmatpush1.msra.mxu0 0.0
    %747 = vmatprep.subr.mxu0 0.0
    %748 = vmatpush1.msra.mxu0 0.0
    %749 = vmatprep.subr.mxu0 0.0
    %750 = vmatpush1.msra.mxu0 0.0
    %751 = vmatprep.subr.mxu0 0.0
    %752 = vmatpush1.msra.mxu0 0.0
    %753 = vmatprep.subr.mxu0 0.0
    %754 = vmatpush1.msra.mxu0 0.0
    %755 = vmatprep.subr.mxu0 0.0
    %756 = vmatpush1.msra.mxu0 0.0
    %757 = vmatprep.subr.mxu0 0.0
    %758 = vmatpush1.msra.mxu0 0.0
    %759 = vmatprep.subr.mxu0 0.0
    %760 = vmatpush1.msra.mxu0 0.0
    %761 = vmatprep.subr.mxu0 0.0
    %762 = vmatpush1.msra.mxu0 0.0
    %763 = vmatprep.subr.mxu0 0.0
    %764 = vmatpush1.msra.mxu0 0.0
    %765 = vmatprep.subr.mxu0 0.0
    %766 = vmatpush1.msra.mxu0 0.0
    %767 = vmatprep.subr.mxu0 0.0
    %768 = vmatpush1.msra.mxu0 0.0
    %769 = vmatprep.subr.mxu0 0.0
    %770 = vmatpush1.msra.mxu0 0.0
    %771 = vmatprep.subr.mxu0 0.0
    %772 = vmatpush1.msra.mxu0 0.0
    %773 = vmatprep.subr.mxu0 0.0
    %774 = vmatpush1.msra.mxu0 0.0
    %775 = vmatprep.subr.mxu0 0.0
    %776 = vmatpush1.msra.mxu0 0.0
    %777 = vmatprep.subr.mxu0 0.0
    %778 = vmatpush1.msra.mxu0 0.0
    %779 = vmatprep.subr.mxu0 0.0
    %780 = vmatpush1.msra.mxu0 0.0
    %781 = vmatprep.subr.mxu0 0.0
    %782 = vmatpush1.msra.mxu0 0.0
    %783 = vmatprep.subr.mxu0 0.0
    %784 = vmatpush1.msra.mxu0 0.0
    %785 = vmatprep.subr.mxu0 0.0
    %786 = vmatpush1.msra.mxu0 0.0
    %787 = vmatprep.subr.mxu0 0.0
    %788 = vmatpush1.msra.mxu0 0.0
    %789 = vmatprep.subr.mxu0 0.0
    %790 = vmatpush1.msra.mxu0 0.0
    %791 = vmatprep.mubr.f32.mxu0 0.0
    %792 = vmatmul.mubr.f32.gmra.mrb[0].mxu0 %v219
    %v793 = vpop.f32.mrb[0].mxu0
    %v794 = vadd.f32 0.0, %v793
    %v795 = vpop.f32.mrb[0].mxu0
    %796 = vmatprep.mubr.f32.mxu0 0.0
    %797 = vmatmul.mubr.f32.gmra.mrb[0].mxu0 %v222
    %v798 = vpop.f32.mrb[0].mxu0
    %v799 = vadd.f32 0.0, %v798
    %v800 = vpop.f32.mrb[0].mxu0
    %801 = vmatprep.mubr.f32.mxu0 0.0
    %802 = vmatmul.mubr.f32.gmra.mrb[0].mxu0 %v225
    %v803 = vpop.f32.mrb[0].mxu0
    %v804 = vadd.f32 0.0, %v803
    %v805 = vpop.f32.mrb[0].mxu0
    %806 = vmatprep.mubr.f32.mxu0 0.0
    %807 = vmatmul.mubr.f32.gmra.mrb[0].mxu0 %v228
    %v808 = vpop.f32.mrb[0].mxu0
    %v809 = vadd.f32 0.0, %v808
    %v810 = vpop.f32.mrb[0].mxu0
    %811 = vdwg.mxu0
    %v812 = vadd.f32 %v723, %v794
    %v813 = vadd.f32 %v724, %v799
    %v814 = vadd.f32 %v725, %v804
    %v815 = vadd.f32 %v726, %v809
    %v816 = vld [vmem:[%s29] sm:$0xff]
    %v817 = vld [vmem:[%s29 + $0x8] sm:$0xff]
    %v818 = vld [vmem:[%s29 + $0x10] sm:$0xff]
    %v819 = vld [vmem:[%s29 + $0x18] sm:$0xff]
    %v820 = vld [vmem:[%s29 + $0x20] sm:$0xff]
    %v821 = vld [vmem:[%s29 + $0x28] sm:$0xff]
    %v822 = vld [vmem:[%s29 + $0x30] sm:$0xff]
    %v823 = vld [vmem:[%s29 + $0x38] sm:$0xff]
    %v824 = vld [vmem:[%s29 + $0x40] sm:$0xff]
    %v825 = vld [vmem:[%s29 + $0x48] sm:$0xff]
    %v826 = vld [vmem:[%s29 + $0x50] sm:$0xff]
    %v827 = vld [vmem:[%s29 + $0x58] sm:$0xff]
    %v828 = vld [vmem:[%s29 + $0x60] sm:$0xff]
    %v829 = vld [vmem:[%s29 + $0x68] sm:$0xff]
    %v830 = vld [vmem:[%s29 + $0x70] sm:$0xff]
    %v831 = vld [vmem:[%s29 + $0x78] sm:$0xff]
    %v832 = vld [vmem:[%s31] sm:$0x1]
    %v834 = vlaneseq
    %v835 = vshrl.u32 %v834, 7
    %v836 = vsub.s32 0, %v835
    %v837 = vrot.slane %v832, %v836
    %839 = vmatprep.subr.mxu0 0.0
    %840 = vmatpush1.msra.mxu0 %v816
    %841 = vmatprep.subr.mxu0 0.0
    %842 = vmatpush1.msra.mxu0 %v817
    %843 = vmatprep.subr.mxu0 0.0
    %844 = vmatpush1.msra.mxu0 %v818
    %845 = vmatprep.subr.mxu0 0.0
    %846 = vmatpush1.msra.mxu0 %v819
    %847 = vmatprep.subr.mxu0 0.0
    %848 = vmatpush1.msra.mxu0 %v820
    %849 = vmatprep.subr.mxu0 0.0
    %850 = vmatpush1.msra.mxu0 %v821
    %851 = vmatprep.subr.mxu0 0.0
    %852 = vmatpush1.msra.mxu0 %v822
    %853 = vmatprep.subr.mxu0 0.0
    %854 = vmatpush1.msra.mxu0 %v823
    %855 = vmatprep.subr.mxu0 0.0
    %856 = vmatpush1.msra.mxu0 %v824
    %857 = vmatprep.subr.mxu0 0.0
    %858 = vmatpush1.msra.mxu0 %v825
    %859 = vmatprep.subr.mxu0 0.0
    %860 = vmatpush1.msra.mxu0 %v826
    %861 = vmatprep.subr.mxu0 0.0
    %862 = vmatpush1.msra.mxu0 %v827
    %863 = vmatprep.subr.mxu0 0.0
    %864 = vmatpush1.msra.mxu0 %v828
    %865 = vmatprep.subr.mxu0 0.0
    %866 = vmatpush1.msra.mxu0 %v829
    %867 = vmatprep.subr.mxu0 0.0
    %868 = vmatpush1.msra.mxu0 %v830
    %869 = vmatprep.subr.mxu0 0.0
    %870 = vmatpush1.msra.mxu0 %v831
    %871 = vmatprep.subr.mxu0 0.0
    %872 = vmatpush1.msra.mxu0 0.0
    %873 = vmatprep.subr.mxu0 0.0
    %874 = vmatpush1.msra.mxu0 0.0
    %875 = vmatprep.subr.mxu0 0.0
    %876 = vmatpush1.msra.mxu0 0.0
    %877 = vmatprep.subr.mxu0 0.0
    %878 = vmatpush1.msra.mxu0 0.0
    %879 = vmatprep.subr.mxu0 0.0
    %880 = vmatpush1.msra.mxu0 0.0
    %881 = vmatprep.subr.mxu0 0.0
    %882 = vmatpush1.msra.mxu0 0.0
    %883 = vmatprep.subr.mxu0 0.0
    %884 = vmatpush1.msra.mxu0 0.0
    %885 = vmatprep.subr.mxu0 0.0
    %886 = vmatpush1.msra.mxu0 0.0
    %887 = vmatprep.subr.mxu0 0.0
    %888 = vmatpush1.msra.mxu0 0.0
    %889 = vmatprep.subr.mxu0 0.0
    %890 = vmatpush1.msra.mxu0 0.0
    %891 = vmatprep.subr.mxu0 0.0
    %892 = vmatpush1.msra.mxu0 0.0
    %893 = vmatprep.subr.mxu0 0.0
    %894 = vmatpush1.msra.mxu0 0.0
    %895 = vmatprep.subr.mxu0 0.0
    %896 = vmatpush1.msra.mxu0 0.0
    %897 = vmatprep.subr.mxu0 0.0
    %898 = vmatpush1.msra.mxu0 0.0
    %899 = vmatprep.subr.mxu0 0.0
    %900 = vmatpush1.msra.mxu0 0.0
    %901 = vmatprep.subr.mxu0 0.0
    %902 = vmatpush1.msra.mxu0 0.0
    %903 = vmatprep.mubr.f32.mxu0 0.0
    %904 = vmatmul.mubr.f32.gmra.mrb[0].mxu0 %v812
    %v905 = vpop.f32.mrb[0].mxu0
    %v906 = vadd.f32 %v837, %v905
    %v907 = vpop.f32.mrb[0].mxu0
    %908 = vmatprep.mubr.f32.mxu0 0.0
    %909 = vmatmul.mubr.f32.gmra.mrb[0].mxu0 %v813
    %v910 = vpop.f32.mrb[0].mxu0
    %v911 = vadd.f32 %v837, %v910
    %v912 = vpop.f32.mrb[0].mxu0
    %913 = vmatprep.mubr.f32.mxu0 0.0
    %914 = vmatmul.mubr.f32.gmra.mrb[0].mxu0 %v814
    %v915 = vpop.f32.mrb[0].mxu0
    %v916 = vadd.f32 %v837, %v915
    %v917 = vpop.f32.mrb[0].mxu0
    %918 = vmatprep.mubr.f32.mxu0 0.0
    %919 = vmatmul.mubr.f32.gmra.mrb[0].mxu0 %v815
    %v920 = vpop.f32.mrb[0].mxu0
    %v921 = vadd.f32 %v837, %v920
    %v922 = vpop.f32.mrb[0].mxu0
    %923 = vdwg.mxu0
    %v924 = vmax.f32 %v906, 0.0
    %v925 = vmax.f32 %v911, 0.0
    %v926 = vmax.f32 %v916, 0.0
    %v927 = vmax.f32 %v921, 0.0
    %v928 = vld [vmem:[%s33] sm:$0xff]
    %v929 = vld [vmem:[%s33 + $0x8] sm:$0xff]
    %v930 = vld [vmem:[%s33 + $0x10] sm:$0xff]
    %v931 = vld [vmem:[%s33 + $0x18] sm:$0xff]
    %v932 = vld [vmem:[%s33 + $0x20] sm:$0xff]
    %v933 = vld [vmem:[%s33 + $0x28] sm:$0xff]
    %v934 = vld [vmem:[%s33 + $0x30] sm:$0xff]
    %v935 = vld [vmem:[%s33 + $0x38] sm:$0xff]
    %v936 = vld [vmem:[%s35] sm:$0x1]
    %v938 = vlaneseq
    %v939 = vshrl.u32 %v938, 7
    %v940 = vsub.s32 0, %v939
    %v941 = vrot.slane %v936, %v940
    %vm943 = vcmask 523264
    %v945 = vsel %vm943, %v924, 0
    %v948 = vsel %vm943, %v925, 0
    %v951 = vsel %vm943, %v926, 0
    %v954 = vsel %vm943, %v927, 0
    %956 = vmatprep.subr.mxu0 0.0
    %957 = vmatpush1.msra.mxu0 %v928
    %958 = vmatprep.subr.mxu0 0.0
    %959 = vmatpush1.msra.mxu0 %v929
    %960 = vmatprep.subr.mxu0 0.0
    %961 = vmatpush1.msra.mxu0 %v930
    %962 = vmatprep.subr.mxu0 0.0
    %963 = vmatpush1.msra.mxu0 %v931
    %964 = vmatprep.subr.mxu0 0.0
    %965 = vmatpush1.msra.mxu0 %v932
    %966 = vmatprep.subr.mxu0 0.0
    %967 = vmatpush1.msra.mxu0 %v933
    %968 = vmatprep.subr.mxu0 0.0
    %969 = vmatpush1.msra.mxu0 %v934
    %970 = vmatprep.subr.mxu0 0.0
    %971 = vmatpush1.msra.mxu0 %v935
    %972 = vmatprep.subr.mxu0 0.0
    %973 = vmatpush1.msra.mxu0 0.0
    %974 = vmatprep.subr.mxu0 0.0
    %975 = vmatpush1.msra.mxu0 0.0
    %976 = vmatprep.subr.mxu0 0.0
    %977 = vmatpush1.msra.mxu0 0.0
    %978 = vmatprep.subr.mxu0 0.0
    %979 = vmatpush1.msra.mxu0 0.0
    %980 = vmatprep.subr.mxu0 0.0
    %981 = vmatpush1.msra.mxu0 0.0
    %982 = vmatprep.subr.mxu0 0.0
    %983 = vmatpush1.msra.mxu0 0.0
    %984 = vmatprep.subr.mxu0 0.0
    %985 = vmatpush1.msra.mxu0 0.0
    %986 = vmatprep.subr.mxu0 0.0
    %987 = vmatpush1.msra.mxu0 0.0
    %988 = vmatprep.subr.mxu0 0.0
    %989 = vmatpush1.msra.mxu0 0.0
    %990 = vmatprep.subr.mxu0 0.0
    %991 = vmatpush1.msra.mxu0 0.0
    %992 = vmatprep.subr.mxu0 0.0
    %993 = vmatpush1.msra.mxu0 0.0
    %994 = vmatprep.subr.mxu0 0.0
    %995 = vmatpush1.msra.mxu0 0.0
    %996 = vmatprep.subr.mxu0 0.0
    %997 = vmatpush1.msra.mxu0 0.0
    %998 = vmatprep.subr.mxu0 0.0
    %999 = vmatpush1.msra.mxu0 0.0
    %1000 = vmatprep.subr.mxu0 0.0
    %1001 = vmatpush1.msra.mxu0 0.0
    %1002 = vmatprep.subr.mxu0 0.0
    %1003 = vmatpush1.msra.mxu0 0.0
    %1004 = vmatprep.subr.mxu0 0.0
    %1005 = vmatpush1.msra.mxu0 0.0
    %1006 = vmatprep.subr.mxu0 0.0
    %1007 = vmatpush1.msra.mxu0 0.0
    %1008 = vmatprep.subr.mxu0 0.0
    %1009 = vmatpush1.msra.mxu0 0.0
    %1010 = vmatprep.subr.mxu0 0.0
    %1011 = vmatpush1.msra.mxu0 0.0
    %1012 = vmatprep.subr.mxu0 0.0
    %1013 = vmatpush1.msra.mxu0 0.0
    %1014 = vmatprep.subr.mxu0 0.0
    %1015 = vmatpush1.msra.mxu0 0.0
    %1016 = vmatprep.subr.mxu0 0.0
    %1017 = vmatpush1.msra.mxu0 0.0
    %1018 = vmatprep.subr.mxu0 0.0
    %1019 = vmatpush1.msra.mxu0 0.0
    %1020 = vmatprep.mubr.f32.mxu0 0.0
    %1021 = vmatmul.mubr.f32.gmra.mrb[0].mxu0 %v945
    %v1022 = vpop.f32.mrb[0].mxu0
    %v1023 = vadd.f32 %v941, %v1022
    %v1024 = vpop.f32.mrb[0].mxu0
    %1025 = vmatprep.mubr.f32.mxu0 0.0
    %1026 = vmatmul.mubr.f32.gmra.mrb[0].mxu0 %v948
    %v1027 = vpop.f32.mrb[0].mxu0
    %v1028 = vadd.f32 %v941, %v1027
    %v1029 = vpop.f32.mrb[0].mxu0
    %1030 = vmatprep.mubr.f32.mxu0 0.0
    %1031 = vmatmul.mubr.f32.gmra.mrb[0].mxu0 %v951
    %v1032 = vpop.f32.mrb[0].mxu0
    %v1033 = vadd.f32 %v941, %v1032
    %v1034 = vpop.f32.mrb[0].mxu0
    %1035 = vmatprep.mubr.f32.mxu0 0.0
    %1036 = vmatmul.mubr.f32.gmra.mrb[0].mxu0 %v954
    %v1037 = vpop.f32.mrb[0].mxu0
    %v1038 = vadd.f32 %v941, %v1037
    %v1039 = vpop.f32.mrb[0].mxu0
    %1040 = vdwg.mxu0
    %v1041 = vmul.f32 %v1023, %v540
    %v1042 = vmul.f32 %v1028, %v545
    %v1043 = vmul.f32 %v1033, %v550
    %v1044 = vmul.f32 %v1038, %v555
    %v1045 = vsel %vm943, %v1041, 0.0
    %v1046 = vsel %vm943, %v1042, 0.0
    %v1047 = vadd.f32 %v1045, %v1046
    %v1048 = vsel %vm943, %v1043, 0.0
    %v1049 = vadd.f32 %v1047, %v1048
    %v1050 = vsel %vm943, %v1044, 0.0
    %v1051 = vadd.f32 %v1049, %v1050
    %v1052 = vrot.slane %v1051, 4
    %v1053 = vadd.f32 %v1051, %v1052
    %v1054 = vrot.slane %v1053, 2
    %v1055 = vadd.f32 %v1053, %v1054
    %v1056 = vrot.slane %v1055, 1
    %v1057 = vadd.f32 %v1055, %v1056
    %v1058 = vmul.f32 %v1057, 0.1
    %v1059 = vmul.f32 %v1023, %v574
    %v1060 = vmul.f32 %v1028, %v579
    %v1061 = vmul.f32 %v1033, %v584
    %v1062 = vmul.f32 %v1038, %v589
    %v1063 = vsel %vm943, %v1059, 0.0
    %v1064 = vsel %vm943, %v1060, 0.0
    %v1065 = vadd.f32 %v1063, %v1064
    %v1066 = vsel %vm943, %v1061, 0.0
    %v1067 = vadd.f32 %v1065, %v1066
    %v1068 = vsel %vm943, %v1062, 0.0
    %v1069 = vadd.f32 %v1067, %v1068
    %v1070 = vrot.slane %v1069, 4
    %v1071 = vadd.f32 %v1069, %v1070
    %v1072 = vrot.slane %v1071, 2
    %v1073 = vadd.f32 %v1071, %v1072
    %v1074 = vrot.slane %v1073, 1
    %v1075 = vadd.f32 %v1073, %v1074
    %v1076 = vmul.f32 %v1075, 0.083333336
    %v1077 = vmul.f32 %v540, %v1058
    %v1078 = vmul.f32 %v545, %v1058
    %v1079 = vmul.f32 %v550, %v1058
    %v1080 = vmul.f32 %v555, %v1058
    %v1081 = vmul.f32 %v574, %v1076
    %v1082 = vmul.f32 %v579, %v1076
    %v1083 = vmul.f32 %v584, %v1076
    %v1084 = vmul.f32 %v589, %v1076
    %v1085 = vadd.f32 %v1077, %v1081
    %v1086 = vadd.f32 %v1078, %v1082
    %v1087 = vadd.f32 %v1079, %v1083
    %v1088 = vadd.f32 %v1080, %v1084
    %v1089 = vsub.f32 %v1023, %v1085
    %v1090 = vsub.f32 %v1028, %v1086
    %v1091 = vsub.f32 %v1033, %v1087
    %v1092 = vsub.f32 %v1038, %v1088
    %v1093 = vmul.f32 %v1089, %v1089
    %v1094 = vmul.f32 %v1090, %v1090
    %v1095 = vmul.f32 %v1091, %v1091
    %v1096 = vmul.f32 %v1092, %v1092
    %v1097 = vmul.f32 %v1093, %v540
    %v1098 = vmul.f32 %v1094, %v545
    %v1099 = vmul.f32 %v1095, %v550
    %v1100 = vmul.f32 %v1096, %v555
    %v1101 = vsel %vm943, %v1097, 0.0
    %v1102 = vsel %vm943, %v1098, 0.0
    %v1103 = vadd.f32 %v1101, %v1102
    %v1104 = vsel %vm943, %v1099, 0.0
    %v1105 = vadd.f32 %v1103, %v1104
    %v1106 = vsel %vm943, %v1100, 0.0
    %v1107 = vadd.f32 %v1105, %v1106
    %v1108 = vrot.slane %v1107, 4
    %v1109 = vadd.f32 %v1107, %v1108
    %v1110 = vrot.slane %v1109, 2
    %v1111 = vadd.f32 %v1109, %v1110
    %v1112 = vrot.slane %v1111, 1
    %v1113 = vadd.f32 %v1111, %v1112
    %v1114 = vmul.f32 %v1113, 0.1
    %v1115 = vmul.f32 %v1093, %v574
    %v1116 = vmul.f32 %v1094, %v579
    %v1117 = vmul.f32 %v1095, %v584
    %v1118 = vmul.f32 %v1096, %v589
    %v1119 = vsel %vm943, %v1115, 0.0
    %v1120 = vsel %vm943, %v1116, 0.0
    %v1121 = vadd.f32 %v1119, %v1120
    %v1122 = vsel %vm943, %v1117, 0.0
    %v1123 = vadd.f32 %v1121, %v1122
    %v1124 = vsel %vm943, %v1118, 0.0
    %v1125 = vadd.f32 %v1123, %v1124
    %v1126 = vrot.slane %v1125, 4
    %v1127 = vadd.f32 %v1125, %v1126
    %v1128 = vrot.slane %v1127, 2
    %v1129 = vadd.f32 %v1127, %v1128
    %v1130 = vrot.slane %v1129, 1
    %v1131 = vadd.f32 %v1129, %v1130
    %v1132 = vmul.f32 %v1131, 0.083333336
    %v1133 = vmul.f32 %v540, %v1114
    %v1134 = vmul.f32 %v545, %v1114
    %v1135 = vmul.f32 %v550, %v1114
    %v1136 = vmul.f32 %v555, %v1114
    %v1137 = vmul.f32 %v574, %v1132
    %v1138 = vmul.f32 %v579, %v1132
    %v1139 = vmul.f32 %v584, %v1132
    %v1140 = vmul.f32 %v589, %v1132
    %v1141 = vadd.f32 %v1133, %v1137
    %v1142 = vadd.f32 %v1134, %v1138
    %v1143 = vadd.f32 %v1135, %v1139
    %v1144 = vadd.f32 %v1136, %v1140
    %v1145 = vadd.f32 %v1141, 1e-05
    %v1146 = vadd.f32 %v1142, 1e-05
    %v1147 = vadd.f32 %v1143, 1e-05
    %v1148 = vadd.f32 %v1144, 1e-05
    %v1149 = vrsqrt.pop %v1145
    %v1150 = vrsqrt.pop %v1146
    %v1151 = vrsqrt.pop %v1147
    %v1152 = vrsqrt.pop %v1148
    %v1153 = vmul.f32 %v1089, %v1149
    %v1154 = vmul.f32 %v1090, %v1150
    %v1155 = vmul.f32 %v1091, %v1151
    %v1156 = vmul.f32 %v1092, %v1152
    %v1157 = vld [vmem:[%s37] sm:$0x1]
    %v1159 = vlaneseq
    %v1160 = vshrl.u32 %v1159, 7
    %v1161 = vsub.s32 0, %v1160
    %v1162 = vrot.slane %v1157, %v1161
    %v1164 = vmul.f32 %v1153, %v1162
    %v1165 = vmul.f32 %v1154, %v1162
    %v1166 = vmul.f32 %v1155, %v1162
    %v1167 = vmul.f32 %v1156, %v1162
    %v1168 = vld [vmem:[%s39] sm:$0x1]
    %v1170 = vlaneseq
    %v1171 = vshrl.u32 %v1170, 7
    %v1172 = vsub.s32 0, %v1171
    %v1173 = vrot.slane %v1168, %v1172
    %v1175 = vadd.f32 %v1164, %v1173
    %v1176 = vadd.f32 %v1165, %v1173
    %v1177 = vadd.f32 %v1166, %v1173
    %v1178 = vadd.f32 %v1167, %v1173
    %v1179 = vmul.f32 %v1175, %v702
    %v1180 = vmul.f32 %v1176, %v707
    %v1181 = vmul.f32 %v1177, %v712
    %v1182 = vmul.f32 %v1178, %v717
    %v1183 = vmax.f32 %v1179, 0.0
    %v1184 = vmax.f32 %v1180, 0.0
    %v1185 = vmax.f32 %v1181, 0.0
    %v1186 = vmax.f32 %v1182, 0.0
    %1187 = vmatprep.subr.mxu0 0.0
    %1188 = vmatpush1.msra.mxu0 %v1183
    %1189 = vmatprep.subr.mxu0 0.0
    %1190 = vmatpush1.msra.mxu0 %v1184
    %1191 = vmatprep.subr.mxu0 0.0
    %1192 = vmatpush1.msra.mxu0 %v1185
    %1193 = vmatprep.subr.mxu0 0.0
    %1194 = vmatpush1.msra.mxu0 %v1186
    %1195 = vmatprep.subr.mxu0 0.0
    %1196 = vmatpush1.msra.mxu0 0.0
    %1197 = vmatprep.subr.mxu0 0.0
    %1198 = vmatpush1.msra.mxu0 0.0
    %1199 = vmatprep.subr.mxu0 0.0
    %1200 = vmatpush1.msra.mxu0 0.0
    %1201 = vmatprep.subr.mxu0 0.0
    %1202 = vmatpush1.msra.mxu0 0.0
    %1203 = vmatprep.subr.mxu0 0.0
    %1204 = vmatpush1.msra.mxu0 0.0
    %1205 = vmatprep.subr.mxu0 0.0
    %1206 = vmatpush1.msra.mxu0 0.0
    %1207 = vmatprep.subr.mxu0 0.0
    %1208 = vmatpush1.msra.mxu0 0.0
    %1209 = vmatprep.subr.mxu0 0.0
    %1210 = vmatpush1.msra.mxu0 0.0
    %1211 = vmatprep.subr.mxu0 0.0
    %1212 = vmatpush1.msra.mxu0 0.0
    %1213 = vmatprep.subr.mxu0 0.0
    %1214 = vmatpush1.msra.mxu0 0.0
    %1215 = vmatprep.subr.mxu0 0.0
    %1216 = vmatpush1.msra.mxu0 0.0
    %1217 = vmatprep.subr.mxu0 0.0
    %1218 = vmatpush1.msra.mxu0 0.0
    %1219 = vmatprep.subr.mxu0 0.0
    %1220 = vmatpush1.msra.mxu0 0.0
    %1221 = vmatprep.subr.mxu0 0.0
    %1222 = vmatpush1.msra.mxu0 0.0
    %1223 = vmatprep.subr.mxu0 0.0
    %1224 = vmatpush1.msra.mxu0 0.0
    %1225 = vmatprep.subr.mxu0 0.0
    %1226 = vmatpush1.msra.mxu0 0.0
    %1227 = vmatprep.subr.mxu0 0.0
    %1228 = vmatpush1.msra.mxu0 0.0
    %1229 = vmatprep.subr.mxu0 0.0
    %1230 = vmatpush1.msra.mxu0 0.0
    %1231 = vmatprep.subr.mxu0 0.0
    %1232 = vmatpush1.msra.mxu0 0.0
    %1233 = vmatprep.subr.mxu0 0.0
    %1234 = vmatpush1.msra.mxu0 0.0
    %1235 = vmatprep.subr.mxu0 0.0
    %1236 = vmatpush1.msra.mxu0 0.0
    %1237 = vmatprep.subr.mxu0 0.0
    %1238 = vmatpush1.msra.mxu0 0.0
    %1239 = vmatprep.subr.mxu0 0.0
    %1240 = vmatpush1.msra.mxu0 0.0
    %1241 = vmatprep.subr.mxu0 0.0
    %1242 = vmatpush1.msra.mxu0 0.0
    %1243 = vmatprep.subr.mxu0 0.0
    %1244 = vmatpush1.msra.mxu0 0.0
    %1245 = vmatprep.subr.mxu0 0.0
    %1246 = vmatpush1.msra.mxu0 0.0
    %1247 = vmatprep.subr.mxu0 0.0
    %1248 = vmatpush1.msra.mxu0 0.0
    %1249 = vmatprep.subr.mxu0 0.0
    %1250 = vmatpush1.msra.mxu0 0.0
    %1251 = vmatprep.mubr.f32.mxu0 0.0
    %1252 = vmatmul.mubr.f32.gmra.mrb[0].mxu0 %v219
    %v1253 = vpop.f32.mrb[0].mxu0
    %v1254 = vadd.f32 0.0, %v1253
    %v1255 = vpop.f32.mrb[0].mxu0
    %1256 = vmatprep.mubr.f32.mxu0 0.0
    %1257 = vmatmul.mubr.f32.gmra.mrb[0].mxu0 %v222
    %v1258 = vpop.f32.mrb[0].mxu0
    %v1259 = vadd.f32 0.0, %v1258
    %v1260 = vpop.f32.mrb[0].mxu0
    %1261 = vmatprep.mubr.f32.mxu0 0.0
    %1262 = vmatmul.mubr.f32.gmra.mrb[0].mxu0 %v225
    %v1263 = vpop.f32.mrb[0].mxu0
    %v1264 = vadd.f32 0.0, %v1263
    %v1265 = vpop.f32.mrb[0].mxu0
    %1266 = vmatprep.mubr.f32.mxu0 0.0
    %1267 = vmatmul.mubr.f32.gmra.mrb[0].mxu0 %v228
    %v1268 = vpop.f32.mrb[0].mxu0
    %v1269 = vadd.f32 0.0, %v1268
    %v1270 = vpop.f32.mrb[0].mxu0
    %1271 = vdwg.mxu0
    %v1272 = vadd.f32 %v1183, %v1254
    %v1273 = vadd.f32 %v1184, %v1259
    %v1274 = vadd.f32 %v1185, %v1264
    %v1275 = vadd.f32 %v1186, %v1269
    %v1276 = vld [vmem:[%s41] sm:$0xff]
    %v1277 = vld [vmem:[%s41 + $0x8] sm:$0xff]
    %v1278 = vld [vmem:[%s41 + $0x10] sm:$0xff]
    %v1279 = vld [vmem:[%s41 + $0x18] sm:$0xff]
    %v1280 = vld [vmem:[%s41 + $0x20] sm:$0xff]
    %v1281 = vld [vmem:[%s41 + $0x28] sm:$0xff]
    %v1282 = vld [vmem:[%s41 + $0x30] sm:$0xff]
    %v1283 = vld [vmem:[%s41 + $0x38] sm:$0xff]
    %v1284 = vld [vmem:[%s43] sm:$0x1]
    %v1286 = vlaneseq
    %v1287 = vshrl.u32 %v1286, 7
    %v1288 = vsub.s32 0, %v1287
    %v1289 = vrot.slane %v1284, %v1288
    %v1292 = vsel %vm943, %v1272, 0
    %v1295 = vsel %vm943, %v1273, 0
    %v1298 = vsel %vm943, %v1274, 0
    %v1301 = vsel %vm943, %v1275, 0
    %1303 = vmatprep.subr.mxu0 0.0
    %1304 = vmatpush1.msra.mxu0 %v1276
    %1305 = vmatprep.subr.mxu0 0.0
    %1306 = vmatpush1.msra.mxu0 %v1277
    %1307 = vmatprep.subr.mxu0 0.0
    %1308 = vmatpush1.msra.mxu0 %v1278
    %1309 = vmatprep.subr.mxu0 0.0
    %1310 = vmatpush1.msra.mxu0 %v1279
    %1311 = vmatprep.subr.mxu0 0.0
    %1312 = vmatpush1.msra.mxu0 %v1280
    %1313 = vmatprep.subr.mxu0 0.0
    %1314 = vmatpush1.msra.mxu0 %v1281
    %1315 = vmatprep.subr.mxu0 0.0
    %1316 = vmatpush1.msra.mxu0 %v1282
    %1317 = vmatprep.subr.mxu0 0.0
    %1318 = vmatpush1.msra.mxu0 %v1283
    %1319 = vmatprep.subr.mxu0 0.0
    %1320 = vmatpush1.msra.mxu0 0.0
    %1321 = vmatprep.subr.mxu0 0.0
    %1322 = vmatpush1.msra.mxu0 0.0
    %1323 = vmatprep.subr.mxu0 0.0
    %1324 = vmatpush1.msra.mxu0 0.0
    %1325 = vmatprep.subr.mxu0 0.0
    %1326 = vmatpush1.msra.mxu0 0.0
    %1327 = vmatprep.subr.mxu0 0.0
    %1328 = vmatpush1.msra.mxu0 0.0
    %1329 = vmatprep.subr.mxu0 0.0
    %1330 = vmatpush1.msra.mxu0 0.0
    %1331 = vmatprep.subr.mxu0 0.0
    %1332 = vmatpush1.msra.mxu0 0.0
    %1333 = vmatprep.subr.mxu0 0.0
    %1334 = vmatpush1.msra.mxu0 0.0
    %1335 = vmatprep.subr.mxu0 0.0
    %1336 = vmatpush1.msra.mxu0 0.0
    %1337 = vmatprep.subr.mxu0 0.0
    %1338 = vmatpush1.msra.mxu0 0.0
    %1339 = vmatprep.subr.mxu0 0.0
    %1340 = vmatpush1.msra.mxu0 0.0
    %1341 = vmatprep.subr.mxu0 0.0
    %1342 = vmatpush1.msra.mxu0 0.0
    %1343 = vmatprep.subr.mxu0 0.0
    %1344 = vmatpush1.msra.mxu0 0.0
    %1345 = vmatprep.subr.mxu0 0.0
    %1346 = vmatpush1.msra.mxu0 0.0
    %1347 = vmatprep.subr.mxu0 0.0
    %1348 = vmatpush1.msra.mxu0 0.0
    %1349 = vmatprep.subr.mxu0 0.0
    %1350 = vmatpush1.msra.mxu0 0.0
    %1351 = vmatprep.subr.mxu0 0.0
    %1352 = vmatpush1.msra.mxu0 0.0
    %1353 = vmatprep.subr.mxu0 0.0
    %1354 = vmatpush1.msra.mxu0 0.0
    %1355 = vmatprep.subr.mxu0 0.0
    %1356 = vmatpush1.msra.mxu0 0.0
    %1357 = vmatprep.subr.mxu0 0.0
    %1358 = vmatpush1.msra.mxu0 0.0
    %1359 = vmatprep.subr.mxu0 0.0
    %1360 = vmatpush1.msra.mxu0 0.0
    %1361 = vmatprep.subr.mxu0 0.0
    %1362 = vmatpush1.msra.mxu0 0.0
    %1363 = vmatprep.subr.mxu0 0.0
    %1364 = vmatpush1.msra.mxu0 0.0
    %1365 = vmatprep.subr.mxu0 0.0
    %1366 = vmatpush1.msra.mxu0 0.0
    %1367 = vmatprep.mubr.f32.mxu0 0.0
    %1368 = vmatmul.mubr.f32.gmra.mrb[0].mxu0 %v1292
    %v1369 = vpop.f32.mrb[0].mxu0
    %v1370 = vadd.f32 %v1289, %v1369
    %v1371 = vpop.f32.mrb[0].mxu0
    %1372 = vmatprep.mubr.f32.mxu0 0.0
    %1373 = vmatmul.mubr.f32.gmra.mrb[0].mxu0 %v1295
    %v1374 = vpop.f32.mrb[0].mxu0
    %v1375 = vadd.f32 %v1289, %v1374
    %v1376 = vpop.f32.mrb[0].mxu0
    %1377 = vmatprep.mubr.f32.mxu0 0.0
    %1378 = vmatmul.mubr.f32.gmra.mrb[0].mxu0 %v1298
    %v1379 = vpop.f32.mrb[0].mxu0
    %v1380 = vadd.f32 %v1289, %v1379
    %v1381 = vpop.f32.mrb[0].mxu0
    %1382 = vmatprep.mubr.f32.mxu0 0.0
    %1383 = vmatmul.mubr.f32.gmra.mrb[0].mxu0 %v1301
    %v1384 = vpop.f32.mrb[0].mxu0
    %v1385 = vadd.f32 %v1289, %v1384
    %v1386 = vpop.f32.mrb[0].mxu0
    %1387 = vdwg.mxu0
    %v1388 = vmax.f32 %v1370, 0.0
    %v1389 = vmax.f32 %v1375, 0.0
    %v1390 = vmax.f32 %v1380, 0.0
    %v1391 = vmax.f32 %v1385, 0.0
    %v1392 = vld [vmem:[%s45] sm:$0xff]
    %v1393 = vld [vmem:[%s45 + $0x8] sm:$0xff]
    %v1394 = vld [vmem:[%s45 + $0x10] sm:$0xff]
    %v1395 = vld [vmem:[%s45 + $0x18] sm:$0xff]
    %v1396 = vld [vmem:[%s47] sm:$0x1]
    %v1398 = vlaneseq
    %v1399 = vshrl.u32 %v1398, 7
    %v1400 = vsub.s32 0, %v1399
    %v1401 = vrot.slane %v1396, %v1400
    %v1404 = vsel %vm217, %v1388, 0
    %v1407 = vsel %vm217, %v1389, 0
    %v1410 = vsel %vm217, %v1390, 0
    %v1413 = vsel %vm217, %v1391, 0
    %1415 = vmatprep.subr.mxu0 0.0
    %1416 = vmatpush1.msra.mxu0 %v1392
    %1417 = vmatprep.subr.mxu0 0.0
    %1418 = vmatpush1.msra.mxu0 %v1393
    %1419 = vmatprep.subr.mxu0 0.0
    %1420 = vmatpush1.msra.mxu0 %v1394
    %1421 = vmatprep.subr.mxu0 0.0
    %1422 = vmatpush1.msra.mxu0 %v1395
    %1423 = vmatprep.subr.mxu0 0.0
    %1424 = vmatpush1.msra.mxu0 0.0
    %1425 = vmatprep.subr.mxu0 0.0
    %1426 = vmatpush1.msra.mxu0 0.0
    %1427 = vmatprep.subr.mxu0 0.0
    %1428 = vmatpush1.msra.mxu0 0.0
    %1429 = vmatprep.subr.mxu0 0.0
    %1430 = vmatpush1.msra.mxu0 0.0
    %1431 = vmatprep.subr.mxu0 0.0
    %1432 = vmatpush1.msra.mxu0 0.0
    %1433 = vmatprep.subr.mxu0 0.0
    %1434 = vmatpush1.msra.mxu0 0.0
    %1435 = vmatprep.subr.mxu0 0.0
    %1436 = vmatpush1.msra.mxu0 0.0
    %1437 = vmatprep.subr.mxu0 0.0
    %1438 = vmatpush1.msra.mxu0 0.0
    %1439 = vmatprep.subr.mxu0 0.0
    %1440 = vmatpush1.msra.mxu0 0.0
    %1441 = vmatprep.subr.mxu0 0.0
    %1442 = vmatpush1.msra.mxu0 0.0
    %1443 = vmatprep.subr.mxu0 0.0
    %1444 = vmatpush1.msra.mxu0 0.0
    %1445 = vmatprep.subr.mxu0 0.0
    %1446 = vmatpush1.msra.mxu0 0.0
    %1447 = vmatprep.subr.mxu0 0.0
    %1448 = vmatpush1.msra.mxu0 0.0
    %1449 = vmatprep.subr.mxu0 0.0
    %1450 = vmatpush1.msra.mxu0 0.0
    %1451 = vmatprep.subr.mxu0 0.0
    %1452 = vmatpush1.msra.mxu0 0.0
    %1453 = vmatprep.subr.mxu0 0.0
    %1454 = vmatpush1.msra.mxu0 0.0
    %1455 = vmatprep.subr.mxu0 0.0
    %1456 = vmatpush1.msra.mxu0 0.0
    %1457 = vmatprep.subr.mxu0 0.0
    %1458 = vmatpush1.msra.mxu0 0.0
    %1459 = vmatprep.subr.mxu0 0.0
    %1460 = vmatpush1.msra.mxu0 0.0
    %1461 = vmatprep.subr.mxu0 0.0
    %1462 = vmatpush1.msra.mxu0 0.0
    %1463 = vmatprep.subr.mxu0 0.0
    %1464 = vmatpush1.msra.mxu0 0.0
    %1465 = vmatprep.subr.mxu0 0.0
    %1466 = vmatpush1.msra.mxu0 0.0
    %1467 = vmatprep.subr.mxu0 0.0
    %1468 = vmatpush1.msra.mxu0 0.0
    %1469 = vmatprep.subr.mxu0 0.0
    %1470 = vmatpush1.msra.mxu0 0.0
    %1471 = vmatprep.subr.mxu0 0.0
    %1472 = vmatpush1.msra.mxu0 0.0
    %1473 = vmatprep.subr.mxu0 0.0
    %1474 = vmatpush1.msra.mxu0 0.0
    %1475 = vmatprep.subr.mxu0 0.0
    %1476 = vmatpush1.msra.mxu0 0.0
    %1477 = vmatprep.subr.mxu0 0.0
    %1478 = vmatpush1.msra.mxu0 0.0
    %1479 = vmatprep.mubr.f32.mxu0 0.0
    %1480 = vmatmul.mubr.f32.gmra.mrb[0].mxu0 %v1404
    %v1481 = vpop.f32.mrb[0].mxu0
    %v1482 = vadd.f32 %v1401, %v1481
    %v1483 = vpop.f32.mrb[0].mxu0
    %1484 = vmatprep.mubr.f32.mxu0 0.0
    %1485 = vmatmul.mubr.f32.gmra.mrb[0].mxu0 %v1407
    %v1486 = vpop.f32.mrb[0].mxu0
    %v1487 = vadd.f32 %v1401, %v1486
    %v1488 = vpop.f32.mrb[0].mxu0
    %1489 = vmatprep.mubr.f32.mxu0 0.0
    %1490 = vmatmul.mubr.f32.gmra.mrb[0].mxu0 %v1410
    %v1491 = vpop.f32.mrb[0].mxu0
    %v1492 = vadd.f32 %v1401, %v1491
    %v1493 = vpop.f32.mrb[0].mxu0
    %1494 = vmatprep.mubr.f32.mxu0 0.0
    %1495 = vmatmul.mubr.f32.gmra.mrb[0].mxu0 %v1413
    %v1496 = vpop.f32.mrb[0].mxu0
    %v1497 = vadd.f32 %v1401, %v1496
    %v1498 = vpop.f32.mrb[0].mxu0
    %1499 = vdwg.mxu0
    %v1500 = vmul.f32 %v1482, %v540
    %v1501 = vmul.f32 %v1487, %v545
    %v1502 = vmul.f32 %v1492, %v550
    %v1503 = vmul.f32 %v1497, %v555
    %v1504 = vsel %vm217, %v1500, 0.0
    %v1505 = vsel %vm217, %v1501, 0.0
    %v1506 = vadd.f32 %v1504, %v1505
    %v1507 = vsel %vm217, %v1502, 0.0
    %v1508 = vadd.f32 %v1506, %v1507
    %v1509 = vsel %vm217, %v1503, 0.0
    %v1510 = vadd.f32 %v1508, %v1509
    %v1511 = vrot.slane %v1510, 4
    %v1512 = vadd.f32 %v1510, %v1511
    %v1513 = vrot.slane %v1512, 2
    %v1514 = vadd.f32 %v1512, %v1513
    %v1515 = vrot.slane %v1514, 1
    %v1516 = vadd.f32 %v1514, %v1515
    %v1517 = vmul.f32 %v1516, 0.1
    %v1518 = vmul.f32 %v1482, %v574
    %v1519 = vmul.f32 %v1487, %v579
    %v1520 = vmul.f32 %v1492, %v584
    %v1521 = vmul.f32 %v1497, %v589
    %v1522 = vsel %vm217, %v1518, 0.0
    %v1523 = vsel %vm217, %v1519, 0.0
    %v1524 = vadd.f32 %v1522, %v1523
    %v1525 = vsel %vm217, %v1520, 0.0
    %v1526 = vadd.f32 %v1524, %v1525
    %v1527 = vsel %vm217, %v1521, 0.0
    %v1528 = vadd.f32 %v1526, %v1527
    %v1529 = vrot.slane %v1528, 4
    %v1530 = vadd.f32 %v1528, %v1529
    %v1531 = vrot.slane %v1530, 2
    %v1532 = vadd.f32 %v1530, %v1531
    %v1533 = vrot.slane %v1532, 1
    %v1534 = vadd.f32 %v1532, %v1533
    %v1535 = vmul.f32 %v1534, 0.083333336
    %v1536 = vmul.f32 %v540, %v1517
    %v1537 = vmul.f32 %v545, %v1517
    %v1538 = vmul.f32 %v550, %v1517
    %v1539 = vmul.f32 %v555, %v1517
    %v1540 = vmul.f32 %v574, %v1535
    %v1541 = vmul.f32 %v579, %v1535
    %v1542 = vmul.f32 %v584, %v1535
    %v1543 = vmul.f32 %v589, %v1535
    %v1544 = vadd.f32 %v1536, %v1540
    %v1545 = vadd.f32 %v1537, %v1541
    %v1546 = vadd.f32 %v1538, %v1542
    %v1547 = vadd.f32 %v1539, %v1543
    %v1548 = vsub.f32 %v1482, %v1544
    %v1549 = vsub.f32 %v1487, %v1545
    %v1550 = vsub.f32 %v1492, %v1546
    %v1551 = vsub.f32 %v1497, %v1547
    %v1552 = vmul.f32 %v1548, %v1548
    %v1553 = vmul.f32 %v1549, %v1549
    %v1554 = vmul.f32 %v1550, %v1550
    %v1555 = vmul.f32 %v1551, %v1551
    %v1556 = vmul.f32 %v1552, %v540
    %v1557 = vmul.f32 %v1553, %v545
    %v1558 = vmul.f32 %v1554, %v550
    %v1559 = vmul.f32 %v1555, %v555
    %v1560 = vsel %vm217, %v1556, 0.0
    %v1561 = vsel %vm217, %v1557, 0.0
    %v1562 = vadd.f32 %v1560, %v1561
    %v1563 = vsel %vm217, %v1558, 0.0
    %v1564 = vadd.f32 %v1562, %v1563
    %v1565 = vsel %vm217, %v1559, 0.0
    %v1566 = vadd.f32 %v1564, %v1565
    %v1567 = vrot.slane %v1566, 4
    %v1568 = vadd.f32 %v1566, %v1567
    %v1569 = vrot.slane %v1568, 2
    %v1570 = vadd.f32 %v1568, %v1569
    %v1571 = vrot.slane %v1570, 1
    %v1572 = vadd.f32 %v1570, %v1571
    %v1573 = vmul.f32 %v1572, 0.1
    %v1574 = vmul.f32 %v1552, %v574
    %v1575 = vmul.f32 %v1553, %v579
    %v1576 = vmul.f32 %v1554, %v584
    %v1577 = vmul.f32 %v1555, %v589
    %v1578 = vsel %vm217, %v1574, 0.0
    %v1579 = vsel %vm217, %v1575, 0.0
    %v1580 = vadd.f32 %v1578, %v1579
    %v1581 = vsel %vm217, %v1576, 0.0
    %v1582 = vadd.f32 %v1580, %v1581
    %v1583 = vsel %vm217, %v1577, 0.0
    %v1584 = vadd.f32 %v1582, %v1583
    %v1585 = vrot.slane %v1584, 4
    %v1586 = vadd.f32 %v1584, %v1585
    %v1587 = vrot.slane %v1586, 2
    %v1588 = vadd.f32 %v1586, %v1587
    %v1589 = vrot.slane %v1588, 1
    %v1590 = vadd.f32 %v1588, %v1589
    %v1591 = vmul.f32 %v1590, 0.083333336
    %v1592 = vmul.f32 %v540, %v1573
    %v1593 = vmul.f32 %v545, %v1573
    %v1594 = vmul.f32 %v550, %v1573
    %v1595 = vmul.f32 %v555, %v1573
    %v1596 = vmul.f32 %v574, %v1591
    %v1597 = vmul.f32 %v579, %v1591
    %v1598 = vmul.f32 %v584, %v1591
    %v1599 = vmul.f32 %v589, %v1591
    %v1600 = vadd.f32 %v1592, %v1596
    %v1601 = vadd.f32 %v1593, %v1597
    %v1602 = vadd.f32 %v1594, %v1598
    %v1603 = vadd.f32 %v1595, %v1599
    %v1604 = vadd.f32 %v1600, 1e-05
    %v1605 = vadd.f32 %v1601, 1e-05
    %v1606 = vadd.f32 %v1602, 1e-05
    %v1607 = vadd.f32 %v1603, 1e-05
    %v1608 = vrsqrt.pop %v1604
    %v1609 = vrsqrt.pop %v1605
    %v1610 = vrsqrt.pop %v1606
    %v1611 = vrsqrt.pop %v1607
    %v1612 = vmul.f32 %v1548, %v1608
    %v1613 = vmul.f32 %v1549, %v1609
    %v1614 = vmul.f32 %v1550, %v1610
    %v1615 = vmul.f32 %v1551, %v1611
    %v1616 = vld [vmem:[%s49] sm:$0x1]
    %v1618 = vlaneseq
    %v1619 = vshrl.u32 %v1618, 7
    %v1620 = vsub.s32 0, %v1619
    %v1621 = vrot.slane %v1616, %v1620
    %v1623 = vmul.f32 %v1612, %v1621
    %v1624 = vmul.f32 %v1613, %v1621
    %v1625 = vmul.f32 %v1614, %v1621
    %v1626 = vmul.f32 %v1615, %v1621
    %v1627 = vld [vmem:[%s51] sm:$0x1]
    %v1629 = vlaneseq
    %v1630 = vshrl.u32 %v1629, 7
    %v1631 = vsub.s32 0, %v1630
    %v1632 = vrot.slane %v1627, %v1631
    %v1634 = vadd.f32 %v1623, %v1632
    %v1635 = vadd.f32 %v1624, %v1632
    %v1636 = vadd.f32 %v1625, %v1632
    %v1637 = vadd.f32 %v1626, %v1632
    %v1638 = vmul.f32 %v1634, %v702
    %v1639 = vmul.f32 %v1635, %v707
    %v1640 = vmul.f32 %v1636, %v712
    %v1641 = vmul.f32 %v1637, %v717
    %v1642 = vld [vmem:[%s53] sm:$0xff]
    %v1643 = vld [vmem:[%s53 + $0x8] sm:$0xff]
    %v1644 = vld [vmem:[%s53 + $0x10] sm:$0xff]
    %v1645 = vld [vmem:[%s53 + $0x18] sm:$0xff]
    %v1647 = vsel %vm217, %v1638, 0
    %v1650 = vsel %vm217, %v1639, 0
    %v1653 = vsel %vm217, %v1640, 0
    %v1656 = vsel %vm217, %v1641, 0
    %1658 = vmatprep.subr.mxu0 0.0
    %1659 = vmatpush1.msra.mxu0 %v1642
    %1660 = vmatprep.subr.mxu0 0.0
    %1661 = vmatpush1.msra.mxu0 %v1643
    %1662 = vmatprep.subr.mxu0 0.0
    %1663 = vmatpush1.msra.mxu0 %v1644
    %1664 = vmatprep.subr.mxu0 0.0
    %1665 = vmatpush1.msra.mxu0 %v1645
    %1666 = vmatprep.subr.mxu0 0.0
    %1667 = vmatpush1.msra.mxu0 0.0
    %1668 = vmatprep.subr.mxu0 0.0
    %1669 = vmatpush1.msra.mxu0 0.0
    %1670 = vmatprep.subr.mxu0 0.0
    %1671 = vmatpush1.msra.mxu0 0.0
    %1672 = vmatprep.subr.mxu0 0.0
    %1673 = vmatpush1.msra.mxu0 0.0
    %1674 = vmatprep.subr.mxu0 0.0
    %1675 = vmatpush1.msra.mxu0 0.0
    %1676 = vmatprep.subr.mxu0 0.0
    %1677 = vmatpush1.msra.mxu0 0.0
    %1678 = vmatprep.subr.mxu0 0.0
    %1679 = vmatpush1.msra.mxu0 0.0
    %1680 = vmatprep.subr.mxu0 0.0
    %1681 = vmatpush1.msra.mxu0 0.0
    %1682 = vmatprep.subr.mxu0 0.0
    %1683 = vmatpush1.msra.mxu0 0.0
    %1684 = vmatprep.subr.mxu0 0.0
    %1685 = vmatpush1.msra.mxu0 0.0
    %1686 = vmatprep.subr.mxu0 0.0
    %1687 = vmatpush1.msra.mxu0 0.0
    %1688 = vmatprep.subr.mxu0 0.0
    %1689 = vmatpush1.msra.mxu0 0.0
    %1690 = vmatprep.subr.mxu0 0.0
    %1691 = vmatpush1.msra.mxu0 0.0
    %1692 = vmatprep.subr.mxu0 0.0
    %1693 = vmatpush1.msra.mxu0 0.0
    %1694 = vmatprep.subr.mxu0 0.0
    %1695 = vmatpush1.msra.mxu0 0.0
    %1696 = vmatprep.subr.mxu0 0.0
    %1697 = vmatpush1.msra.mxu0 0.0
    %1698 = vmatprep.subr.mxu0 0.0
    %1699 = vmatpush1.msra.mxu0 0.0
    %1700 = vmatprep.subr.mxu0 0.0
    %1701 = vmatpush1.msra.mxu0 0.0
    %1702 = vmatprep.subr.mxu0 0.0
    %1703 = vmatpush1.msra.mxu0 0.0
    %1704 = vmatprep.subr.mxu0 0.0
    %1705 = vmatpush1.msra.mxu0 0.0
    %1706 = vmatprep.subr.mxu0 0.0
    %1707 = vmatpush1.msra.mxu0 0.0
    %1708 = vmatprep.subr.mxu0 0.0
    %1709 = vmatpush1.msra.mxu0 0.0
    %1710 = vmatprep.subr.mxu0 0.0
    %1711 = vmatpush1.msra.mxu0 0.0
    %1712 = vmatprep.subr.mxu0 0.0
    %1713 = vmatpush1.msra.mxu0 0.0
    %1714 = vmatprep.subr.mxu0 0.0
    %1715 = vmatpush1.msra.mxu0 0.0
    %1716 = vmatprep.subr.mxu0 0.0
    %1717 = vmatpush1.msra.mxu0 0.0
    %1718 = vmatprep.subr.mxu0 0.0
    %1719 = vmatpush1.msra.mxu0 0.0
    %1720 = vmatprep.subr.mxu0 0.0
    %1721 = vmatpush1.msra.mxu0 0.0
    %1722 = vmatprep.mubr.f32.mxu0 0.0
    %1723 = vmatmul.mubr.f32.gmra.mrb[0].mxu0 %v1647
    %v1724 = vpop.f32.mrb[0].mxu0
    %v1725 = vadd.f32 0.0, %v1724
    %v1726 = vpop.f32.mrb[0].mxu0
    %1727 = vmatprep.mubr.f32.mxu0 0.0
    %1728 = vmatmul.mubr.f32.gmra.mrb[0].mxu0 %v1650
    %v1729 = vpop.f32.mrb[0].mxu0
    %v1730 = vadd.f32 0.0, %v1729
    %v1731 = vpop.f32.mrb[0].mxu0
    %1732 = vmatprep.mubr.f32.mxu0 0.0
    %1733 = vmatmul.mubr.f32.gmra.mrb[0].mxu0 %v1653
    %v1734 = vpop.f32.mrb[0].mxu0
    %v1735 = vadd.f32 0.0, %v1734
    %v1736 = vpop.f32.mrb[0].mxu0
    %1737 = vmatprep.mubr.f32.mxu0 0.0
    %1738 = vmatmul.mubr.f32.gmra.mrb[0].mxu0 %v1656
    %v1739 = vpop.f32.mrb[0].mxu0
    %v1740 = vadd.f32 0.0, %v1739
    %v1741 = vpop.f32.mrb[0].mxu0
    %1742 = vdwg.mxu0
    %v1743 = vld [vmem:[%s9] sm:$0xff]
    %v1744 = vld [vmem:[%s9 + $0x8] sm:$0xff]
    %v1745 = vld [vmem:[%s9 + $0x10] sm:$0xff]
    %v1746 = vld [vmem:[%s9 + $0x18] sm:$0xff]
    %v1747 = vld [vmem:[%s9 + $0x20] sm:$0xff]
    %v1748 = vld [vmem:[%s9 + $0x28] sm:$0xff]
    %v1749 = vld [vmem:[%s9 + $0x30] sm:$0xff]
    %v1750 = vld [vmem:[%s9 + $0x38] sm:$0xff]
    %v1751 = vld [vmem:[%s9 + $0x40] sm:$0xff]
    %v1752 = vld [vmem:[%s9 + $0x48] sm:$0xff]
    %v1753 = vld [vmem:[%s9 + $0x50] sm:$0xff]
    %v1754 = vld [vmem:[%s9 + $0x58] sm:$0xff]
    %v1755 = vld [vmem:[%s9 + $0x60] sm:$0xff]
    %v1756 = vld [vmem:[%s9 + $0x68] sm:$0xff]
    %v1757 = vld [vmem:[%s9 + $0x70] sm:$0xff]
    %v1758 = vld [vmem:[%s9 + $0x78] sm:$0xff]
    %v1759 = vld [vmem:[%s9 + $0x80] sm:$0xff]
    %v1760 = vld [vmem:[%s9 + $0x88] sm:$0xff]
    %v1761 = vld [vmem:[%s9 + $0x90] sm:$0xff]
    %v1762 = vld [vmem:[%s9 + $0x98] sm:$0xff]
    %v1763 = vld [vmem:[%s9 + $0xa0] sm:$0xff]
    %v1764 = vld [vmem:[%s9 + $0xa8] sm:$0xff]
    %v1765 = vld [vmem:[%s9 + $0xb0] sm:$0xff]
    %v1766 = vld [vmem:[%s9 + $0xb8] sm:$0xff]
    %v1767 = vld [vmem:[%s9 + $0xc0] sm:$0xff]
    %v1768 = vld [vmem:[%s9 + $0xc8] sm:$0xff]
    %v1769 = vld [vmem:[%s9 + $0xd0] sm:$0xff]
    %v1770 = vld [vmem:[%s9 + $0xd8] sm:$0xff]
    %v1771 = vld [vmem:[%s9 + $0xe0] sm:$0xff]
    %v1772 = vld [vmem:[%s9 + $0xe8] sm:$0xff]
    %v1773 = vld [vmem:[%s9 + $0xf0] sm:$0xff]
    %v1774 = vld [vmem:[%s9 + $0xf8] sm:$0xff]
    %v1776 = vsel %vm217, %v1743, 0
    %v1779 = vsel %vm217, %v1744, 0
    %v1782 = vsel %vm217, %v1745, 0
    %v1785 = vsel %vm217, %v1746, 0
    %v1788 = vsel %vm217, %v1747, 0
    %v1791 = vsel %vm217, %v1748, 0
    %v1794 = vsel %vm217, %v1749, 0
    %v1797 = vsel %vm217, %v1750, 0
    %v1800 = vsel %vm217, %v1751, 0
    %v1803 = vsel %vm217, %v1752, 0
    %v1806 = vsel %vm217, %v1753, 0
    %v1809 = vsel %vm217, %v1754, 0
    %v1812 = vsel %vm217, %v1755, 0
    %v1815 = vsel %vm217, %v1756, 0
    %v1818 = vsel %vm217, %v1757, 0
    %v1821 = vsel %vm217, %v1758, 0
    %v1824 = vsel %vm217, %v1759, 0
    %v1827 = vsel %vm217, %v1760, 0
    %v1830 = vsel %vm217, %v1761, 0
    %v1833 = vsel %vm217, %v1762, 0
    %v1836 = vsel %vm217, %v1763, 0
    %v1839 = vsel %vm217, %v1764, 0
    %v1842 = vsel %vm217, %v1765, 0
    %v1845 = vsel %vm217, %v1766, 0
    %v1848 = vsel %vm217, %v1767, 0
    %v1851 = vsel %vm217, %v1768, 0
    %v1854 = vsel %vm217, %v1769, 0
    %v1857 = vsel %vm217, %v1770, 0
    %v1860 = vsel %vm217, %v1771, 0
    %v1863 = vsel %vm217, %v1772, 0
    %v1866 = vsel %vm217, %v1773, 0
    %v1869 = vsel %vm217, %v1774, 0
    %1871 = vmatprep.subr.mxu0 0.0
    %1872 = vmatpush1.msra.mxu0 %v1725
    %1873 = vmatprep.subr.mxu0 0.0
    %1874 = vmatpush1.msra.mxu0 %v1730
    %1875 = vmatprep.subr.mxu0 0.0
    %1876 = vmatpush1.msra.mxu0 %v1735
    %1877 = vmatprep.subr.mxu0 0.0
    %1878 = vmatpush1.msra.mxu0 %v1740
    %1879 = vmatprep.subr.mxu0 0.0
    %1880 = vmatpush1.msra.mxu0 0.0
    %1881 = vmatprep.subr.mxu0 0.0
    %1882 = vmatpush1.msra.mxu0 0.0
    %1883 = vmatprep.subr.mxu0 0.0
    %1884 = vmatpush1.msra.mxu0 0.0
    %1885 = vmatprep.subr.mxu0 0.0
    %1886 = vmatpush1.msra.mxu0 0.0
    %1887 = vmatprep.subr.mxu0 0.0
    %1888 = vmatpush1.msra.mxu0 0.0
    %1889 = vmatprep.subr.mxu0 0.0
    %1890 = vmatpush1.msra.mxu0 0.0
    %1891 = vmatprep.subr.mxu0 0.0
    %1892 = vmatpush1.msra.mxu0 0.0
    %1893 = vmatprep.subr.mxu0 0.0
    %1894 = vmatpush1.msra.mxu0 0.0
    %1895 = vmatprep.subr.mxu0 0.0
    %1896 = vmatpush1.msra.mxu0 0.0
    %1897 = vmatprep.subr.mxu0 0.0
    %1898 = vmatpush1.msra.mxu0 0.0
    %1899 = vmatprep.subr.mxu0 0.0
    %1900 = vmatpush1.msra.mxu0 0.0
    %1901 = vmatprep.subr.mxu0 0.0
    %1902 = vmatpush1.msra.mxu0 0.0
    %1903 = vmatprep.subr.mxu0 0.0
    %1904 = vmatpush1.msra.mxu0 0.0
    %1905 = vmatprep.subr.mxu0 0.0
    %1906 = vmatpush1.msra.mxu0 0.0
    %1907 = vmatprep.subr.mxu0 0.0
    %1908 = vmatpush1.msra.mxu0 0.0
    %1909 = vmatprep.subr.mxu0 0.0
    %1910 = vmatpush1.msra.mxu0 0.0
    %1911 = vmatprep.subr.mxu0 0.0
    %1912 = vmatpush1.msra.mxu0 0.0
    %1913 = vmatprep.subr.mxu0 0.0
    %1914 = vmatpush1.msra.mxu0 0.0
    %1915 = vmatprep.subr.mxu0 0.0
    %1916 = vmatpush1.msra.mxu0 0.0
    %1917 = vmatprep.subr.mxu0 0.0
    %1918 = vmatpush1.msra.mxu0 0.0
    %1919 = vmatprep.subr.mxu0 0.0
    %1920 = vmatpush1.msra.mxu0 0.0
    %1921 = vmatprep.subr.mxu0 0.0
    %1922 = vmatpush1.msra.mxu0 0.0
    %1923 = vmatprep.subr.mxu0 0.0
    %1924 = vmatpush1.msra.mxu0 0.0
    %1925 = vmatprep.subr.mxu0 0.0
    %1926 = vmatpush1.msra.mxu0 0.0
    %1927 = vmatprep.subr.mxu0 0.0
    %1928 = vmatpush1.msra.mxu0 0.0
    %1929 = vmatprep.subr.mxu0 0.0
    %1930 = vmatpush1.msra.mxu0 0.0
    %1931 = vmatprep.subr.mxu0 0.0
    %1932 = vmatpush1.msra.mxu0 0.0
    %1933 = vmatprep.subr.mxu0 0.0
    %1934 = vmatpush1.msra.mxu0 0.0
    %1935 = vmatprep.mubr.f32.mxu0 0.0
    %1936 = vmatmul.mubr.f32.gmra.mrb[0].mxu0 %v1776
    %v1937 = vpop.f32.mrb[0].mxu0
    %v1938 = vadd.f32 0.0, %v1937
    %v1939 = vpop.f32.mrb[0].mxu0
    %1940 = vmatprep.mubr.f32.mxu0 0.0
    %1941 = vmatmul.mubr.f32.gmra.mrb[0].mxu0 %v1779
    %v1942 = vpop.f32.mrb[0].mxu0
    %v1943 = vadd.f32 0.0, %v1942
    %v1944 = vpop.f32.mrb[0].mxu0
    %1945 = vmatprep.mubr.f32.mxu0 0.0
    %1946 = vmatmul.mubr.f32.gmra.mrb[0].mxu0 %v1782
    %v1947 = vpop.f32.mrb[0].mxu0
    %v1948 = vadd.f32 0.0, %v1947
    %v1949 = vpop.f32.mrb[0].mxu0
    %1950 = vmatprep.mubr.f32.mxu0 0.0
    %1951 = vmatmul.mubr.f32.gmra.mrb[0].mxu0 %v1785
    %v1952 = vpop.f32.mrb[0].mxu0
    %v1953 = vadd.f32 0.0, %v1952
    %v1954 = vpop.f32.mrb[0].mxu0
    %1955 = vmatprep.mubr.f32.mxu0 0.0
    %1956 = vmatmul.mubr.f32.gmra.mrb[0].mxu0 %v1788
    %v1957 = vpop.f32.mrb[0].mxu0
    %v1958 = vadd.f32 0.0, %v1957
    %v1959 = vpop.f32.mrb[0].mxu0
    %1960 = vmatprep.mubr.f32.mxu0 0.0
    %1961 = vmatmul.mubr.f32.gmra.mrb[0].mxu0 %v1791
    %v1962 = vpop.f32.mrb[0].mxu0
    %v1963 = vadd.f32 0.0, %v1962
    %v1964 = vpop.f32.mrb[0].mxu0
    %1965 = vmatprep.mubr.f32.mxu0 0.0
    %1966 = vmatmul.mubr.f32.gmra.mrb[0].mxu0 %v1794
    %v1967 = vpop.f32.mrb[0].mxu0
    %v1968 = vadd.f32 0.0, %v1967
    %v1969 = vpop.f32.mrb[0].mxu0
    %1970 = vmatprep.mubr.f32.mxu0 0.0
    %1971 = vmatmul.mubr.f32.gmra.mrb[0].mxu0 %v1797
    %v1972 = vpop.f32.mrb[0].mxu0
    %v1973 = vadd.f32 0.0, %v1972
    %v1974 = vpop.f32.mrb[0].mxu0
    %1975 = vmatprep.mubr.f32.mxu0 0.0
    %1976 = vmatmul.mubr.f32.gmra.mrb[0].mxu0 %v1800
    %v1977 = vpop.f32.mrb[0].mxu0
    %v1978 = vadd.f32 0.0, %v1977
    %v1979 = vpop.f32.mrb[0].mxu0
    %1980 = vmatprep.mubr.f32.mxu0 0.0
    %1981 = vmatmul.mubr.f32.gmra.mrb[0].mxu0 %v1803
    %v1982 = vpop.f32.mrb[0].mxu0
    %v1983 = vadd.f32 0.0, %v1982
    %v1984 = vpop.f32.mrb[0].mxu0
    %1985 = vmatprep.mubr.f32.mxu0 0.0
    %1986 = vmatmul.mubr.f32.gmra.mrb[0].mxu0 %v1806
    %v1987 = vpop.f32.mrb[0].mxu0
    %v1988 = vadd.f32 0.0, %v1987
    %v1989 = vpop.f32.mrb[0].mxu0
    %1990 = vmatprep.mubr.f32.mxu0 0.0
    %1991 = vmatmul.mubr.f32.gmra.mrb[0].mxu0 %v1809
    %v1992 = vpop.f32.mrb[0].mxu0
    %v1993 = vadd.f32 0.0, %v1992
    %v1994 = vpop.f32.mrb[0].mxu0
    %1995 = vmatprep.mubr.f32.mxu0 0.0
    %1996 = vmatmul.mubr.f32.gmra.mrb[0].mxu0 %v1812
    %v1997 = vpop.f32.mrb[0].mxu0
    %v1998 = vadd.f32 0.0, %v1997
    %v1999 = vpop.f32.mrb[0].mxu0
    %2000 = vmatprep.mubr.f32.mxu0 0.0
    %2001 = vmatmul.mubr.f32.gmra.mrb[0].mxu0 %v1815
    %v2002 = vpop.f32.mrb[0].mxu0
    %v2003 = vadd.f32 0.0, %v2002
    %v2004 = vpop.f32.mrb[0].mxu0
    %2005 = vmatprep.mubr.f32.mxu0 0.0
    %2006 = vmatmul.mubr.f32.gmra.mrb[0].mxu0 %v1818
    %v2007 = vpop.f32.mrb[0].mxu0
    %v2008 = vadd.f32 0.0, %v2007
    %v2009 = vpop.f32.mrb[0].mxu0
    %2010 = vmatprep.mubr.f32.mxu0 0.0
    %2011 = vmatmul.mubr.f32.gmra.mrb[0].mxu0 %v1821
    %v2012 = vpop.f32.mrb[0].mxu0
    %v2013 = vadd.f32 0.0, %v2012
    %v2014 = vpop.f32.mrb[0].mxu0
    %2015 = vmatprep.mubr.f32.mxu0 0.0
    %2016 = vmatmul.mubr.f32.gmra.mrb[0].mxu0 %v1824
    %v2017 = vpop.f32.mrb[0].mxu0
    %v2018 = vadd.f32 0.0, %v2017
    %v2019 = vpop.f32.mrb[0].mxu0
    %2020 = vmatprep.mubr.f32.mxu0 0.0
    %2021 = vmatmul.mubr.f32.gmra.mrb[0].mxu0 %v1827
    %v2022 = vpop.f32.mrb[0].mxu0
    %v2023 = vadd.f32 0.0, %v2022
    %v2024 = vpop.f32.mrb[0].mxu0
    %2025 = vmatprep.mubr.f32.mxu0 0.0
    %2026 = vmatmul.mubr.f32.gmra.mrb[0].mxu0 %v1830
    %v2027 = vpop.f32.mrb[0].mxu0
    %v2028 = vadd.f32 0.0, %v2027
    %v2029 = vpop.f32.mrb[0].mxu0
    %2030 = vmatprep.mubr.f32.mxu0 0.0
    %2031 = vmatmul.mubr.f32.gmra.mrb[0].mxu0 %v1833
    %v2032 = vpop.f32.mrb[0].mxu0
    %v2033 = vadd.f32 0.0, %v2032
    %v2034 = vpop.f32.mrb[0].mxu0
    %2035 = vmatprep.mubr.f32.mxu0 0.0
    %2036 = vmatmul.mubr.f32.gmra.mrb[0].mxu0 %v1836
    %v2037 = vpop.f32.mrb[0].mxu0
    %v2038 = vadd.f32 0.0, %v2037
    %v2039 = vpop.f32.mrb[0].mxu0
    %2040 = vmatprep.mubr.f32.mxu0 0.0
    %2041 = vmatmul.mubr.f32.gmra.mrb[0].mxu0 %v1839
    %v2042 = vpop.f32.mrb[0].mxu0
    %v2043 = vadd.f32 0.0, %v2042
    %v2044 = vpop.f32.mrb[0].mxu0
    %2045 = vmatprep.mubr.f32.mxu0 0.0
    %2046 = vmatmul.mubr.f32.gmra.mrb[0].mxu0 %v1842
    %v2047 = vpop.f32.mrb[0].mxu0
    %v2048 = vadd.f32 0.0, %v2047
    %v2049 = vpop.f32.mrb[0].mxu0
    %2050 = vmatprep.mubr.f32.mxu0 0.0
    %2051 = vmatmul.mubr.f32.gmra.mrb[0].mxu0 %v1845
    %v2052 = vpop.f32.mrb[0].mxu0
    %v2053 = vadd.f32 0.0, %v2052
    %v2054 = vpop.f32.mrb[0].mxu0
    %2055 = vmatprep.mubr.f32.mxu0 0.0
    %2056 = vmatmul.mubr.f32.gmra.mrb[0].mxu0 %v1848
    %v2057 = vpop.f32.mrb[0].mxu0
    %v2058 = vadd.f32 0.0, %v2057
    %v2059 = vpop.f32.mrb[0].mxu0
    %2060 = vmatprep.mubr.f32.mxu0 0.0
    %2061 = vmatmul.mubr.f32.gmra.mrb[0].mxu0 %v1851
    %v2062 = vpop.f32.mrb[0].mxu0
    %v2063 = vadd.f32 0.0, %v2062
    %v2064 = vpop.f32.mrb[0].mxu0
    %2065 = vmatprep.mubr.f32.mxu0 0.0
    %2066 = vmatmul.mubr.f32.gmra.mrb[0].mxu0 %v1854
    %v2067 = vpop.f32.mrb[0].mxu0
    %v2068 = vadd.f32 0.0, %v2067
    %v2069 = vpop.f32.mrb[0].mxu0
    %2070 = vmatprep.mubr.f32.mxu0 0.0
    %2071 = vmatmul.mubr.f32.gmra.mrb[0].mxu0 %v1857
    %v2072 = vpop.f32.mrb[0].mxu0
    %v2073 = vadd.f32 0.0, %v2072
    %v2074 = vpop.f32.mrb[0].mxu0
    %2075 = vmatprep.mubr.f32.mxu0 0.0
    %2076 = vmatmul.mubr.f32.gmra.mrb[0].mxu0 %v1860
    %v2077 = vpop.f32.mrb[0].mxu0
    %v2078 = vadd.f32 0.0, %v2077
    %v2079 = vpop.f32.mrb[0].mxu0
    %2080 = vmatprep.mubr.f32.mxu0 0.0
    %2081 = vmatmul.mubr.f32.gmra.mrb[0].mxu0 %v1863
    %v2082 = vpop.f32.mrb[0].mxu0
    %v2083 = vadd.f32 0.0, %v2082
    %v2084 = vpop.f32.mrb[0].mxu0
    %2085 = vmatprep.mubr.f32.mxu0 0.0
    %2086 = vmatmul.mubr.f32.gmra.mrb[0].mxu0 %v1866
    %v2087 = vpop.f32.mrb[0].mxu0
    %v2088 = vadd.f32 0.0, %v2087
    %v2089 = vpop.f32.mrb[0].mxu0
    %2090 = vmatprep.mubr.f32.mxu0 0.0
    %2091 = vmatmul.mubr.f32.gmra.mrb[0].mxu0 %v1869
    %v2092 = vpop.f32.mrb[0].mxu0
    %v2093 = vadd.f32 0.0, %v2092
    %v2094 = vpop.f32.mrb[0].mxu0
    %2095 = vdwg.mxu0
    %v2096 = vmax.f32 %v1938, 0.0
    %v2097 = vmax.f32 %v1943, 0.0
    %v2098 = vmax.f32 %v1948, 0.0
    %v2099 = vmax.f32 %v1953, 0.0
    %v2100 = vmax.f32 %v1958, 0.0
    %v2101 = vmax.f32 %v1963, 0.0
    %v2102 = vmax.f32 %v1968, 0.0
    %v2103 = vmax.f32 %v1973, 0.0
    %v2104 = vmax.f32 %v1978, 0.0
    %v2105 = vmax.f32 %v1983, 0.0
    %v2106 = vmax.f32 %v1988, 0.0
    %v2107 = vmax.f32 %v1993, 0.0
    %v2108 = vmax.f32 %v1998, 0.0
    %v2109 = vmax.f32 %v2003, 0.0
    %v2110 = vmax.f32 %v2008, 0.0
    %v2111 = vmax.f32 %v2013, 0.0
    %v2112 = vmax.f32 %v2018, 0.0
    %v2113 = vmax.f32 %v2023, 0.0
    %v2114 = vmax.f32 %v2028, 0.0
    %v2115 = vmax.f32 %v2033, 0.0
    %v2116 = vmax.f32 %v2038, 0.0
    %v2117 = vmax.f32 %v2043, 0.0
    %v2118 = vmax.f32 %v2048, 0.0
    %v2119 = vmax.f32 %v2053, 0.0
    %v2120 = vmax.f32 %v2058, 0.0
    %v2121 = vmax.f32 %v2063, 0.0
    %v2122 = vmax.f32 %v2068, 0.0
    %v2123 = vmax.f32 %v2073, 0.0
    %v2124 = vmax.f32 %v2078, 0.0
    %v2125 = vmax.f32 %v2083, 0.0
    %v2126 = vmax.f32 %v2088, 0.0
    %v2127 = vmax.f32 %v2093, 0.0
    %v2128 = vld [vmem:[%s55] sm:$0xff]
    %v2129 = vld [vmem:[%s55 + $0x8] sm:$0xff]
    %v2130 = vld [vmem:[%s55 + $0x10] sm:$0xff]
    %v2131 = vld [vmem:[%s55 + $0x18] sm:$0xff]
    %v2132 = vld [vmem:[%s55 + $0x20] sm:$0xff]
    %v2133 = vld [vmem:[%s55 + $0x28] sm:$0xff]
    %v2134 = vld [vmem:[%s55 + $0x30] sm:$0xff]
    %v2135 = vld [vmem:[%s55 + $0x38] sm:$0xff]
    %v2137 = vsel %vm943, %v2096, 0
    %v2140 = vsel %vm943, %v2097, 0
    %v2143 = vsel %vm943, %v2098, 0
    %v2146 = vsel %vm943, %v2099, 0
    %v2149 = vsel %vm943, %v2100, 0
    %v2152 = vsel %vm943, %v2101, 0
    %v2155 = vsel %vm943, %v2102, 0
    %v2158 = vsel %vm943, %v2103, 0
    %v2161 = vsel %vm943, %v2104, 0
    %v2164 = vsel %vm943, %v2105, 0
    %v2167 = vsel %vm943, %v2106, 0
    %v2170 = vsel %vm943, %v2107, 0
    %v2173 = vsel %vm943, %v2108, 0
    %v2176 = vsel %vm943, %v2109, 0
    %v2179 = vsel %vm943, %v2110, 0
    %v2182 = vsel %vm943, %v2111, 0
    %v2185 = vsel %vm943, %v2112, 0
    %v2188 = vsel %vm943, %v2113, 0
    %v2191 = vsel %vm943, %v2114, 0
    %v2194 = vsel %vm943, %v2115, 0
    %v2197 = vsel %vm943, %v2116, 0
    %v2200 = vsel %vm943, %v2117, 0
    %v2203 = vsel %vm943, %v2118, 0
    %v2206 = vsel %vm943, %v2119, 0
    %v2209 = vsel %vm943, %v2120, 0
    %v2212 = vsel %vm943, %v2121, 0
    %v2215 = vsel %vm943, %v2122, 0
    %v2218 = vsel %vm943, %v2123, 0
    %v2221 = vsel %vm943, %v2124, 0
    %v2224 = vsel %vm943, %v2125, 0
    %v2227 = vsel %vm943, %v2126, 0
    %v2230 = vsel %vm943, %v2127, 0
    %2232 = vmatprep.subr.mxu0 0.0
    %2233 = vmatpush1.msra.mxu0 %v2128
    %2234 = vmatprep.subr.mxu0 0.0
    %2235 = vmatpush1.msra.mxu0 %v2129
    %2236 = vmatprep.subr.mxu0 0.0
    %2237 = vmatpush1.msra.mxu0 %v2130
    %2238 = vmatprep.subr.mxu0 0.0
    %2239 = vmatpush1.msra.mxu0 %v2131
    %2240 = vmatprep.subr.mxu0 0.0
    %2241 = vmatpush1.msra.mxu0 %v2132
    %2242 = vmatprep.subr.mxu0 0.0
    %2243 = vmatpush1.msra.mxu0 %v2133
    %2244 = vmatprep.subr.mxu0 0.0
    %2245 = vmatpush1.msra.mxu0 %v2134
    %2246 = vmatprep.subr.mxu0 0.0
    %2247 = vmatpush1.msra.mxu0 %v2135
    %2248 = vmatprep.subr.mxu0 0.0
    %2249 = vmatpush1.msra.mxu0 0.0
    %2250 = vmatprep.subr.mxu0 0.0
    %2251 = vmatpush1.msra.mxu0 0.0
    %2252 = vmatprep.subr.mxu0 0.0
    %2253 = vmatpush1.msra.mxu0 0.0
    %2254 = vmatprep.subr.mxu0 0.0
    %2255 = vmatpush1.msra.mxu0 0.0
    %2256 = vmatprep.subr.mxu0 0.0
    %2257 = vmatpush1.msra.mxu0 0.0
    %2258 = vmatprep.subr.mxu0 0.0
    %2259 = vmatpush1.msra.mxu0 0.0
    %2260 = vmatprep.subr.mxu0 0.0
    %2261 = vmatpush1.msra.mxu0 0.0
    %2262 = vmatprep.subr.mxu0 0.0
    %2263 = vmatpush1.msra.mxu0 0.0
    %2264 = vmatprep.subr.mxu0 0.0
    %2265 = vmatpush1.msra.mxu0 0.0
    %2266 = vmatprep.subr.mxu0 0.0
    %2267 = vmatpush1.msra.mxu0 0.0
    %2268 = vmatprep.subr.mxu0 0.0
    %2269 = vmatpush1.msra.mxu0 0.0
    %2270 = vmatprep.subr.mxu0 0.0
    %2271 = vmatpush1.msra.mxu0 0.0
    %2272 = vmatprep.subr.mxu0 0.0
    %2273 = vmatpush1.msra.mxu0 0.0
    %2274 = vmatprep.subr.mxu0 0.0
    %2275 = vmatpush1.msra.mxu0 0.0
    %2276 = vmatprep.subr.mxu0 0.0
    %2277 = vmatpush1.msra.mxu0 0.0
    %2278 = vmatprep.subr.mxu0 0.0
    %2279 = vmatpush1.msra.mxu0 0.0
    %2280 = vmatprep.subr.mxu0 0.0
    %2281 = vmatpush1.msra.mxu0 0.0
    %2282 = vmatprep.subr.mxu0 0.0
    %2283 = vmatpush1.msra.mxu0 0.0
    %2284 = vmatprep.subr.mxu0 0.0
    %2285 = vmatpush1.msra.mxu0 0.0
    %2286 = vmatprep.subr.mxu0 0.0
    %2287 = vmatpush1.msra.mxu0 0.0
    %2288 = vmatprep.subr.mxu0 0.0
    %2289 = vmatpush1.msra.mxu0 0.0
    %2290 = vmatprep.subr.mxu0 0.0
    %2291 = vmatpush1.msra.mxu0 0.0
    %2292 = vmatprep.subr.mxu0 0.0
    %2293 = vmatpush1.msra.mxu0 0.0
    %2294 = vmatprep.subr.mxu0 0.0
    %2295 = vmatpush1.msra.mxu0 0.0
    %2296 = vmatprep.mubr.f32.mxu0 0.0
    %2297 = vmatmul.mubr.f32.gmra.mrb[0].mxu0 %v2137
    %v2298 = vpop.f32.mrb[0].mxu0
    %v2299 = vadd.f32 0.0, %v2298
    %v2300 = vpop.f32.mrb[0].mxu0
    %2301 = vmatprep.mubr.f32.mxu0 0.0
    %2302 = vmatmul.mubr.f32.gmra.mrb[0].mxu0 %v2140
    %v2303 = vpop.f32.mrb[0].mxu0
    %v2304 = vadd.f32 0.0, %v2303
    %v2305 = vpop.f32.mrb[0].mxu0
    %2306 = vmatprep.mubr.f32.mxu0 0.0
    %2307 = vmatmul.mubr.f32.gmra.mrb[0].mxu0 %v2143
    %v2308 = vpop.f32.mrb[0].mxu0
    %v2309 = vadd.f32 0.0, %v2308
    %v2310 = vpop.f32.mrb[0].mxu0
    %2311 = vmatprep.mubr.f32.mxu0 0.0
    %2312 = vmatmul.mubr.f32.gmra.mrb[0].mxu0 %v2146
    %v2313 = vpop.f32.mrb[0].mxu0
    %v2314 = vadd.f32 0.0, %v2313
    %v2315 = vpop.f32.mrb[0].mxu0
    %2316 = vmatprep.mubr.f32.mxu0 0.0
    %2317 = vmatmul.mubr.f32.gmra.mrb[0].mxu0 %v2149
    %v2318 = vpop.f32.mrb[0].mxu0
    %v2319 = vadd.f32 0.0, %v2318
    %v2320 = vpop.f32.mrb[0].mxu0
    %2321 = vmatprep.mubr.f32.mxu0 0.0
    %2322 = vmatmul.mubr.f32.gmra.mrb[0].mxu0 %v2152
    %v2323 = vpop.f32.mrb[0].mxu0
    %v2324 = vadd.f32 0.0, %v2323
    %v2325 = vpop.f32.mrb[0].mxu0
    %2326 = vmatprep.mubr.f32.mxu0 0.0
    %2327 = vmatmul.mubr.f32.gmra.mrb[0].mxu0 %v2155
    %v2328 = vpop.f32.mrb[0].mxu0
    %v2329 = vadd.f32 0.0, %v2328
    %v2330 = vpop.f32.mrb[0].mxu0
    %2331 = vmatprep.mubr.f32.mxu0 0.0
    %2332 = vmatmul.mubr.f32.gmra.mrb[0].mxu0 %v2158
    %v2333 = vpop.f32.mrb[0].mxu0
    %v2334 = vadd.f32 0.0, %v2333
    %v2335 = vpop.f32.mrb[0].mxu0
    %2336 = vmatprep.mubr.f32.mxu0 0.0
    %2337 = vmatmul.mubr.f32.gmra.mrb[0].mxu0 %v2161
    %v2338 = vpop.f32.mrb[0].mxu0
    %v2339 = vadd.f32 0.0, %v2338
    %v2340 = vpop.f32.mrb[0].mxu0
    %2341 = vmatprep.mubr.f32.mxu0 0.0
    %2342 = vmatmul.mubr.f32.gmra.mrb[0].mxu0 %v2164
    %v2343 = vpop.f32.mrb[0].mxu0
    %v2344 = vadd.f32 0.0, %v2343
    %v2345 = vpop.f32.mrb[0].mxu0
    %2346 = vmatprep.mubr.f32.mxu0 0.0
    %2347 = vmatmul.mubr.f32.gmra.mrb[0].mxu0 %v2167
    %v2348 = vpop.f32.mrb[0].mxu0
    %v2349 = vadd.f32 0.0, %v2348
    %v2350 = vpop.f32.mrb[0].mxu0
    %2351 = vmatprep.mubr.f32.mxu0 0.0
    %2352 = vmatmul.mubr.f32.gmra.mrb[0].mxu0 %v2170
    %v2353 = vpop.f32.mrb[0].mxu0
    %v2354 = vadd.f32 0.0, %v2353
    %v2355 = vpop.f32.mrb[0].mxu0
    %2356 = vmatprep.mubr.f32.mxu0 0.0
    %2357 = vmatmul.mubr.f32.gmra.mrb[0].mxu0 %v2173
    %v2358 = vpop.f32.mrb[0].mxu0
    %v2359 = vadd.f32 0.0, %v2358
    %v2360 = vpop.f32.mrb[0].mxu0
    %2361 = vmatprep.mubr.f32.mxu0 0.0
    %2362 = vmatmul.mubr.f32.gmra.mrb[0].mxu0 %v2176
    %v2363 = vpop.f32.mrb[0].mxu0
    %v2364 = vadd.f32 0.0, %v2363
    %v2365 = vpop.f32.mrb[0].mxu0
    %2366 = vmatprep.mubr.f32.mxu0 0.0
    %2367 = vmatmul.mubr.f32.gmra.mrb[0].mxu0 %v2179
    %v2368 = vpop.f32.mrb[0].mxu0
    %v2369 = vadd.f32 0.0, %v2368
    %v2370 = vpop.f32.mrb[0].mxu0
    %2371 = vmatprep.mubr.f32.mxu0 0.0
    %2372 = vmatmul.mubr.f32.gmra.mrb[0].mxu0 %v2182
    %v2373 = vpop.f32.mrb[0].mxu0
    %v2374 = vadd.f32 0.0, %v2373
    %v2375 = vpop.f32.mrb[0].mxu0
    %2376 = vmatprep.mubr.f32.mxu0 0.0
    %2377 = vmatmul.mubr.f32.gmra.mrb[0].mxu0 %v2185
    %v2378 = vpop.f32.mrb[0].mxu0
    %v2379 = vadd.f32 0.0, %v2378
    %v2380 = vpop.f32.mrb[0].mxu0
    %2381 = vmatprep.mubr.f32.mxu0 0.0
    %2382 = vmatmul.mubr.f32.gmra.mrb[0].mxu0 %v2188
    %v2383 = vpop.f32.mrb[0].mxu0
    %v2384 = vadd.f32 0.0, %v2383
    %v2385 = vpop.f32.mrb[0].mxu0
    %2386 = vmatprep.mubr.f32.mxu0 0.0
    %2387 = vmatmul.mubr.f32.gmra.mrb[0].mxu0 %v2191
    %v2388 = vpop.f32.mrb[0].mxu0
    %v2389 = vadd.f32 0.0, %v2388
    %v2390 = vpop.f32.mrb[0].mxu0
    %2391 = vmatprep.mubr.f32.mxu0 0.0
    %2392 = vmatmul.mubr.f32.gmra.mrb[0].mxu0 %v2194
    %v2393 = vpop.f32.mrb[0].mxu0
    %v2394 = vadd.f32 0.0, %v2393
    %v2395 = vpop.f32.mrb[0].mxu0
    %2396 = vmatprep.mubr.f32.mxu0 0.0
    %2397 = vmatmul.mubr.f32.gmra.mrb[0].mxu0 %v2197
    %v2398 = vpop.f32.mrb[0].mxu0
    %v2399 = vadd.f32 0.0, %v2398
    %v2400 = vpop.f32.mrb[0].mxu0
    %2401 = vmatprep.mubr.f32.mxu0 0.0
    %2402 = vmatmul.mubr.f32.gmra.mrb[0].mxu0 %v2200
    %v2403 = vpop.f32.mrb[0].mxu0
    %v2404 = vadd.f32 0.0, %v2403
    %v2405 = vpop.f32.mrb[0].mxu0
    %2406 = vmatprep.mubr.f32.mxu0 0.0
    %2407 = vmatmul.mubr.f32.gmra.mrb[0].mxu0 %v2203
    %v2408 = vpop.f32.mrb[0].mxu0
    %v2409 = vadd.f32 0.0, %v2408
    %v2410 = vpop.f32.mrb[0].mxu0
    %2411 = vmatprep.mubr.f32.mxu0 0.0
    %2412 = vmatmul.mubr.f32.gmra.mrb[0].mxu0 %v2206
    %v2413 = vpop.f32.mrb[0].mxu0
    %v2414 = vadd.f32 0.0, %v2413
    %v2415 = vpop.f32.mrb[0].mxu0
    %2416 = vmatprep.mubr.f32.mxu0 0.0
    %2417 = vmatmul.mubr.f32.gmra.mrb[0].mxu0 %v2209
    %v2418 = vpop.f32.mrb[0].mxu0
    %v2419 = vadd.f32 0.0, %v2418
    %v2420 = vpop.f32.mrb[0].mxu0
    %2421 = vmatprep.mubr.f32.mxu0 0.0
    %2422 = vmatmul.mubr.f32.gmra.mrb[0].mxu0 %v2212
    %v2423 = vpop.f32.mrb[0].mxu0
    %v2424 = vadd.f32 0.0, %v2423
    %v2425 = vpop.f32.mrb[0].mxu0
    %2426 = vmatprep.mubr.f32.mxu0 0.0
    %2427 = vmatmul.mubr.f32.gmra.mrb[0].mxu0 %v2215
    %v2428 = vpop.f32.mrb[0].mxu0
    %v2429 = vadd.f32 0.0, %v2428
    %v2430 = vpop.f32.mrb[0].mxu0
    %2431 = vmatprep.mubr.f32.mxu0 0.0
    %2432 = vmatmul.mubr.f32.gmra.mrb[0].mxu0 %v2218
    %v2433 = vpop.f32.mrb[0].mxu0
    %v2434 = vadd.f32 0.0, %v2433
    %v2435 = vpop.f32.mrb[0].mxu0
    %2436 = vmatprep.mubr.f32.mxu0 0.0
    %2437 = vmatmul.mubr.f32.gmra.mrb[0].mxu0 %v2221
    %v2438 = vpop.f32.mrb[0].mxu0
    %v2439 = vadd.f32 0.0, %v2438
    %v2440 = vpop.f32.mrb[0].mxu0
    %2441 = vmatprep.mubr.f32.mxu0 0.0
    %2442 = vmatmul.mubr.f32.gmra.mrb[0].mxu0 %v2224
    %v2443 = vpop.f32.mrb[0].mxu0
    %v2444 = vadd.f32 0.0, %v2443
    %v2445 = vpop.f32.mrb[0].mxu0
    %2446 = vmatprep.mubr.f32.mxu0 0.0
    %2447 = vmatmul.mubr.f32.gmra.mrb[0].mxu0 %v2227
    %v2448 = vpop.f32.mrb[0].mxu0
    %v2449 = vadd.f32 0.0, %v2448
    %v2450 = vpop.f32.mrb[0].mxu0
    %2451 = vmatprep.mubr.f32.mxu0 0.0
    %2452 = vmatmul.mubr.f32.gmra.mrb[0].mxu0 %v2230
    %v2453 = vpop.f32.mrb[0].mxu0
    %v2454 = vadd.f32 0.0, %v2453
    %v2455 = vpop.f32.mrb[0].mxu0
    %2456 = vdwg.mxu0
    %v2457 = vmax.f32 %v2299, 0.0
    %v2458 = vmax.f32 %v2304, 0.0
    %v2459 = vmax.f32 %v2309, 0.0
    %v2460 = vmax.f32 %v2314, 0.0
    %v2461 = vmax.f32 %v2319, 0.0
    %v2462 = vmax.f32 %v2324, 0.0
    %v2463 = vmax.f32 %v2329, 0.0
    %v2464 = vmax.f32 %v2334, 0.0
    %v2465 = vmax.f32 %v2339, 0.0
    %v2466 = vmax.f32 %v2344, 0.0
    %v2467 = vmax.f32 %v2349, 0.0
    %v2468 = vmax.f32 %v2354, 0.0
    %v2469 = vmax.f32 %v2359, 0.0
    %v2470 = vmax.f32 %v2364, 0.0
    %v2471 = vmax.f32 %v2369, 0.0
    %v2472 = vmax.f32 %v2374, 0.0
    %v2473 = vmax.f32 %v2379, 0.0
    %v2474 = vmax.f32 %v2384, 0.0
    %v2475 = vmax.f32 %v2389, 0.0
    %v2476 = vmax.f32 %v2394, 0.0
    %v2477 = vmax.f32 %v2399, 0.0
    %v2478 = vmax.f32 %v2404, 0.0
    %v2479 = vmax.f32 %v2409, 0.0
    %v2480 = vmax.f32 %v2414, 0.0
    %v2481 = vmax.f32 %v2419, 0.0
    %v2482 = vmax.f32 %v2424, 0.0
    %v2483 = vmax.f32 %v2429, 0.0
    %v2484 = vmax.f32 %v2434, 0.0
    %v2485 = vmax.f32 %v2439, 0.0
    %v2486 = vmax.f32 %v2444, 0.0
    %v2487 = vmax.f32 %v2449, 0.0
    %v2488 = vmax.f32 %v2454, 0.0
    %v2489 = vld [vmem:[%s57] sm:$0x1]
    %v2491 = vlaneseq
    %v2492 = vshrl.u32 %v2491, 7
    %v2493 = vsub.s32 0, %v2492
    %v2494 = vrot.slane %v2489, %v2493
    %v2496 = vmul.f32 %v2457, %v2494
    %v2497 = vmul.f32 %v2458, %v2494
    %v2498 = vmul.f32 %v2459, %v2494
    %v2499 = vmul.f32 %v2460, %v2494
    %v2500 = vmul.f32 %v2461, %v2494
    %v2501 = vmul.f32 %v2462, %v2494
    %v2502 = vmul.f32 %v2463, %v2494
    %v2503 = vmul.f32 %v2464, %v2494
    %v2504 = vmul.f32 %v2465, %v2494
    %v2505 = vmul.f32 %v2466, %v2494
    %v2506 = vmul.f32 %v2467, %v2494
    %v2507 = vmul.f32 %v2468, %v2494
    %v2508 = vmul.f32 %v2469, %v2494
    %v2509 = vmul.f32 %v2470, %v2494
    %v2510 = vmul.f32 %v2471, %v2494
    %v2511 = vmul.f32 %v2472, %v2494
    %v2512 = vmul.f32 %v2473, %v2494
    %v2513 = vmul.f32 %v2474, %v2494
    %v2514 = vmul.f32 %v2475, %v2494
    %v2515 = vmul.f32 %v2476, %v2494
    %v2516 = vmul.f32 %v2477, %v2494
    %v2517 = vmul.f32 %v2478, %v2494
    %v2518 = vmul.f32 %v2479, %v2494
    %v2519 = vmul.f32 %v2480, %v2494
    %v2520 = vmul.f32 %v2481, %v2494
    %v2521 = vmul.f32 %v2482, %v2494
    %v2522 = vmul.f32 %v2483, %v2494
    %v2523 = vmul.f32 %v2484, %v2494
    %v2524 = vmul.f32 %v2485, %v2494
    %v2525 = vmul.f32 %v2486, %v2494
    %v2526 = vmul.f32 %v2487, %v2494
    %v2527 = vmul.f32 %v2488, %v2494
    %v2528 = vsel %vm217, %v2496, 0.0
    %2529 = vadd.xlane.f32.xlu0 %v2528
    %v2530 = vpop.xlane.xlu0 %2529
    %v2531 = vsel %vm217, %v2497, 0.0
    %2532 = vadd.xlane.f32.xlu0 %v2531
    %v2533 = vpop.xlane.xlu0 %2532
    %v2534 = vsel %vm217, %v2498, 0.0
    %2535 = vadd.xlane.f32.xlu0 %v2534
    %v2536 = vpop.xlane.xlu0 %2535
    %v2537 = vsel %vm217, %v2499, 0.0
    %2538 = vadd.xlane.f32.xlu0 %v2537
    %v2539 = vpop.xlane.xlu0 %2538
    %v2540 = vsel %vm217, %v2500, 0.0
    %2541 = vadd.xlane.f32.xlu0 %v2540
    %v2542 = vpop.xlane.xlu0 %2541
    %v2543 = vsel %vm217, %v2501, 0.0
    %2544 = vadd.xlane.f32.xlu0 %v2543
    %v2545 = vpop.xlane.xlu0 %2544
    %v2546 = vsel %vm217, %v2502, 0.0
    %2547 = vadd.xlane.f32.xlu0 %v2546
    %v2548 = vpop.xlane.xlu0 %2547
    %v2549 = vsel %vm217, %v2503, 0.0
    %2550 = vadd.xlane.f32.xlu0 %v2549
    %v2551 = vpop.xlane.xlu0 %2550
    %v2552 = vsel %vm217, %v2504, 0.0
    %2553 = vadd.xlane.f32.xlu0 %v2552
    %v2554 = vpop.xlane.xlu0 %2553
    %v2555 = vsel %vm217, %v2505, 0.0
    %2556 = vadd.xlane.f32.xlu0 %v2555
    %v2557 = vpop.xlane.xlu0 %2556
    %v2558 = vsel %vm217, %v2506, 0.0
    %2559 = vadd.xlane.f32.xlu0 %v2558
    %v2560 = vpop.xlane.xlu0 %2559
    %v2561 = vsel %vm217, %v2507, 0.0
    %2562 = vadd.xlane.f32.xlu0 %v2561
    %v2563 = vpop.xlane.xlu0 %2562
    %v2564 = vsel %vm217, %v2508, 0.0
    %2565 = vadd.xlane.f32.xlu0 %v2564
    %v2566 = vpop.xlane.xlu0 %2565
    %v2567 = vsel %vm217, %v2509, 0.0
    %2568 = vadd.xlane.f32.xlu0 %v2567
    %v2569 = vpop.xlane.xlu0 %2568
    %v2570 = vsel %vm217, %v2510, 0.0
    %2571 = vadd.xlane.f32.xlu0 %v2570
    %v2572 = vpop.xlane.xlu0 %2571
    %v2573 = vsel %vm217, %v2511, 0.0
    %2574 = vadd.xlane.f32.xlu0 %v2573
    %v2575 = vpop.xlane.xlu0 %2574
    %v2576 = vsel %vm217, %v2512, 0.0
    %2577 = vadd.xlane.f32.xlu0 %v2576
    %v2578 = vpop.xlane.xlu0 %2577
    %v2579 = vsel %vm217, %v2513, 0.0
    %2580 = vadd.xlane.f32.xlu0 %v2579
    %v2581 = vpop.xlane.xlu0 %2580
    %v2582 = vsel %vm217, %v2514, 0.0
    %2583 = vadd.xlane.f32.xlu0 %v2582
    %v2584 = vpop.xlane.xlu0 %2583
    %v2585 = vsel %vm217, %v2515, 0.0
    %2586 = vadd.xlane.f32.xlu0 %v2585
    %v2587 = vpop.xlane.xlu0 %2586
    %v2588 = vsel %vm217, %v2516, 0.0
    %2589 = vadd.xlane.f32.xlu0 %v2588
    %v2590 = vpop.xlane.xlu0 %2589
    %v2591 = vsel %vm217, %v2517, 0.0
    %2592 = vadd.xlane.f32.xlu0 %v2591
    %v2593 = vpop.xlane.xlu0 %2592
    %v2594 = vsel %vm217, %v2518, 0.0
    %2595 = vadd.xlane.f32.xlu0 %v2594
    %v2596 = vpop.xlane.xlu0 %2595
    %v2597 = vsel %vm217, %v2519, 0.0
    %2598 = vadd.xlane.f32.xlu0 %v2597
    %v2599 = vpop.xlane.xlu0 %2598
    %v2600 = vsel %vm217, %v2520, 0.0
    %2601 = vadd.xlane.f32.xlu0 %v2600
    %v2602 = vpop.xlane.xlu0 %2601
    %v2603 = vsel %vm217, %v2521, 0.0
    %2604 = vadd.xlane.f32.xlu0 %v2603
    %v2605 = vpop.xlane.xlu0 %2604
    %v2606 = vsel %vm217, %v2522, 0.0
    %2607 = vadd.xlane.f32.xlu0 %v2606
    %v2608 = vpop.xlane.xlu0 %2607
    %v2609 = vsel %vm217, %v2523, 0.0
    %2610 = vadd.xlane.f32.xlu0 %v2609
    %v2611 = vpop.xlane.xlu0 %2610
    %v2612 = vsel %vm217, %v2524, 0.0
    %2613 = vadd.xlane.f32.xlu0 %v2612
    %v2614 = vpop.xlane.xlu0 %2613
    %v2615 = vsel %vm217, %v2525, 0.0
    %2616 = vadd.xlane.f32.xlu0 %v2615
    %v2617 = vpop.xlane.xlu0 %2616
    %v2618 = vsel %vm217, %v2526, 0.0
    %2619 = vadd.xlane.f32.xlu0 %v2618
    %v2620 = vpop.xlane.xlu0 %2619
    %v2621 = vsel %vm217, %v2527, 0.0
    %2622 = vadd.xlane.f32.xlu0 %v2621
    %v2623 = vpop.xlane.xlu0 %2622
    %v2624 = vld [vmem:[#allocation2] sm:$0x1]
    %v2626 = vlaneseq
    %v2627 = vshrl.u32 %v2626, 7
    %v2628 = vsub.s32 0, %v2627
    %v2629 = vrot.slane %v2624, %v2628
    %v2631 = vadd.f32 %v2530, %v2629
    %v2632 = vadd.f32 %v2533, %v2629
    %v2633 = vadd.f32 %v2536, %v2629
    %v2634 = vadd.f32 %v2539, %v2629
    %v2635 = vadd.f32 %v2542, %v2629
    %v2636 = vadd.f32 %v2545, %v2629
    %v2637 = vadd.f32 %v2548, %v2629
    %v2638 = vadd.f32 %v2551, %v2629
    %v2639 = vadd.f32 %v2554, %v2629
    %v2640 = vadd.f32 %v2557, %v2629
    %v2641 = vadd.f32 %v2560, %v2629
    %v2642 = vadd.f32 %v2563, %v2629
    %v2643 = vadd.f32 %v2566, %v2629
    %v2644 = vadd.f32 %v2569, %v2629
    %v2645 = vadd.f32 %v2572, %v2629
    %v2646 = vadd.f32 %v2575, %v2629
    %v2647 = vadd.f32 %v2578, %v2629
    %v2648 = vadd.f32 %v2581, %v2629
    %v2649 = vadd.f32 %v2584, %v2629
    %v2650 = vadd.f32 %v2587, %v2629
    %v2651 = vadd.f32 %v2590, %v2629
    %v2652 = vadd.f32 %v2593, %v2629
    %v2653 = vadd.f32 %v2596, %v2629
    %v2654 = vadd.f32 %v2599, %v2629
    %v2655 = vadd.f32 %v2602, %v2629
    %v2656 = vadd.f32 %v2605, %v2629
    %v2657 = vadd.f32 %v2608, %v2629
    %v2658 = vadd.f32 %v2611, %v2629
    %v2659 = vadd.f32 %v2614, %v2629
    %v2660 = vadd.f32 %v2617, %v2629
    %v2661 = vadd.f32 %v2620, %v2629
    %v2662 = vadd.f32 %v2623, %v2629
    %v2663 = vld [vmem:[%s15] sm:$0xff]
    %v2664 = vld [vmem:[%s15 + $0x8] sm:$0xff]
    %v2665 = vld [vmem:[%s15 + $0x10] sm:$0xff]
    %v2666 = vld [vmem:[%s15 + $0x18] sm:$0xff]
    %v2667 = vld [vmem:[%s15 + $0x20] sm:$0xff]
    %v2668 = vld [vmem:[%s15 + $0x28] sm:$0xff]
    %v2669 = vld [vmem:[%s15 + $0x30] sm:$0xff]
    %v2670 = vld [vmem:[%s15 + $0x38] sm:$0xff]
    %v2671 = vld [vmem:[%s15 + $0x40] sm:$0xff]
    %v2672 = vld [vmem:[%s15 + $0x48] sm:$0xff]
    %v2673 = vld [vmem:[%s15 + $0x50] sm:$0xff]
    %v2674 = vld [vmem:[%s15 + $0x58] sm:$0xff]
    %v2675 = vld [vmem:[%s15 + $0x60] sm:$0xff]
    %v2676 = vld [vmem:[%s15 + $0x68] sm:$0xff]
    %v2677 = vld [vmem:[%s15 + $0x70] sm:$0xff]
    %v2678 = vld [vmem:[%s15 + $0x78] sm:$0xff]
    %v2679 = vld [vmem:[%s15 + $0x80] sm:$0xff]
    %v2680 = vld [vmem:[%s15 + $0x88] sm:$0xff]
    %v2681 = vld [vmem:[%s15 + $0x90] sm:$0xff]
    %v2682 = vld [vmem:[%s15 + $0x98] sm:$0xff]
    %v2683 = vld [vmem:[%s15 + $0xa0] sm:$0xff]
    %v2684 = vld [vmem:[%s15 + $0xa8] sm:$0xff]
    %v2685 = vld [vmem:[%s15 + $0xb0] sm:$0xff]
    %v2686 = vld [vmem:[%s15 + $0xb8] sm:$0xff]
    %v2687 = vld [vmem:[%s15 + $0xc0] sm:$0xff]
    %v2688 = vld [vmem:[%s15 + $0xc8] sm:$0xff]
    %v2689 = vld [vmem:[%s15 + $0xd0] sm:$0xff]
    %v2690 = vld [vmem:[%s15 + $0xd8] sm:$0xff]
    %v2691 = vld [vmem:[%s15 + $0xe0] sm:$0xff]
    %v2692 = vld [vmem:[%s15 + $0xe8] sm:$0xff]
    %v2693 = vld [vmem:[%s15 + $0xf0] sm:$0xff]
    %v2694 = vld [vmem:[%s15 + $0xf8] sm:$0xff]
    %v2695 = vadd.f32 %v2631, %v2663
    %v2696 = vadd.f32 %v2632, %v2664
    %v2697 = vadd.f32 %v2633, %v2665
    %v2698 = vadd.f32 %v2634, %v2666
    %v2699 = vadd.f32 %v2635, %v2667
    %v2700 = vadd.f32 %v2636, %v2668
    %v2701 = vadd.f32 %v2637, %v2669
    %v2702 = vadd.f32 %v2638, %v2670
    %v2703 = vadd.f32 %v2639, %v2671
    %v2704 = vadd.f32 %v2640, %v2672
    %v2705 = vadd.f32 %v2641, %v2673
    %v2706 = vadd.f32 %v2642, %v2674
    %v2707 = vadd.f32 %v2643, %v2675
    %v2708 = vadd.f32 %v2644, %v2676
    %v2709 = vadd.f32 %v2645, %v2677
    %v2710 = vadd.f32 %v2646, %v2678
    %v2711 = vadd.f32 %v2647, %v2679
    %v2712 = vadd.f32 %v2648, %v2680
    %v2713 = vadd.f32 %v2649, %v2681
    %v2714 = vadd.f32 %v2650, %v2682
    %v2715 = vadd.f32 %v2651, %v2683
    %v2716 = vadd.f32 %v2652, %v2684
    %v2717 = vadd.f32 %v2653, %v2685
    %v2718 = vadd.f32 %v2654, %v2686
    %v2719 = vadd.f32 %v2655, %v2687
    %v2720 = vadd.f32 %v2656, %v2688
    %v2721 = vadd.f32 %v2657, %v2689
    %v2722 = vadd.f32 %v2658, %v2690
    %v2723 = vadd.f32 %v2659, %v2691
    %v2724 = vadd.f32 %v2660, %v2692
    %v2725 = vadd.f32 %v2661, %v2693
    %v2726 = vadd.f32 %v2662, %v2694
    %vm2727 = vcmask 7168
    %v2728 = vsel %vm2727, %v2695, -inf
    %v2729 = vsel %vm2727, %v2696, -inf
    %v2730 = vsel %vm2727, %v2697, -inf
    %v2731 = vsel %vm2727, %v2698, -inf
    %v2732 = vsel %vm2727, %v2699, -inf
    %v2733 = vmax.f32 %v2728, %v2732
    %v2734 = vsel %vm2727, %v2700, -inf
    %v2735 = vmax.f32 %v2729, %v2734
    %v2736 = vsel %vm2727, %v2701, -inf
    %v2737 = vmax.f32 %v2730, %v2736
    %v2738 = vsel %vm2727, %v2702, -inf
    %v2739 = vmax.f32 %v2731, %v2738
    %v2740 = vsel %vm2727, %v2703, -inf
    %v2741 = vmax.f32 %v2733, %v2740
    %v2742 = vsel %vm2727, %v2704, -inf
    %v2743 = vmax.f32 %v2735, %v2742
    %v2744 = vsel %vm2727, %v2705, -inf
    %v2745 = vmax.f32 %v2737, %v2744
    %v2746 = vsel %vm2727, %v2706, -inf
    %v2747 = vmax.f32 %v2739, %v2746
    %v2748 = vsel %vm2727, %v2707, -inf
    %v2749 = vmax.f32 %v2741, %v2748
    %v2750 = vsel %vm2727, %v2708, -inf
    %v2751 = vmax.f32 %v2743, %v2750
    %v2752 = vsel %vm2727, %v2709, -inf
    %v2753 = vmax.f32 %v2745, %v2752
    %v2754 = vsel %vm2727, %v2710, -inf
    %v2755 = vmax.f32 %v2747, %v2754
    %v2756 = vsel %vm2727, %v2711, -inf
    %v2757 = vmax.f32 %v2749, %v2756
    %v2758 = vsel %vm2727, %v2712, -inf
    %v2759 = vmax.f32 %v2751, %v2758
    %v2760 = vsel %vm2727, %v2713, -inf
    %v2761 = vmax.f32 %v2753, %v2760
    %v2762 = vsel %vm2727, %v2714, -inf
    %v2763 = vmax.f32 %v2755, %v2762
    %v2764 = vsel %vm2727, %v2715, -inf
    %v2765 = vmax.f32 %v2757, %v2764
    %v2766 = vsel %vm2727, %v2716, -inf
    %v2767 = vmax.f32 %v2759, %v2766
    %v2768 = vsel %vm2727, %v2717, -inf
    %v2769 = vmax.f32 %v2761, %v2768
    %v2770 = vsel %vm2727, %v2718, -inf
    %v2771 = vmax.f32 %v2763, %v2770
    %v2772 = vsel %vm2727, %v2719, -inf
    %v2773 = vmax.f32 %v2765, %v2772
    %v2774 = vsel %vm2727, %v2720, -inf
    %v2775 = vmax.f32 %v2767, %v2774
    %v2776 = vsel %vm2727, %v2721, -inf
    %v2777 = vmax.f32 %v2769, %v2776
    %v2778 = vsel %vm2727, %v2722, -inf
    %v2779 = vmax.f32 %v2771, %v2778
    %v2780 = vsel %vm2727, %v2723, -inf
    %v2781 = vmax.f32 %v2773, %v2780
    %v2782 = vsel %vm2727, %v2724, -inf
    %v2783 = vmax.f32 %v2775, %v2782
    %v2784 = vsel %vm2727, %v2725, -inf
    %v2785 = vmax.f32 %v2777, %v2784
    %v2786 = vsel %vm2727, %v2726, -inf
    %v2787 = vmax.f32 %v2779, %v2786
    %v2788 = vmax.f32 %v2781, %v2783
    %v2789 = vmax.f32 %v2785, %v2787
    %v2790 = vmax.f32 %v2788, %v2789
    %v2791 = vrot.slane %v2790, 4
    %v2792 = vmax.f32 %v2790, %v2791
    %v2793 = vrot.slane %v2792, 2
    %v2794 = vmax.f32 %v2792, %v2793
    %v2795 = vrot.slane %v2794, 1
    %v2796 = vmax.f32 %v2794, %v2795
    %v2797 = vsub.f32 %v2695, %v2796
    %v2798 = vsub.f32 %v2696, %v2796
    %v2799 = vsub.f32 %v2697, %v2796
    %v2800 = vsub.f32 %v2698, %v2796
    %v2801 = vsub.f32 %v2699, %v2796
    %v2802 = vsub.f32 %v2700, %v2796
    %v2803 = vsub.f32 %v2701, %v2796
    %v2804 = vsub.f32 %v2702, %v2796
    %v2805 = vsub.f32 %v2703, %v2796
    %v2806 = vsub.f32 %v2704, %v2796
    %v2807 = vsub.f32 %v2705, %v2796
    %v2808 = vsub.f32 %v2706, %v2796
    %v2809 = vsub.f32 %v2707, %v2796
    %v2810 = vsub.f32 %v2708, %v2796
    %v2811 = vsub.f32 %v2709, %v2796
    %v2812 = vsub.f32 %v2710, %v2796
    %v2813 = vsub.f32 %v2711, %v2796
    %v2814 = vsub.f32 %v2712, %v2796
    %v2815 = vsub.f32 %v2713, %v2796
    %v2816 = vsub.f32 %v2714, %v2796
    %v2817 = vsub.f32 %v2715, %v2796
    %v2818 = vsub.f32 %v2716, %v2796
    %v2819 = vsub.f32 %v2717, %v2796
    %v2820 = vsub.f32 %v2718, %v2796
    %v2821 = vsub.f32 %v2719, %v2796
    %v2822 = vsub.f32 %v2720, %v2796
    %v2823 = vsub.f32 %v2721, %v2796
    %v2824 = vsub.f32 %v2722, %v2796
    %v2825 = vsub.f32 %v2723, %v2796
    %v2826 = vsub.f32 %v2724, %v2796
    %v2827 = vsub.f32 %v2725, %v2796
    %v2828 = vsub.f32 %v2726, %v2796
    %v2829 = vmul.f32 %v2797, 1.442695
    %v2830 = vpow.pop %v2829
    %v2831 = vmul.f32 %v2798, 1.442695
    %v2832 = vpow.pop %v2831
    %v2833 = vmul.f32 %v2799, 1.442695
    %v2834 = vpow.pop %v2833
    %v2835 = vmul.f32 %v2800, 1.442695
    %v2836 = vpow.pop %v2835
    %v2837 = vmul.f32 %v2801, 1.442695
    %v2838 = vpow.pop %v2837
    %v2839 = vmul.f32 %v2802, 1.442695
    %v2840 = vpow.pop %v2839
    %v2841 = vmul.f32 %v2803, 1.442695
    %v2842 = vpow.pop %v2841
    %v2843 = vmul.f32 %v2804, 1.442695
    %v2844 = vpow.pop %v2843
    %v2845 = vmul.f32 %v2805, 1.442695
    %v2846 = vpow.pop %v2845
    %v2847 = vmul.f32 %v2806, 1.442695
    %v2848 = vpow.pop %v2847
    %v2849 = vmul.f32 %v2807, 1.442695
    %v2850 = vpow.pop %v2849
    %v2851 = vmul.f32 %v2808, 1.442695
    %v2852 = vpow.pop %v2851
    %v2853 = vmul.f32 %v2809, 1.442695
    %v2854 = vpow.pop %v2853
    %v2855 = vmul.f32 %v2810, 1.442695
    %v2856 = vpow.pop %v2855
    %v2857 = vmul.f32 %v2811, 1.442695
    %v2858 = vpow.pop %v2857
    %v2859 = vmul.f32 %v2812, 1.442695
    %v2860 = vpow.pop %v2859
    %v2861 = vmul.f32 %v2813, 1.442695
    %v2862 = vpow.pop %v2861
    %v2863 = vmul.f32 %v2814, 1.442695
    %v2864 = vpow.pop %v2863
    %v2865 = vmul.f32 %v2815, 1.442695
    %v2866 = vpow.pop %v2865
    %v2867 = vmul.f32 %v2816, 1.442695
    %v2868 = vpow.pop %v2867
    %v2869 = vmul.f32 %v2817, 1.442695
    %v2870 = vpow.pop %v2869
    %v2871 = vmul.f32 %v2818, 1.442695
    %v2872 = vpow.pop %v2871
    %v2873 = vmul.f32 %v2819, 1.442695
    %v2874 = vpow.pop %v2873
    %v2875 = vmul.f32 %v2820, 1.442695
    %v2876 = vpow.pop %v2875
    %v2877 = vmul.f32 %v2821, 1.442695
    %v2878 = vpow.pop %v2877
    %v2879 = vmul.f32 %v2822, 1.442695
    %v2880 = vpow.pop %v2879
    %v2881 = vmul.f32 %v2823, 1.442695
    %v2882 = vpow.pop %v2881
    %v2883 = vmul.f32 %v2824, 1.442695
    %v2884 = vpow.pop %v2883
    %v2885 = vmul.f32 %v2825, 1.442695
    %v2886 = vpow.pop %v2885
    %v2887 = vmul.f32 %v2826, 1.442695
    %v2888 = vpow.pop %v2887
    %v2889 = vmul.f32 %v2827, 1.442695
    %v2890 = vpow.pop %v2889
    %v2891 = vmul.f32 %v2828, 1.442695
    %v2892 = vpow.pop %v2891
    %v2893 = vld [vmem:[%s13] sm:$0xff]
    %v2894 = vld [vmem:[%s13 + $0x8] sm:$0xff]
    %v2895 = vld [vmem:[%s13 + $0x10] sm:$0xff]
    %v2896 = vld [vmem:[%s13 + $0x18] sm:$0xff]
    %v2897 = vld [vmem:[%s11] sm:$0xff]
    %v2898 = vld [vmem:[%s11 + $0x8] sm:$0xff]
    %v2899 = vld [vmem:[%s11 + $0x10] sm:$0xff]
    %v2900 = vld [vmem:[%s11 + $0x18] sm:$0xff]
    %v2901 = vld [vmem:[%s11 + $0x20] sm:$0xff]
    %v2902 = vld [vmem:[%s11 + $0x28] sm:$0xff]
    %v2903 = vld [vmem:[%s11 + $0x30] sm:$0xff]
    %v2904 = vld [vmem:[%s11 + $0x38] sm:$0xff]
    %v2905 = vld [vmem:[%s11 + $0x40] sm:$0xff]
    %v2906 = vld [vmem:[%s11 + $0x48] sm:$0xff]
    %v2907 = vld [vmem:[%s11 + $0x50] sm:$0xff]
    %v2908 = vld [vmem:[%s11 + $0x58] sm:$0xff]
    %v2909 = vld [vmem:[%s11 + $0x60] sm:$0xff]
    %v2910 = vld [vmem:[%s11 + $0x68] sm:$0xff]
    %v2911 = vld [vmem:[%s11 + $0x70] sm:$0xff]
    %v2912 = vld [vmem:[%s11 + $0x78] sm:$0xff]
    %v2913 = vld [vmem:[%s11 + $0x80] sm:$0xff]
    %v2914 = vld [vmem:[%s11 + $0x88] sm:$0xff]
    %v2915 = vld [vmem:[%s11 + $0x90] sm:$0xff]
    %v2916 = vld [vmem:[%s11 + $0x98] sm:$0xff]
    %v2917 = vld [vmem:[%s11 + $0xa0] sm:$0xff]
    %v2918 = vld [vmem:[%s11 + $0xa8] sm:$0xff]
    %v2919 = vld [vmem:[%s11 + $0xb0] sm:$0xff]
    %v2920 = vld [vmem:[%s11 + $0xb8] sm:$0xff]
    %v2921 = vld [vmem:[%s11 + $0xc0] sm:$0xff]
    %v2922 = vld [vmem:[%s11 + $0xc8] sm:$0xff]
    %v2923 = vld [vmem:[%s11 + $0xd0] sm:$0xff]
    %v2924 = vld [vmem:[%s11 + $0xd8] sm:$0xff]
    %v2925 = vld [vmem:[%s11 + $0xe0] sm:$0xff]
    %v2926 = vld [vmem:[%s11 + $0xe8] sm:$0xff]
    %v2927 = vld [vmem:[%s11 + $0xf0] sm:$0xff]
    %v2928 = vld [vmem:[%s11 + $0xf8] sm:$0xff]
    %2930 = vset.pattern.permute.xlu0 0
    %2931 = vperm.xlu0 %2930, %v2830
    %v2932 = vpop.permute.xlu0 %2931
    %2935 = vset.pattern.permute.xlu0 0
    %2936 = vperm.xlu0 %2935, %v2832
    %v2937 = vpop.permute.xlu0 %2936
    %2940 = vset.pattern.permute.xlu0 0
    %2941 = vperm.xlu0 %2940, %v2834
    %v2942 = vpop.permute.xlu0 %2941
    %2945 = vset.pattern.permute.xlu0 0
    %2946 = vperm.xlu0 %2945, %v2836
    %v2947 = vpop.permute.xlu0 %2946
    %2950 = vset.pattern.permute.xlu0 0
    %2951 = vperm.xlu0 %2950, %v2838
    %v2952 = vpop.permute.xlu0 %2951
    %2955 = vset.pattern.permute.xlu0 0
    %2956 = vperm.xlu0 %2955, %v2840
    %v2957 = vpop.permute.xlu0 %2956
    %2960 = vset.pattern.permute.xlu0 0
    %2961 = vperm.xlu0 %2960, %v2842
    %v2962 = vpop.permute.xlu0 %2961
    %2965 = vset.pattern.permute.xlu0 0
    %2966 = vperm.xlu0 %2965, %v2844
    %v2967 = vpop.permute.xlu0 %2966
    %2970 = vset.pattern.permute.xlu0 0
    %2971 = vperm.xlu0 %2970, %v2846
    %v2972 = vpop.permute.xlu0 %2971
    %2975 = vset.pattern.permute.xlu0 0
    %2976 = vperm.xlu0 %2975, %v2848
    %v2977 = vpop.permute.xlu0 %2976
    %2980 = vset.pattern.permute.xlu0 0
    %2981 = vperm.xlu0 %2980, %v2850
    %v2982 = vpop.permute.xlu0 %2981
    %2985 = vset.pattern.permute.xlu0 0
    %2986 = vperm.xlu0 %2985, %v2852
    %v2987 = vpop.permute.xlu0 %2986
    %2990 = vset.pattern.permute.xlu0 0
    %2991 = vperm.xlu0 %2990, %v2854
    %v2992 = vpop.permute.xlu0 %2991
    %2995 = vset.pattern.permute.xlu0 0
    %2996 = vperm.xlu0 %2995, %v2856
    %v2997 = vpop.permute.xlu0 %2996
    %3000 = vset.pattern.permute.xlu0 0
    %3001 = vperm.xlu0 %3000, %v2858
    %v3002 = vpop.permute.xlu0 %3001
    %3005 = vset.pattern.permute.xlu0 0
    %3006 = vperm.xlu0 %3005, %v2860
    %v3007 = vpop.permute.xlu0 %3006
    %3010 = vset.pattern.permute.xlu0 0
    %3011 = vperm.xlu0 %3010, %v2862
    %v3012 = vpop.permute.xlu0 %3011
    %3015 = vset.pattern.permute.xlu0 0
    %3016 = vperm.xlu0 %3015, %v2864
    %v3017 = vpop.permute.xlu0 %3016
    %3020 = vset.pattern.permute.xlu0 0
    %3021 = vperm.xlu0 %3020, %v2866
    %v3022 = vpop.permute.xlu0 %3021
    %3025 = vset.pattern.permute.xlu0 0
    %3026 = vperm.xlu0 %3025, %v2868
    %v3027 = vpop.permute.xlu0 %3026
    %3030 = vset.pattern.permute.xlu0 0
    %3031 = vperm.xlu0 %3030, %v2870
    %v3032 = vpop.permute.xlu0 %3031
    %3035 = vset.pattern.permute.xlu0 0
    %3036 = vperm.xlu0 %3035, %v2872
    %v3037 = vpop.permute.xlu0 %3036
    %3040 = vset.pattern.permute.xlu0 0
    %3041 = vperm.xlu0 %3040, %v2874
    %v3042 = vpop.permute.xlu0 %3041
    %3045 = vset.pattern.permute.xlu0 0
    %3046 = vperm.xlu0 %3045, %v2876
    %v3047 = vpop.permute.xlu0 %3046
    %3050 = vset.pattern.permute.xlu0 0
    %3051 = vperm.xlu0 %3050, %v2878
    %v3052 = vpop.permute.xlu0 %3051
    %3055 = vset.pattern.permute.xlu0 0
    %3056 = vperm.xlu0 %3055, %v2880
    %v3057 = vpop.permute.xlu0 %3056
    %3060 = vset.pattern.permute.xlu0 0
    %3061 = vperm.xlu0 %3060, %v2882
    %v3062 = vpop.permute.xlu0 %3061
    %3065 = vset.pattern.permute.xlu0 0
    %3066 = vperm.xlu0 %3065, %v2884
    %v3067 = vpop.permute.xlu0 %3066
    %3070 = vset.pattern.permute.xlu0 0
    %3071 = vperm.xlu0 %3070, %v2886
    %v3072 = vpop.permute.xlu0 %3071
    %3075 = vset.pattern.permute.xlu0 0
    %3076 = vperm.xlu0 %3075, %v2888
    %v3077 = vpop.permute.xlu0 %3076
    %3080 = vset.pattern.permute.xlu0 0
    %3081 = vperm.xlu0 %3080, %v2890
    %v3082 = vpop.permute.xlu0 %3081
    %3085 = vset.pattern.permute.xlu0 0
    %3086 = vperm.xlu0 %3085, %v2892
    %v3087 = vpop.permute.xlu0 %3086
    %v3089 = vmul.f32 %v2932, %v2897
    %v3090 = vmul.f32 %v2937, %v2898
    %v3091 = vmul.f32 %v2942, %v2899
    %v3092 = vmul.f32 %v2947, %v2900
    %v3093 = vmul.f32 %v2952, %v2901
    %v3094 = vmul.f32 %v2957, %v2902
    %v3095 = vmul.f32 %v2962, %v2903
    %v3096 = vmul.f32 %v2967, %v2904
    %v3097 = vmul.f32 %v2972, %v2905
    %v3098 = vmul.f32 %v2977, %v2906
    %v3099 = vmul.f32 %v2982, %v2907
    %v3100 = vmul.f32 %v2987, %v2908
    %v3101 = vmul.f32 %v2992, %v2909
    %v3102 = vmul.f32 %v2997, %v2910
    %v3103 = vmul.f32 %v3002, %v2911
    %v3104 = vmul.f32 %v3007, %v2912
    %v3105 = vmul.f32 %v3012, %v2913
    %v3106 = vmul.f32 %v3017, %v2914
    %v3107 = vmul.f32 %v3022, %v2915
    %v3108 = vmul.f32 %v3027, %v2916
    %v3109 = vmul.f32 %v3032, %v2917
    %v3110 = vmul.f32 %v3037, %v2918
    %v3111 = vmul.f32 %v3042, %v2919
    %v3112 = vmul.f32 %v3047, %v2920
    %v3113 = vmul.f32 %v3052, %v2921
    %v3114 = vmul.f32 %v3057, %v2922
    %v3115 = vmul.f32 %v3062, %v2923
    %v3116 = vmul.f32 %v3067, %v2924
    %v3117 = vmul.f32 %v3072, %v2925
    %v3118 = vmul.f32 %v3077, %v2926
    %v3119 = vmul.f32 %v3082, %v2927
    %v3120 = vmul.f32 %v3087, %v2928
    %3121 = vmatprep.subr.mxu0 0.0
    %3122 = vmatpush1.msra.mxu0 %v3089
    %3123 = vmatprep.subr.mxu0 0.0
    %3124 = vmatpush1.msra.mxu0 %v3090
    %3125 = vmatprep.subr.mxu0 0.0
    %3126 = vmatpush1.msra.mxu0 %v3091
    %3127 = vmatprep.subr.mxu0 0.0
    %3128 = vmatpush1.msra.mxu0 %v3092
    %3129 = vmatprep.subr.mxu0 0.0
    %3130 = vmatpush1.msra.mxu0 %v3093
    %3131 = vmatprep.subr.mxu0 0.0
    %3132 = vmatpush1.msra.mxu0 %v3094
    %3133 = vmatprep.subr.mxu0 0.0
    %3134 = vmatpush1.msra.mxu0 %v3095
    %3135 = vmatprep.subr.mxu0 0.0
    %3136 = vmatpush1.msra.mxu0 %v3096
    %3137 = vmatprep.subr.mxu0 0.0
    %3138 = vmatpush1.msra.mxu0 %v3097
    %3139 = vmatprep.subr.mxu0 0.0
    %3140 = vmatpush1.msra.mxu0 %v3098
    %3141 = vmatprep.subr.mxu0 0.0
    %3142 = vmatpush1.msra.mxu0 %v3099
    %3143 = vmatprep.subr.mxu0 0.0
    %3144 = vmatpush1.msra.mxu0 %v3100
    %3145 = vmatprep.subr.mxu0 0.0
    %3146 = vmatpush1.msra.mxu0 %v3101
    %3147 = vmatprep.subr.mxu0 0.0
    %3148 = vmatpush1.msra.mxu0 %v3102
    %3149 = vmatprep.subr.mxu0 0.0
    %3150 = vmatpush1.msra.mxu0 %v3103
    %3151 = vmatprep.subr.mxu0 0.0
    %3152 = vmatpush1.msra.mxu0 %v3104
    %3153 = vmatprep.subr.mxu0 0.0
    %3154 = vmatpush1.msra.mxu0 %v3105
    %3155 = vmatprep.subr.mxu0 0.0
    %3156 = vmatpush1.msra.mxu0 %v3106
    %3157 = vmatprep.subr.mxu0 0.0
    %3158 = vmatpush1.msra.mxu0 %v3107
    %3159 = vmatprep.subr.mxu0 0.0
    %3160 = vmatpush1.msra.mxu0 %v3108
    %3161 = vmatprep.subr.mxu0 0.0
    %3162 = vmatpush1.msra.mxu0 %v3109
    %3163 = vmatprep.subr.mxu0 0.0
    %3164 = vmatpush1.msra.mxu0 %v3110
    %3165 = vmatprep.subr.mxu0 0.0
    %3166 = vmatpush1.msra.mxu0 %v3111
    %3167 = vmatprep.subr.mxu0 0.0
    %3168 = vmatpush1.msra.mxu0 %v3112
    %3169 = vmatprep.subr.mxu0 0.0
    %3170 = vmatpush1.msra.mxu0 %v3113
    %3171 = vmatprep.subr.mxu0 0.0
    %3172 = vmatpush1.msra.mxu0 %v3114
    %3173 = vmatprep.subr.mxu0 0.0
    %3174 = vmatpush1.msra.mxu0 %v3115
    %3175 = vmatprep.subr.mxu0 0.0
    %3176 = vmatpush1.msra.mxu0 %v3116
    %3177 = vmatprep.subr.mxu0 0.0
    %3178 = vmatpush1.msra.mxu0 %v3117
    %3179 = vmatprep.subr.mxu0 0.0
    %3180 = vmatpush1.msra.mxu0 %v3118
    %3181 = vmatprep.subr.mxu0 0.0
    %3182 = vmatpush1.msra.mxu0 %v3119
    %3183 = vmatprep.subr.mxu0 0.0
    %3184 = vmatpush1.msra.mxu0 %v3120
    %3185 = vmatprep.mubr.f32.mxu0 %v2894
    %3186 = vmatmul.mubr.f32.gmra.mrb[0].mxu0 %v2893
    %v3187 = vpop.f32.mrb[0].mxu0
    %v3188 = vadd.f32 0.0, %v3187
    %v3189 = vpop.f32.mrb[0].mxu0
    %3190 = vmatprep.mubr.f32.mxu0 %v2896
    %3191 = vmatmul.mubr.f32.gmra.mrb[0].mxu0 %v2895
    %v3192 = vpop.f32.mrb[0].mxu0
    %v3193 = vadd.f32 0.0, %v3192
    %v3194 = vpop.f32.mrb[0].mxu0
    %3195 = vdwg.mxu0
    %vm3196 = vcmask 130048
    %v3197 = vsel %vm3196, %v3188, 0.0
    %3198 = vadd.xlane.f32.xlu0 %v3197
    %v3199 = vpop.xlane.xlu0 %3198
    %v3200 = vsel %vm3196, %v3193, 0.0
    %3201 = vadd.xlane.f32.xlu0 %v3200
    %v3202 = vpop.xlane.xlu0 %3201
    %v3204 = vsel %vm3196, %v3188, 0
    %v3207 = vsel %vm3196, %v3193, 0
    %3209 = vmatprep.subr.mxu0 0.0
    %3210 = vmatpush1.msra.mxu0 %v1638
    %3211 = vmatprep.subr.mxu0 0.0
    %3212 = vmatpush1.msra.mxu0 %v1639
    %3213 = vmatprep.subr.mxu0 0.0
    %3214 = vmatpush1.msra.mxu0 0.0
    %3215 = vmatprep.subr.mxu0 0.0
    %3216 = vmatpush1.msra.mxu0 0.0
    %3217 = vmatprep.subr.mxu0 0.0
    %3218 = vmatpush1.msra.mxu0 0.0
    %3219 = vmatprep.subr.mxu0 0.0
    %3220 = vmatpush1.msra.mxu0 0.0
    %3221 = vmatprep.subr.mxu0 0.0
    %3222 = vmatpush1.msra.mxu0 0.0
    %3223 = vmatprep.subr.mxu0 0.0
    %3224 = vmatpush1.msra.mxu0 0.0
    %3225 = vmatprep.subr.mxu0 0.0
    %3226 = vmatpush1.msra.mxu0 0.0
    %3227 = vmatprep.subr.mxu0 0.0
    %3228 = vmatpush1.msra.mxu0 0.0
    %3229 = vmatprep.subr.mxu0 0.0
    %3230 = vmatpush1.msra.mxu0 0.0
    %3231 = vmatprep.subr.mxu0 0.0
    %3232 = vmatpush1.msra.mxu0 0.0
    %3233 = vmatprep.subr.mxu0 0.0
    %3234 = vmatpush1.msra.mxu0 0.0
    %3235 = vmatprep.subr.mxu0 0.0
    %3236 = vmatpush1.msra.mxu0 0.0
    %3237 = vmatprep.subr.mxu0 0.0
    %3238 = vmatpush1.msra.mxu0 0.0
    %3239 = vmatprep.subr.mxu0 0.0
    %3240 = vmatpush1.msra.mxu0 0.0
    %3241 = vmatprep.subr.mxu0 0.0
    %3242 = vmatpush1.msra.mxu0 0.0
    %3243 = vmatprep.subr.mxu0 0.0
    %3244 = vmatpush1.msra.mxu0 0.0
    %3245 = vmatprep.subr.mxu0 0.0
    %3246 = vmatpush1.msra.mxu0 0.0
    %3247 = vmatprep.subr.mxu0 0.0
    %3248 = vmatpush1.msra.mxu0 0.0
    %3249 = vmatprep.subr.mxu0 0.0
    %3250 = vmatpush1.msra.mxu0 0.0
    %3251 = vmatprep.subr.mxu0 0.0
    %3252 = vmatpush1.msra.mxu0 0.0
    %3253 = vmatprep.subr.mxu0 0.0
    %3254 = vmatpush1.msra.mxu0 0.0
    %3255 = vmatprep.subr.mxu0 0.0
    %3256 = vmatpush1.msra.mxu0 0.0
    %3257 = vmatprep.subr.mxu0 0.0
    %3258 = vmatpush1.msra.mxu0 0.0
    %3259 = vmatprep.subr.mxu0 0.0
    %3260 = vmatpush1.msra.mxu0 0.0
    %3261 = vmatprep.subr.mxu0 0.0
    %3262 = vmatpush1.msra.mxu0 0.0
    %3263 = vmatprep.subr.mxu0 0.0
    %3264 = vmatpush1.msra.mxu0 0.0
    %3265 = vmatprep.subr.mxu0 0.0
    %3266 = vmatpush1.msra.mxu0 0.0
    %3267 = vmatprep.subr.mxu0 0.0
    %3268 = vmatpush1.msra.mxu0 0.0
    %3269 = vmatprep.subr.mxu0 0.0
    %3270 = vmatpush1.msra.mxu0 0.0
    %3271 = vmatprep.subr.mxu0 0.0
    %3272 = vmatpush1.msra.mxu0 0.0
    %3273 = vmatprep.mubr.f32.mxu0 0.0
    %3274 = vmatmul.mubr.f32.gmra.mrb[0].mxu0 %v3204
    %v3275 = vpop.f32.mrb[0].mxu0
    %v3276 = vadd.f32 0.0, %v3275
    %v3277 = vpop.f32.mrb[0].mxu0
    %3278 = vmatprep.mubr.f32.mxu0 0.0
    %3279 = vmatmul.mubr.f32.gmra.mrb[0].mxu0 %v3207
    %v3280 = vpop.f32.mrb[0].mxu0
    %v3281 = vadd.f32 0.0, %v3280
    %v3282 = vpop.f32.mrb[0].mxu0
    %3283 = vdwg.mxu0
    %v3284 = vmul.f32 %v3276, %v1640
    %v3285 = vmul.f32 %v3281, %v1641
    %v3286 = vsel %vm217, %v3284, 0.0
    %3287 = vadd.xlane.f32.xlu0 %v3286
    %v3288 = vpop.xlane.xlu0 %3287
    %v3289 = vsel %vm217, %v3285, 0.0
    %3290 = vadd.xlane.f32.xlu0 %v3289
    %v3291 = vpop.xlane.xlu0 %3290
    %v3292 = vadd.f32 %v3199, 1e-30
    %v3293 = vadd.f32 %v3202, 1e-30
    %v3294 = vrcp.pop %v3292
    %v3295 = vmul.f32 %v3288, %v3294
    %v3296 = vrcp.pop %v3293
    %v3297 = vmul.f32 %v3291, %v3296
    %v3298 = vadd.f32 %v3295, %v3297
    %v3299 = vrot.slane %v3298, 4
    %v3300 = vadd.f32 %v3298, %v3299
    %v3301 = vrot.slane %v3300, 2
    %v3302 = vadd.f32 %v3300, %v3301
    %v3303 = vrot.slane %v3302, 1
    %v3304 = vadd.f32 %v3302, %v3303
    %v3305 = vld [vmem:[%s61] sm:$0xff]
    %v3306 = vld [vmem:[%s61 + $0x8] sm:$0xff]
    %v3307 = vld [vmem:[%s61 + $0x10] sm:$0xff]
    %v3308 = vld [vmem:[%s61 + $0x18] sm:$0xff]
    %3309 = vmatprep.subr.mxu0 0.0
    %3310 = vmatpush1.msra.mxu0 %v3305
    %3311 = vmatprep.subr.mxu0 0.0
    %3312 = vmatpush1.msra.mxu0 %v3306
    %3313 = vmatprep.subr.mxu0 0.0
    %3314 = vmatpush1.msra.mxu0 %v3307
    %3315 = vmatprep.subr.mxu0 0.0
    %3316 = vmatpush1.msra.mxu0 %v3308
    %3317 = vmatprep.subr.mxu0 0.0
    %3318 = vmatpush1.msra.mxu0 0.0
    %3319 = vmatprep.subr.mxu0 0.0
    %3320 = vmatpush1.msra.mxu0 0.0
    %3321 = vmatprep.subr.mxu0 0.0
    %3322 = vmatpush1.msra.mxu0 0.0
    %3323 = vmatprep.subr.mxu0 0.0
    %3324 = vmatpush1.msra.mxu0 0.0
    %3325 = vmatprep.subr.mxu0 0.0
    %3326 = vmatpush1.msra.mxu0 0.0
    %3327 = vmatprep.subr.mxu0 0.0
    %3328 = vmatpush1.msra.mxu0 0.0
    %3329 = vmatprep.subr.mxu0 0.0
    %3330 = vmatpush1.msra.mxu0 0.0
    %3331 = vmatprep.subr.mxu0 0.0
    %3332 = vmatpush1.msra.mxu0 0.0
    %3333 = vmatprep.subr.mxu0 0.0
    %3334 = vmatpush1.msra.mxu0 0.0
    %3335 = vmatprep.subr.mxu0 0.0
    %3336 = vmatpush1.msra.mxu0 0.0
    %3337 = vmatprep.subr.mxu0 0.0
    %3338 = vmatpush1.msra.mxu0 0.0
    %3339 = vmatprep.subr.mxu0 0.0
    %3340 = vmatpush1.msra.mxu0 0.0
    %3341 = vmatprep.subr.mxu0 0.0
    %3342 = vmatpush1.msra.mxu0 0.0
    %3343 = vmatprep.subr.mxu0 0.0
    %3344 = vmatpush1.msra.mxu0 0.0
    %3345 = vmatprep.subr.mxu0 0.0
    %3346 = vmatpush1.msra.mxu0 0.0
    %3347 = vmatprep.subr.mxu0 0.0
    %3348 = vmatpush1.msra.mxu0 0.0
    %3349 = vmatprep.subr.mxu0 0.0
    %3350 = vmatpush1.msra.mxu0 0.0
    %3351 = vmatprep.subr.mxu0 0.0
    %3352 = vmatpush1.msra.mxu0 0.0
    %3353 = vmatprep.subr.mxu0 0.0
    %3354 = vmatpush1.msra.mxu0 0.0
    %3355 = vmatprep.subr.mxu0 0.0
    %3356 = vmatpush1.msra.mxu0 0.0
    %3357 = vmatprep.subr.mxu0 0.0
    %3358 = vmatpush1.msra.mxu0 0.0
    %3359 = vmatprep.subr.mxu0 0.0
    %3360 = vmatpush1.msra.mxu0 0.0
    %3361 = vmatprep.subr.mxu0 0.0
    %3362 = vmatpush1.msra.mxu0 0.0
    %3363 = vmatprep.subr.mxu0 0.0
    %3364 = vmatpush1.msra.mxu0 0.0
    %3365 = vmatprep.subr.mxu0 0.0
    %3366 = vmatpush1.msra.mxu0 0.0
    %3367 = vmatprep.subr.mxu0 0.0
    %3368 = vmatpush1.msra.mxu0 0.0
    %3369 = vmatprep.subr.mxu0 0.0
    %3370 = vmatpush1.msra.mxu0 0.0
    %3371 = vmatprep.subr.mxu0 0.0
    %3372 = vmatpush1.msra.mxu0 0.0
    %3373 = vmatprep.mubr.f32.mxu0 0.0
    %3374 = vmatmul.mubr.f32.gmra.mrb[0].mxu0 %v1647
    %v3375 = vpop.f32.mrb[0].mxu0
    %v3376 = vadd.f32 0.0, %v3375
    %v3377 = vpop.f32.mrb[0].mxu0
    %3378 = vmatprep.mubr.f32.mxu0 0.0
    %3379 = vmatmul.mubr.f32.gmra.mrb[0].mxu0 %v1650
    %v3380 = vpop.f32.mrb[0].mxu0
    %v3381 = vadd.f32 0.0, %v3380
    %v3382 = vpop.f32.mrb[0].mxu0
    %3383 = vdwg.mxu0
    %v3384 = vsel %vm217, %v3376, 0.0
    %v3385 = vsel %vm217, %v3381, 0.0
    %v3386 = vadd.f32 %v3384, %v3385
    %v3387 = vrot.slane %v3386, 4
    %v3388 = vadd.f32 %v3386, %v3387
    %v3389 = vrot.slane %v3388, 2
    %v3390 = vadd.f32 %v3388, %v3389
    %v3391 = vrot.slane %v3390, 1
    %v3392 = vadd.f32 %v3390, %v3391
    %v3393 = vmul.f32 %v3392, 0.083333336
    %v3394 = vtanh.pop %v3393
    %v3395 = vmul.f32 %v1638, %v3394
    %v3396 = vmul.f32 %v1639, %v3394
    %v3397 = vsel %vm217, %v3395, 0.0
    %3398 = vadd.xlane.f32.xlu0 %v3397
    %v3399 = vpop.xlane.xlu0 %3398
    %v3400 = vsel %vm217, %v3396, 0.0
    %3401 = vadd.xlane.f32.xlu0 %v3400
    %v3402 = vpop.xlane.xlu0 %3401
    %v3403 = vxor.u32 %v3399, 2147483648
    %v3404 = vxor.u32 %v3402, 2147483648
    %v3405 = vmul.f32 %v3403, 1.442695
    %v3406 = vpow.pop %v3405
    %v3407 = vmul.f32 %v3404, 1.442695
    %v3408 = vpow.pop %v3407
    %v3409 = vadd.f32 %v3406, 1.0
    %v3410 = vadd.f32 %v3408, 1.0
    %v3411 = vrcp.pop %v3409
    %v3412 = vmul.f32 1.0, %v3411
    %v3413 = vrcp.pop %v3410
    %v3414 = vmul.f32 1.0, %v3413
    %v3415 = vmul.f32 %v3412, %v1638
    %v3416 = vmul.f32 %v3414, %v1639
    %v3417 = vsel %vm217, %v3415, 0.0
    %v3418 = vsel %vm217, %v3416, 0.0
    %v3419 = vadd.f32 %v3417, %v3418
    %v3420 = vrot.slane %v3419, 4
    %v3421 = vadd.f32 %v3419, %v3420
    %v3422 = vrot.slane %v3421, 2
    %v3423 = vadd.f32 %v3421, %v3422
    %v3424 = vrot.slane %v3423, 1
    %v3425 = vadd.f32 %v3423, %v3424
    %3426 = vmatprep.subr.mxu0 0.0
    %3427 = vmatpush1.msra.mxu0 %v3305
    %3428 = vmatprep.subr.mxu0 0.0
    %3429 = vmatpush1.msra.mxu0 %v3306
    %3430 = vmatprep.subr.mxu0 0.0
    %3431 = vmatpush1.msra.mxu0 %v3307
    %3432 = vmatprep.subr.mxu0 0.0
    %3433 = vmatpush1.msra.mxu0 %v3308
    %3434 = vmatprep.subr.mxu0 0.0
    %3435 = vmatpush1.msra.mxu0 0.0
    %3436 = vmatprep.subr.mxu0 0.0
    %3437 = vmatpush1.msra.mxu0 0.0
    %3438 = vmatprep.subr.mxu0 0.0
    %3439 = vmatpush1.msra.mxu0 0.0
    %3440 = vmatprep.subr.mxu0 0.0
    %3441 = vmatpush1.msra.mxu0 0.0
    %3442 = vmatprep.subr.mxu0 0.0
    %3443 = vmatpush1.msra.mxu0 0.0
    %3444 = vmatprep.subr.mxu0 0.0
    %3445 = vmatpush1.msra.mxu0 0.0
    %3446 = vmatprep.subr.mxu0 0.0
    %3447 = vmatpush1.msra.mxu0 0.0
    %3448 = vmatprep.subr.mxu0 0.0
    %3449 = vmatpush1.msra.mxu0 0.0
    %3450 = vmatprep.subr.mxu0 0.0
    %3451 = vmatpush1.msra.mxu0 0.0
    %3452 = vmatprep.subr.mxu0 0.0
    %3453 = vmatpush1.msra.mxu0 0.0
    %3454 = vmatprep.subr.mxu0 0.0
    %3455 = vmatpush1.msra.mxu0 0.0
    %3456 = vmatprep.subr.mxu0 0.0
    %3457 = vmatpush1.msra.mxu0 0.0
    %3458 = vmatprep.subr.mxu0 0.0
    %3459 = vmatpush1.msra.mxu0 0.0
    %3460 = vmatprep.subr.mxu0 0.0
    %3461 = vmatpush1.msra.mxu0 0.0
    %3462 = vmatprep.subr.mxu0 0.0
    %3463 = vmatpush1.msra.mxu0 0.0
    %3464 = vmatprep.subr.mxu0 0.0
    %3465 = vmatpush1.msra.mxu0 0.0
    %3466 = vmatprep.subr.mxu0 0.0
    %3467 = vmatpush1.msra.mxu0 0.0
    %3468 = vmatprep.subr.mxu0 0.0
    %3469 = vmatpush1.msra.mxu0 0.0
    %3470 = vmatprep.subr.mxu0 0.0
    %3471 = vmatpush1.msra.mxu0 0.0
    %3472 = vmatprep.subr.mxu0 0.0
    %3473 = vmatpush1.msra.mxu0 0.0
    %3474 = vmatprep.subr.mxu0 0.0
    %3475 = vmatpush1.msra.mxu0 0.0
    %3476 = vmatprep.subr.mxu0 0.0
    %3477 = vmatpush1.msra.mxu0 0.0
    %3478 = vmatprep.subr.mxu0 0.0
    %3479 = vmatpush1.msra.mxu0 0.0
    %3480 = vmatprep.subr.mxu0 0.0
    %3481 = vmatpush1.msra.mxu0 0.0
    %3482 = vmatprep.subr.mxu0 0.0
    %3483 = vmatpush1.msra.mxu0 0.0
    %3484 = vmatprep.subr.mxu0 0.0
    %3485 = vmatpush1.msra.mxu0 0.0
    %3486 = vmatprep.subr.mxu0 0.0
    %3487 = vmatpush1.msra.mxu0 0.0
    %3488 = vmatprep.subr.mxu0 0.0
    %3489 = vmatpush1.msra.mxu0 0.0
    %3490 = vmatprep.mubr.f32.mxu0 0.0
    %3491 = vmatmul.mubr.f32.gmra.mrb[0].mxu0 %v1653
    %v3492 = vpop.f32.mrb[0].mxu0
    %v3493 = vadd.f32 0.0, %v3492
    %v3494 = vpop.f32.mrb[0].mxu0
    %3495 = vmatprep.mubr.f32.mxu0 0.0
    %3496 = vmatmul.mubr.f32.gmra.mrb[0].mxu0 %v1656
    %v3497 = vpop.f32.mrb[0].mxu0
    %v3498 = vadd.f32 0.0, %v3497
    %v3499 = vpop.f32.mrb[0].mxu0
    %3500 = vdwg.mxu0
    %v3501 = vsel %vm217, %v3493, 0.0
    %v3502 = vsel %vm217, %v3498, 0.0
    %v3503 = vadd.f32 %v3501, %v3502
    %v3504 = vrot.slane %v3503, 4
    %v3505 = vadd.f32 %v3503, %v3504
    %v3506 = vrot.slane %v3505, 2
    %v3507 = vadd.f32 %v3505, %v3506
    %v3508 = vrot.slane %v3507, 1
    %v3509 = vadd.f32 %v3507, %v3508
    %v3510 = vmul.f32 %v3509, 0.083333336
    %v3511 = vtanh.pop %v3510
    %v3512 = vmul.f32 %v1640, %v3511
    %v3513 = vmul.f32 %v1641, %v3511
    %v3514 = vsel %vm217, %v3512, 0.0
    %3515 = vadd.xlane.f32.xlu0 %v3514
    %v3516 = vpop.xlane.xlu0 %3515
    %v3517 = vsel %vm217, %v3513, 0.0
    %3518 = vadd.xlane.f32.xlu0 %v3517
    %v3519 = vpop.xlane.xlu0 %3518
    %v3520 = vxor.u32 %v3516, 2147483648
    %v3521 = vxor.u32 %v3519, 2147483648
    %v3522 = vmul.f32 %v3520, 1.442695
    %v3523 = vpow.pop %v3522
    %v3524 = vmul.f32 %v3521, 1.442695
    %v3525 = vpow.pop %v3524
    %v3526 = vadd.f32 %v3523, 1.0
    %v3527 = vadd.f32 %v3525, 1.0
    %v3528 = vrcp.pop %v3526
    %v3529 = vmul.f32 1.0, %v3528
    %v3530 = vrcp.pop %v3527
    %v3531 = vmul.f32 1.0, %v3530
    %v3532 = vmul.f32 %v3529, %v1640
    %v3533 = vmul.f32 %v3531, %v1641
    %v3534 = vsel %vm217, %v3532, 0.0
    %v3535 = vsel %vm217, %v3533, 0.0
    %v3536 = vadd.f32 %v3534, %v3535
    %v3537 = vrot.slane %v3536, 4
    %v3538 = vadd.f32 %v3536, %v3537
    %v3539 = vrot.slane %v3538, 2
    %v3540 = vadd.f32 %v3538, %v3539
    %v3541 = vrot.slane %v3540, 1
    %v3542 = vadd.f32 %v3540, %v3541
    %v3543 = vld [vmem:[%s63] sm:$0xff]
    %v3544 = vld [vmem:[%s63 + $0x8] sm:$0xff]
    %v3545 = vld [vmem:[%s63 + $0x10] sm:$0xff]
    %v3546 = vld [vmem:[%s63 + $0x18] sm:$0xff]
    %v3547 = vld [vmem:[%s63 + $0x20] sm:$0xff]
    %v3548 = vld [vmem:[%s63 + $0x28] sm:$0xff]
    %v3549 = vld [vmem:[%s63 + $0x30] sm:$0xff]
    %v3550 = vld [vmem:[%s63 + $0x38] sm:$0xff]
    %v3551 = vld [vmem:[%s63 + $0x40] sm:$0xff]
    %v3552 = vld [vmem:[%s63 + $0x48] sm:$0xff]
    %v3553 = vld [vmem:[%s63 + $0x50] sm:$0xff]
    %v3554 = vld [vmem:[%s63 + $0x58] sm:$0xff]
    %v3555 = vld [vmem:[%s63 + $0x60] sm:$0xff]
    %v3556 = vld [vmem:[%s63 + $0x68] sm:$0xff]
    %v3557 = vld [vmem:[%s63 + $0x70] sm:$0xff]
    %v3558 = vld [vmem:[%s63 + $0x78] sm:$0xff]
    %v3560 = vsel %vm217, %v3425, 0
    %3562 = vmatprep.subr.mxu0 %v3544
    %3563 = vmatpush1.msra.mxu0 %v3543
    %3564 = vmatprep.subr.mxu0 %v3548
    %3565 = vmatpush1.msra.mxu0 %v3547
    %3566 = vmatprep.subr.mxu0 %v3552
    %3567 = vmatpush1.msra.mxu0 %v3551
    %3568 = vmatprep.subr.mxu0 %v3556
    %3569 = vmatpush1.msra.mxu0 %v3555
    %3570 = vmatprep.subr.mxu0 0.0
    %3571 = vmatpush1.msra.mxu0 0.0
    %3572 = vmatprep.subr.mxu0 0.0
    %3573 = vmatpush1.msra.mxu0 0.0
    %3574 = vmatprep.subr.mxu0 0.0
    %3575 = vmatpush1.msra.mxu0 0.0
    %3576 = vmatprep.subr.mxu0 0.0
    %3577 = vmatpush1.msra.mxu0 0.0
    %3578 = vmatprep.subr.mxu0 0.0
    %3579 = vmatpush1.msra.mxu0 0.0
    %3580 = vmatprep.subr.mxu0 0.0
    %3581 = vmatpush1.msra.mxu0 0.0
    %3582 = vmatprep.subr.mxu0 0.0
    %3583 = vmatpush1.msra.mxu0 0.0
    %3584 = vmatprep.subr.mxu0 0.0
    %3585 = vmatpush1.msra.mxu0 0.0
    %3586 = vmatprep.subr.mxu0 0.0
    %3587 = vmatpush1.msra.mxu0 0.0
    %3588 = vmatprep.subr.mxu0 0.0
    %3589 = vmatpush1.msra.mxu0 0.0
    %3590 = vmatprep.subr.mxu0 0.0
    %3591 = vmatpush1.msra.mxu0 0.0
    %3592 = vmatprep.subr.mxu0 0.0
    %3593 = vmatpush1.msra.mxu0 0.0
    %3594 = vmatprep.subr.mxu0 0.0
    %3595 = vmatpush1.msra.mxu0 0.0
    %3596 = vmatprep.subr.mxu0 0.0
    %3597 = vmatpush1.msra.mxu0 0.0
    %3598 = vmatprep.subr.mxu0 0.0
    %3599 = vmatpush1.msra.mxu0 0.0
    %3600 = vmatprep.subr.mxu0 0.0
    %3601 = vmatpush1.msra.mxu0 0.0
    %3602 = vmatprep.subr.mxu0 0.0
    %3603 = vmatpush1.msra.mxu0 0.0
    %3604 = vmatprep.subr.mxu0 0.0
    %3605 = vmatpush1.msra.mxu0 0.0
    %3606 = vmatprep.subr.mxu0 0.0
    %3607 = vmatpush1.msra.mxu0 0.0
    %3608 = vmatprep.subr.mxu0 0.0
    %3609 = vmatpush1.msra.mxu0 0.0
    %3610 = vmatprep.subr.mxu0 0.0
    %3611 = vmatpush1.msra.mxu0 0.0
    %3612 = vmatprep.subr.mxu0 0.0
    %3613 = vmatpush1.msra.mxu0 0.0
    %3614 = vmatprep.subr.mxu0 0.0
    %3615 = vmatpush1.msra.mxu0 0.0
    %3616 = vmatprep.subr.mxu0 0.0
    %3617 = vmatpush1.msra.mxu0 0.0
    %3618 = vmatprep.subr.mxu0 0.0
    %3619 = vmatpush1.msra.mxu0 0.0
    %3620 = vmatprep.subr.mxu0 0.0
    %3621 = vmatpush1.msra.mxu0 0.0
    %3622 = vmatprep.subr.mxu0 0.0
    %3623 = vmatpush1.msra.mxu0 0.0
    %3624 = vmatprep.subr.mxu0 0.0
    %3625 = vmatpush1.msra.mxu0 0.0
    %3626 = vmatprep.mubr.f32.mxu0 0.0
    %3627 = vmatmul.mubr.f32.gmra.mrb[0].mxu0 %v3560
    %v3628 = vpop.f32.mrb[0].mxu0
    %v3629 = vadd.f32 0.0, %v3628
    %v3630 = vpop.f32.mrb[0].mxu0
    %v3631 = vadd.f32 0.0, %v3630
    %3632 = vdwg.mxu0
    %3633 = vmatprep.subr.mxu0 %v3546
    %3634 = vmatpush1.msra.mxu0 %v3545
    %3635 = vmatprep.subr.mxu0 %v3550
    %3636 = vmatpush1.msra.mxu0 %v3549
    %3637 = vmatprep.subr.mxu0 %v3554
    %3638 = vmatpush1.msra.mxu0 %v3553
    %3639 = vmatprep.subr.mxu0 %v3558
    %3640 = vmatpush1.msra.mxu0 %v3557
    %3641 = vmatprep.subr.mxu0 0.0
    %3642 = vmatpush1.msra.mxu0 0.0
    %3643 = vmatprep.subr.mxu0 0.0
    %3644 = vmatpush1.msra.mxu0 0.0
    %3645 = vmatprep.subr.mxu0 0.0
    %3646 = vmatpush1.msra.mxu0 0.0
    %3647 = vmatprep.subr.mxu0 0.0
    %3648 = vmatpush1.msra.mxu0 0.0
    %3649 = vmatprep.subr.mxu0 0.0
    %3650 = vmatpush1.msra.mxu0 0.0
    %3651 = vmatprep.subr.mxu0 0.0
    %3652 = vmatpush1.msra.mxu0 0.0
    %3653 = vmatprep.subr.mxu0 0.0
    %3654 = vmatpush1.msra.mxu0 0.0
    %3655 = vmatprep.subr.mxu0 0.0
    %3656 = vmatpush1.msra.mxu0 0.0
    %3657 = vmatprep.subr.mxu0 0.0
    %3658 = vmatpush1.msra.mxu0 0.0
    %3659 = vmatprep.subr.mxu0 0.0
    %3660 = vmatpush1.msra.mxu0 0.0
    %3661 = vmatprep.subr.mxu0 0.0
    %3662 = vmatpush1.msra.mxu0 0.0
    %3663 = vmatprep.subr.mxu0 0.0
    %3664 = vmatpush1.msra.mxu0 0.0
    %3665 = vmatprep.subr.mxu0 0.0
    %3666 = vmatpush1.msra.mxu0 0.0
    %3667 = vmatprep.subr.mxu0 0.0
    %3668 = vmatpush1.msra.mxu0 0.0
    %3669 = vmatprep.subr.mxu0 0.0
    %3670 = vmatpush1.msra.mxu0 0.0
    %3671 = vmatprep.subr.mxu0 0.0
    %3672 = vmatpush1.msra.mxu0 0.0
    %3673 = vmatprep.subr.mxu0 0.0
    %3674 = vmatpush1.msra.mxu0 0.0
    %3675 = vmatprep.subr.mxu0 0.0
    %3676 = vmatpush1.msra.mxu0 0.0
    %3677 = vmatprep.subr.mxu0 0.0
    %3678 = vmatpush1.msra.mxu0 0.0
    %3679 = vmatprep.subr.mxu0 0.0
    %3680 = vmatpush1.msra.mxu0 0.0
    %3681 = vmatprep.subr.mxu0 0.0
    %3682 = vmatpush1.msra.mxu0 0.0
    %3683 = vmatprep.subr.mxu0 0.0
    %3684 = vmatpush1.msra.mxu0 0.0
    %3685 = vmatprep.subr.mxu0 0.0
    %3686 = vmatpush1.msra.mxu0 0.0
    %3687 = vmatprep.subr.mxu0 0.0
    %3688 = vmatpush1.msra.mxu0 0.0
    %3689 = vmatprep.subr.mxu0 0.0
    %3690 = vmatpush1.msra.mxu0 0.0
    %3691 = vmatprep.subr.mxu0 0.0
    %3692 = vmatpush1.msra.mxu0 0.0
    %3693 = vmatprep.subr.mxu0 0.0
    %3694 = vmatpush1.msra.mxu0 0.0
    %3695 = vmatprep.subr.mxu0 0.0
    %3696 = vmatpush1.msra.mxu0 0.0
    %3697 = vmatprep.mubr.f32.mxu0 0.0
    %3698 = vmatmul.mubr.f32.gmra.mrb[0].mxu0 %v3560
    %v3699 = vpop.f32.mrb[0].mxu0
    %v3700 = vadd.f32 0.0, %v3699
    %v3701 = vpop.f32.mrb[0].mxu0
    %v3702 = vadd.f32 0.0, %v3701
    %3703 = vdwg.mxu0
    %v3704 = vld [vmem:[%s65] sm:$0xff]
    %v3705 = vld [vmem:[%s65 + $0x8] sm:$0xff]
    %v3706 = vld [vmem:[%s65 + $0x10] sm:$0xff]
    %v3707 = vld [vmem:[%s65 + $0x18] sm:$0xff]
    %v3708 = vld [vmem:[%s65 + $0x20] sm:$0xff]
    %v3709 = vld [vmem:[%s65 + $0x28] sm:$0xff]
    %v3710 = vld [vmem:[%s65 + $0x30] sm:$0xff]
    %v3711 = vld [vmem:[%s65 + $0x38] sm:$0xff]
    %v3712 = vld [vmem:[%s65 + $0x40] sm:$0xff]
    %v3713 = vld [vmem:[%s65 + $0x48] sm:$0xff]
    %v3714 = vld [vmem:[%s65 + $0x50] sm:$0xff]
    %v3715 = vld [vmem:[%s65 + $0x58] sm:$0xff]
    %v3716 = vld [vmem:[%s65 + $0x60] sm:$0xff]
    %v3717 = vld [vmem:[%s65 + $0x68] sm:$0xff]
    %v3718 = vld [vmem:[%s65 + $0x70] sm:$0xff]
    %v3719 = vld [vmem:[%s65 + $0x78] sm:$0xff]
    %v3721 = vsel %vm217, %v3542, 0
    %3723 = vmatprep.subr.mxu0 %v3705
    %3724 = vmatpush1.msra.mxu0 %v3704
    %3725 = vmatprep.subr.mxu0 %v3709
    %3726 = vmatpush1.msra.mxu0 %v3708
    %3727 = vmatprep.subr.mxu0 %v3713
    %3728 = vmatpush1.msra.mxu0 %v3712
    %3729 = vmatprep.subr.mxu0 %v3717
    %3730 = vmatpush1.msra.mxu0 %v3716
    %3731 = vmatprep.subr.mxu0 0.0
    %3732 = vmatpush1.msra.mxu0 0.0
    %3733 = vmatprep.subr.mxu0 0.0
    %3734 = vmatpush1.msra.mxu0 0.0
    %3735 = vmatprep.subr.mxu0 0.0
    %3736 = vmatpush1.msra.mxu0 0.0
    %3737 = vmatprep.subr.mxu0 0.0
    %3738 = vmatpush1.msra.mxu0 0.0
    %3739 = vmatprep.subr.mxu0 0.0
    %3740 = vmatpush1.msra.mxu0 0.0
    %3741 = vmatprep.subr.mxu0 0.0
    %3742 = vmatpush1.msra.mxu0 0.0
    %3743 = vmatprep.subr.mxu0 0.0
    %3744 = vmatpush1.msra.mxu0 0.0
    %3745 = vmatprep.subr.mxu0 0.0
    %3746 = vmatpush1.msra.mxu0 0.0
    %3747 = vmatprep.subr.mxu0 0.0
    %3748 = vmatpush1.msra.mxu0 0.0
    %3749 = vmatprep.subr.mxu0 0.0
    %3750 = vmatpush1.msra.mxu0 0.0
    %3751 = vmatprep.subr.mxu0 0.0
    %3752 = vmatpush1.msra.mxu0 0.0
    %3753 = vmatprep.subr.mxu0 0.0
    %3754 = vmatpush1.msra.mxu0 0.0
    %3755 = vmatprep.subr.mxu0 0.0
    %3756 = vmatpush1.msra.mxu0 0.0
    %3757 = vmatprep.subr.mxu0 0.0
    %3758 = vmatpush1.msra.mxu0 0.0
    %3759 = vmatprep.subr.mxu0 0.0
    %3760 = vmatpush1.msra.mxu0 0.0
    %3761 = vmatprep.subr.mxu0 0.0
    %3762 = vmatpush1.msra.mxu0 0.0
    %3763 = vmatprep.subr.mxu0 0.0
    %3764 = vmatpush1.msra.mxu0 0.0
    %3765 = vmatprep.subr.mxu0 0.0
    %3766 = vmatpush1.msra.mxu0 0.0
    %3767 = vmatprep.subr.mxu0 0.0
    %3768 = vmatpush1.msra.mxu0 0.0
    %3769 = vmatprep.subr.mxu0 0.0
    %3770 = vmatpush1.msra.mxu0 0.0
    %3771 = vmatprep.subr.mxu0 0.0
    %3772 = vmatpush1.msra.mxu0 0.0
    %3773 = vmatprep.subr.mxu0 0.0
    %3774 = vmatpush1.msra.mxu0 0.0
    %3775 = vmatprep.subr.mxu0 0.0
    %3776 = vmatpush1.msra.mxu0 0.0
    %3777 = vmatprep.subr.mxu0 0.0
    %3778 = vmatpush1.msra.mxu0 0.0
    %3779 = vmatprep.subr.mxu0 0.0
    %3780 = vmatpush1.msra.mxu0 0.0
    %3781 = vmatprep.subr.mxu0 0.0
    %3782 = vmatpush1.msra.mxu0 0.0
    %3783 = vmatprep.subr.mxu0 0.0
    %3784 = vmatpush1.msra.mxu0 0.0
    %3785 = vmatprep.subr.mxu0 0.0
    %3786 = vmatpush1.msra.mxu0 0.0
    %3787 = vmatprep.mubr.f32.mxu0 0.0
    %3788 = vmatmul.mubr.f32.gmra.mrb[0].mxu0 %v3721
    %v3789 = vpop.f32.mrb[0].mxu0
    %v3790 = vadd.f32 0.0, %v3789
    %v3791 = vpop.f32.mrb[0].mxu0
    %v3792 = vadd.f32 0.0, %v3791
    %3793 = vdwg.mxu0
    %3794 = vmatprep.subr.mxu0 %v3707
    %3795 = vmatpush1.msra.mxu0 %v3706
    %3796 = vmatprep.subr.mxu0 %v3711
    %3797 = vmatpush1.msra.mxu0 %v3710
    %3798 = vmatprep.subr.mxu0 %v3715
    %3799 = vmatpush1.msra.mxu0 %v3714
    %3800 = vmatprep.subr.mxu0 %v3719
    %3801 = vmatpush1.msra.mxu0 %v3718
    %3802 = vmatprep.subr.mxu0 0.0
    %3803 = vmatpush1.msra.mxu0 0.0
    %3804 = vmatprep.subr.mxu0 0.0
    %3805 = vmatpush1.msra.mxu0 0.0
    %3806 = vmatprep.subr.mxu0 0.0
    %3807 = vmatpush1.msra.mxu0 0.0
    %3808 = vmatprep.subr.mxu0 0.0
    %3809 = vmatpush1.msra.mxu0 0.0
    %3810 = vmatprep.subr.mxu0 0.0
    %3811 = vmatpush1.msra.mxu0 0.0
    %3812 = vmatprep.subr.mxu0 0.0
    %3813 = vmatpush1.msra.mxu0 0.0
    %3814 = vmatprep.subr.mxu0 0.0
    %3815 = vmatpush1.msra.mxu0 0.0
    %3816 = vmatprep.subr.mxu0 0.0
    %3817 = vmatpush1.msra.mxu0 0.0
    %3818 = vmatprep.subr.mxu0 0.0
    %3819 = vmatpush1.msra.mxu0 0.0
    %3820 = vmatprep.subr.mxu0 0.0
    %3821 = vmatpush1.msra.mxu0 0.0
    %3822 = vmatprep.subr.mxu0 0.0
    %3823 = vmatpush1.msra.mxu0 0.0
    %3824 = vmatprep.subr.mxu0 0.0
    %3825 = vmatpush1.msra.mxu0 0.0
    %3826 = vmatprep.subr.mxu0 0.0
    %3827 = vmatpush1.msra.mxu0 0.0
    %3828 = vmatprep.subr.mxu0 0.0
    %3829 = vmatpush1.msra.mxu0 0.0
    %3830 = vmatprep.subr.mxu0 0.0
    %3831 = vmatpush1.msra.mxu0 0.0
    %3832 = vmatprep.subr.mxu0 0.0
    %3833 = vmatpush1.msra.mxu0 0.0
    %3834 = vmatprep.subr.mxu0 0.0
    %3835 = vmatpush1.msra.mxu0 0.0
    %3836 = vmatprep.subr.mxu0 0.0
    %3837 = vmatpush1.msra.mxu0 0.0
    %3838 = vmatprep.subr.mxu0 0.0
    %3839 = vmatpush1.msra.mxu0 0.0
    %3840 = vmatprep.subr.mxu0 0.0
    %3841 = vmatpush1.msra.mxu0 0.0
    %3842 = vmatprep.subr.mxu0 0.0
    %3843 = vmatpush1.msra.mxu0 0.0
    %3844 = vmatprep.subr.mxu0 0.0
    %3845 = vmatpush1.msra.mxu0 0.0
    %3846 = vmatprep.subr.mxu0 0.0
    %3847 = vmatpush1.msra.mxu0 0.0
    %3848 = vmatprep.subr.mxu0 0.0
    %3849 = vmatpush1.msra.mxu0 0.0
    %3850 = vmatprep.subr.mxu0 0.0
    %3851 = vmatpush1.msra.mxu0 0.0
    %3852 = vmatprep.subr.mxu0 0.0
    %3853 = vmatpush1.msra.mxu0 0.0
    %3854 = vmatprep.subr.mxu0 0.0
    %3855 = vmatpush1.msra.mxu0 0.0
    %3856 = vmatprep.subr.mxu0 0.0
    %3857 = vmatpush1.msra.mxu0 0.0
    %3858 = vmatprep.mubr.f32.mxu0 0.0
    %3859 = vmatmul.mubr.f32.gmra.mrb[0].mxu0 %v3721
    %v3860 = vpop.f32.mrb[0].mxu0
    %v3861 = vadd.f32 0.0, %v3860
    %v3862 = vpop.f32.mrb[0].mxu0
    %v3863 = vadd.f32 0.0, %v3862
    %3864 = vdwg.mxu0
    %v3865 = vmul.f32 %v3629, %v3790
    %v3866 = vmul.f32 %v3631, %v3792
    %v3867 = vmul.f32 %v3700, %v3861
    %v3868 = vmul.f32 %v3702, %v3863
    %v3869 = vld [vmem:[%s67] sm:$0xff]
    %v3870 = vld [vmem:[%s67 + $0x8] sm:$0xff]
    %v3871 = vld [vmem:[%s67 + $0x10] sm:$0xff]
    %v3872 = vld [vmem:[%s67 + $0x18] sm:$0xff]
    %v3873 = vld [vmem:[%s67 + $0x20] sm:$0xff]
    %v3874 = vld [vmem:[%s67 + $0x28] sm:$0xff]
    %v3875 = vld [vmem:[%s67 + $0x30] sm:$0xff]
    %v3876 = vld [vmem:[%s67 + $0x38] sm:$0xff]
    %v3877 = vld [vmem:[%s67 + $0x40] sm:$0xff]
    %v3878 = vld [vmem:[%s67 + $0x48] sm:$0xff]
    %v3879 = vld [vmem:[%s67 + $0x50] sm:$0xff]
    %v3880 = vld [vmem:[%s67 + $0x58] sm:$0xff]
    %v3881 = vld [vmem:[%s67 + $0x60] sm:$0xff]
    %v3882 = vld [vmem:[%s67 + $0x68] sm:$0xff]
    %v3883 = vld [vmem:[%s67 + $0x70] sm:$0xff]
    %v3884 = vld [vmem:[%s67 + $0x78] sm:$0xff]
    %v3885 = vld [vmem:[%s67 + $0x80] sm:$0xff]
    %v3886 = vld [vmem:[%s67 + $0x88] sm:$0xff]
    %v3887 = vld [vmem:[%s67 + $0x90] sm:$0xff]
    %v3888 = vld [vmem:[%s67 + $0x98] sm:$0xff]
    %v3889 = vld [vmem:[%s67 + $0xa0] sm:$0xff]
    %v3890 = vld [vmem:[%s67 + $0xa8] sm:$0xff]
    %v3891 = vld [vmem:[%s67 + $0xb0] sm:$0xff]
    %v3892 = vld [vmem:[%s67 + $0xb8] sm:$0xff]
    %v3893 = vld [vmem:[%s67 + $0xc0] sm:$0xff]
    %v3894 = vld [vmem:[%s67 + $0xc8] sm:$0xff]
    %v3895 = vld [vmem:[%s67 + $0xd0] sm:$0xff]
    %v3896 = vld [vmem:[%s67 + $0xd8] sm:$0xff]
    %v3897 = vld [vmem:[%s67 + $0xe0] sm:$0xff]
    %v3898 = vld [vmem:[%s67 + $0xe8] sm:$0xff]
    %v3899 = vld [vmem:[%s67 + $0xf0] sm:$0xff]
    %v3900 = vld [vmem:[%s67 + $0xf8] sm:$0xff]
    %v3901 = vld [vmem:[%s67 + $0x100] sm:$0xff]
    %v3902 = vld [vmem:[%s67 + $0x108] sm:$0xff]
    %v3903 = vld [vmem:[%s67 + $0x110] sm:$0xff]
    %v3904 = vld [vmem:[%s67 + $0x118] sm:$0xff]
    %v3905 = vld [vmem:[%s67 + $0x120] sm:$0xff]
    %v3906 = vld [vmem:[%s67 + $0x128] sm:$0xff]
    %v3907 = vld [vmem:[%s67 + $0x130] sm:$0xff]
    %v3908 = vld [vmem:[%s67 + $0x138] sm:$0xff]
    %v3909 = vld [vmem:[%s67 + $0x140] sm:$0xff]
    %v3910 = vld [vmem:[%s67 + $0x148] sm:$0xff]
    %v3911 = vld [vmem:[%s67 + $0x150] sm:$0xff]
    %v3912 = vld [vmem:[%s67 + $0x158] sm:$0xff]
    %v3913 = vld [vmem:[%s67 + $0x160] sm:$0xff]
    %v3914 = vld [vmem:[%s67 + $0x168] sm:$0xff]
    %v3915 = vld [vmem:[%s67 + $0x170] sm:$0xff]
    %v3916 = vld [vmem:[%s67 + $0x178] sm:$0xff]
    %v3917 = vld [vmem:[%s67 + $0x180] sm:$0xff]
    %v3918 = vld [vmem:[%s67 + $0x188] sm:$0xff]
    %v3919 = vld [vmem:[%s67 + $0x190] sm:$0xff]
    %v3920 = vld [vmem:[%s67 + $0x198] sm:$0xff]
    %v3921 = vld [vmem:[%s67 + $0x1a0] sm:$0xff]
    %v3922 = vld [vmem:[%s67 + $0x1a8] sm:$0xff]
    %v3923 = vld [vmem:[%s67 + $0x1b0] sm:$0xff]
    %v3924 = vld [vmem:[%s67 + $0x1b8] sm:$0xff]
    %v3925 = vld [vmem:[%s67 + $0x1c0] sm:$0xff]
    %v3926 = vld [vmem:[%s67 + $0x1c8] sm:$0xff]
    %v3927 = vld [vmem:[%s67 + $0x1d0] sm:$0xff]
    %v3928 = vld [vmem:[%s67 + $0x1d8] sm:$0xff]
    %v3929 = vld [vmem:[%s67 + $0x1e0] sm:$0xff]
    %v3930 = vld [vmem:[%s67 + $0x1e8] sm:$0xff]
    %v3931 = vld [vmem:[%s67 + $0x1f0] sm:$0xff]
    %v3932 = vld [vmem:[%s67 + $0x1f8] sm:$0xff]
    %v3933 = vld [vmem:[%s69] sm:$0xff]
    %v3934 = vld [vmem:[%s69 + $0x8] sm:$0xff]
    %v3935 = vld [vmem:[%s69 + $0x10] sm:$0xff]
    %v3936 = vld [vmem:[%s69 + $0x18] sm:$0xff]
    %v3937 = vld [vmem:[%s69 + $0x20] sm:$0xff]
    %v3938 = vld [vmem:[%s69 + $0x28] sm:$0xff]
    %v3939 = vld [vmem:[%s69 + $0x30] sm:$0xff]
    %v3940 = vld [vmem:[%s69 + $0x38] sm:$0xff]
    %3941 = vmatprep.subr.mxu0 0.0
    %3942 = vmatpush1.msra.mxu0 %v3937
    %3943 = vmatprep.subr.mxu0 0.0
    %3944 = vmatpush1.msra.mxu0 %v3938
    %3945 = vmatprep.subr.mxu0 0.0
    %3946 = vmatpush1.msra.mxu0 %v3939
    %3947 = vmatprep.subr.mxu0 0.0
    %3948 = vmatpush1.msra.mxu0 %v3940
    %3949 = vmatprep.subr.mxu0 0.0
    %3950 = vmatpush1.msra.mxu0 0.0
    %3951 = vmatprep.subr.mxu0 0.0
    %3952 = vmatpush1.msra.mxu0 0.0
    %3953 = vmatprep.subr.mxu0 0.0
    %3954 = vmatpush1.msra.mxu0 0.0
    %3955 = vmatprep.subr.mxu0 0.0
    %3956 = vmatpush1.msra.mxu0 0.0
    %3957 = vmatprep.subr.mxu0 0.0
    %3958 = vmatpush1.msra.mxu0 0.0
    %3959 = vmatprep.subr.mxu0 0.0
    %3960 = vmatpush1.msra.mxu0 0.0
    %3961 = vmatprep.subr.mxu0 0.0
    %3962 = vmatpush1.msra.mxu0 0.0
    %3963 = vmatprep.subr.mxu0 0.0
    %3964 = vmatpush1.msra.mxu0 0.0
    %3965 = vmatprep.subr.mxu0 0.0
    %3966 = vmatpush1.msra.mxu0 0.0
    %3967 = vmatprep.subr.mxu0 0.0
    %3968 = vmatpush1.msra.mxu0 0.0
    %3969 = vmatprep.subr.mxu0 0.0
    %3970 = vmatpush1.msra.mxu0 0.0
    %3971 = vmatprep.subr.mxu0 0.0
    %3972 = vmatpush1.msra.mxu0 0.0
    %3973 = vmatprep.subr.mxu0 0.0
    %3974 = vmatpush1.msra.mxu0 0.0
    %3975 = vmatprep.subr.mxu0 0.0
    %3976 = vmatpush1.msra.mxu0 0.0
    %3977 = vmatprep.subr.mxu0 0.0
    %3978 = vmatpush1.msra.mxu0 0.0
    %3979 = vmatprep.subr.mxu0 0.0
    %3980 = vmatpush1.msra.mxu0 0.0
    %3981 = vmatprep.subr.mxu0 0.0
    %3982 = vmatpush1.msra.mxu0 0.0
    %3983 = vmatprep.subr.mxu0 0.0
    %3984 = vmatpush1.msra.mxu0 0.0
    %3985 = vmatprep.subr.mxu0 0.0
    %3986 = vmatpush1.msra.mxu0 0.0
    %3987 = vmatprep.subr.mxu0 0.0
    %3988 = vmatpush1.msra.mxu0 0.0
    %3989 = vmatprep.subr.mxu0 0.0
    %3990 = vmatpush1.msra.mxu0 0.0
    %3991 = vmatprep.subr.mxu0 0.0
    %3992 = vmatpush1.msra.mxu0 0.0
    %3993 = vmatprep.subr.mxu0 0.0
    %3994 = vmatpush1.msra.mxu0 0.0
    %3995 = vmatprep.subr.mxu0 0.0
    %3996 = vmatpush1.msra.mxu0 0.0
    %3997 = vmatprep.subr.mxu0 0.0
    %3998 = vmatpush1.msra.mxu0 0.0
    %3999 = vmatprep.subr.mxu0 0.0
    %4000 = vmatpush1.msra.mxu0 0.0
    %4001 = vmatprep.subr.mxu0 0.0
    %4002 = vmatpush1.msra.mxu0 0.0
    %4003 = vmatprep.subr.mxu0 0.0
    %4004 = vmatpush1.msra.mxu0 0.0
    %4005 = vmatprep.mubr.f32.mxu0 0.0
    %4006 = vmatmul.mubr.f32.gmra.mrb[0].mxu0 %v3721
    %v4007 = vpop.f32.mrb[0].mxu0
    %v4008 = vadd.f32 0.0, %v4007
    %v4009 = vpop.f32.mrb[0].mxu0
    %4010 = vdwg.mxu0
    %4011 = vmatprep.subr.mxu0 0.0
    %4012 = vmatpush1.msra.mxu0 %v3933
    %4013 = vmatprep.subr.mxu0 0.0
    %4014 = vmatpush1.msra.mxu0 %v3934
    %4015 = vmatprep.subr.mxu0 0.0
    %4016 = vmatpush1.msra.mxu0 %v3935
    %4017 = vmatprep.subr.mxu0 0.0
    %4018 = vmatpush1.msra.mxu0 %v3936
    %4019 = vmatprep.subr.mxu0 0.0
    %4020 = vmatpush1.msra.mxu0 0.0
    %4021 = vmatprep.subr.mxu0 0.0
    %4022 = vmatpush1.msra.mxu0 0.0
    %4023 = vmatprep.subr.mxu0 0.0
    %4024 = vmatpush1.msra.mxu0 0.0
    %4025 = vmatprep.subr.mxu0 0.0
    %4026 = vmatpush1.msra.mxu0 0.0
    %4027 = vmatprep.subr.mxu0 0.0
    %4028 = vmatpush1.msra.mxu0 0.0
    %4029 = vmatprep.subr.mxu0 0.0
    %4030 = vmatpush1.msra.mxu0 0.0
    %4031 = vmatprep.subr.mxu0 0.0
    %4032 = vmatpush1.msra.mxu0 0.0
    %4033 = vmatprep.subr.mxu0 0.0
    %4034 = vmatpush1.msra.mxu0 0.0
    %4035 = vmatprep.subr.mxu0 0.0
    %4036 = vmatpush1.msra.mxu0 0.0
    %4037 = vmatprep.subr.mxu0 0.0
    %4038 = vmatpush1.msra.mxu0 0.0
    %4039 = vmatprep.subr.mxu0 0.0
    %4040 = vmatpush1.msra.mxu0 0.0
    %4041 = vmatprep.subr.mxu0 0.0
    %4042 = vmatpush1.msra.mxu0 0.0
    %4043 = vmatprep.subr.mxu0 0.0
    %4044 = vmatpush1.msra.mxu0 0.0
    %4045 = vmatprep.subr.mxu0 0.0
    %4046 = vmatpush1.msra.mxu0 0.0
    %4047 = vmatprep.subr.mxu0 0.0
    %4048 = vmatpush1.msra.mxu0 0.0
    %4049 = vmatprep.subr.mxu0 0.0
    %4050 = vmatpush1.msra.mxu0 0.0
    %4051 = vmatprep.subr.mxu0 0.0
    %4052 = vmatpush1.msra.mxu0 0.0
    %4053 = vmatprep.subr.mxu0 0.0
    %4054 = vmatpush1.msra.mxu0 0.0
    %4055 = vmatprep.subr.mxu0 0.0
    %4056 = vmatpush1.msra.mxu0 0.0
    %4057 = vmatprep.subr.mxu0 0.0
    %4058 = vmatpush1.msra.mxu0 0.0
    %4059 = vmatprep.subr.mxu0 0.0
    %4060 = vmatpush1.msra.mxu0 0.0
    %4061 = vmatprep.subr.mxu0 0.0
    %4062 = vmatpush1.msra.mxu0 0.0
    %4063 = vmatprep.subr.mxu0 0.0
    %4064 = vmatpush1.msra.mxu0 0.0
    %4065 = vmatprep.subr.mxu0 0.0
    %4066 = vmatpush1.msra.mxu0 0.0
    %4067 = vmatprep.subr.mxu0 0.0
    %4068 = vmatpush1.msra.mxu0 0.0
    %4069 = vmatprep.subr.mxu0 0.0
    %4070 = vmatpush1.msra.mxu0 0.0
    %4071 = vmatprep.subr.mxu0 0.0
    %4072 = vmatpush1.msra.mxu0 0.0
    %4073 = vmatprep.subr.mxu0 0.0
    %4074 = vmatpush1.msra.mxu0 0.0
    %4075 = vmatprep.mubr.f32.mxu0 0.0
    %4076 = vmatmul.mubr.f32.gmra.mrb[0].mxu0 %v3560
    %v4077 = vpop.f32.mrb[0].mxu0
    %v4078 = vadd.f32 %v4008, %v4077
    %v4079 = vpop.f32.mrb[0].mxu0
    %4080 = vdwg.mxu0
    %4081 = vmatprep.subr.mxu0 0.0
    %4082 = vmatpush1.msra.mxu0 %v3869
    %4083 = vmatprep.subr.mxu0 0.0
    %4084 = vmatpush1.msra.mxu0 %v3870
    %4085 = vmatprep.subr.mxu0 0.0
    %4086 = vmatpush1.msra.mxu0 %v3871
    %4087 = vmatprep.subr.mxu0 0.0
    %4088 = vmatpush1.msra.mxu0 %v3872
    %4089 = vmatprep.subr.mxu0 0.0
    %4090 = vmatpush1.msra.mxu0 %v3873
    %4091 = vmatprep.subr.mxu0 0.0
    %4092 = vmatpush1.msra.mxu0 %v3874
    %4093 = vmatprep.subr.mxu0 0.0
    %4094 = vmatpush1.msra.mxu0 %v3875
    %4095 = vmatprep.subr.mxu0 0.0
    %4096 = vmatpush1.msra.mxu0 %v3876
    %4097 = vmatprep.subr.mxu0 0.0
    %4098 = vmatpush1.msra.mxu0 %v3877
    %4099 = vmatprep.subr.mxu0 0.0
    %4100 = vmatpush1.msra.mxu0 %v3878
    %4101 = vmatprep.subr.mxu0 0.0
    %4102 = vmatpush1.msra.mxu0 %v3879
    %4103 = vmatprep.subr.mxu0 0.0
    %4104 = vmatpush1.msra.mxu0 %v3880
    %4105 = vmatprep.subr.mxu0 0.0
    %4106 = vmatpush1.msra.mxu0 %v3881
    %4107 = vmatprep.subr.mxu0 0.0
    %4108 = vmatpush1.msra.mxu0 %v3882
    %4109 = vmatprep.subr.mxu0 0.0
    %4110 = vmatpush1.msra.mxu0 %v3883
    %4111 = vmatprep.subr.mxu0 0.0
    %4112 = vmatpush1.msra.mxu0 %v3884
    %4113 = vmatprep.subr.mxu0 0.0
    %4114 = vmatpush1.msra.mxu0 %v3885
    %4115 = vmatprep.subr.mxu0 0.0
    %4116 = vmatpush1.msra.mxu0 %v3886
    %4117 = vmatprep.subr.mxu0 0.0
    %4118 = vmatpush1.msra.mxu0 %v3887
    %4119 = vmatprep.subr.mxu0 0.0
    %4120 = vmatpush1.msra.mxu0 %v3888
    %4121 = vmatprep.subr.mxu0 0.0
    %4122 = vmatpush1.msra.mxu0 %v3889
    %4123 = vmatprep.subr.mxu0 0.0
    %4124 = vmatpush1.msra.mxu0 %v3890
    %4125 = vmatprep.subr.mxu0 0.0
    %4126 = vmatpush1.msra.mxu0 %v3891
    %4127 = vmatprep.subr.mxu0 0.0
    %4128 = vmatpush1.msra.mxu0 %v3892
    %4129 = vmatprep.subr.mxu0 0.0
    %4130 = vmatpush1.msra.mxu0 %v3893
    %4131 = vmatprep.subr.mxu0 0.0
    %4132 = vmatpush1.msra.mxu0 %v3894
    %4133 = vmatprep.subr.mxu0 0.0
    %4134 = vmatpush1.msra.mxu0 %v3895
    %4135 = vmatprep.subr.mxu0 0.0
    %4136 = vmatpush1.msra.mxu0 %v3896
    %4137 = vmatprep.subr.mxu0 0.0
    %4138 = vmatpush1.msra.mxu0 %v3897
    %4139 = vmatprep.subr.mxu0 0.0
    %4140 = vmatpush1.msra.mxu0 %v3898
    %4141 = vmatprep.subr.mxu0 0.0
    %4142 = vmatpush1.msra.mxu0 %v3899
    %4143 = vmatprep.subr.mxu0 0.0
    %4144 = vmatpush1.msra.mxu0 %v3900
    %4145 = vmatprep.mubr.f32.mxu0 %v3866
    %4146 = vmatmul.mubr.f32.gmra.mrb[0].mxu0 %v3865
    %v4147 = vpop.f32.mrb[0].mxu0
    %v4148 = vadd.f32 %v4078, %v4147
    %v4149 = vpop.f32.mrb[0].mxu0
    %4150 = vdwg.mxu0
    %4151 = vmatprep.subr.mxu0 0.0
    %4152 = vmatpush1.msra.mxu0 %v3901
    %4153 = vmatprep.subr.mxu0 0.0
    %4154 = vmatpush1.msra.mxu0 %v3902
    %4155 = vmatprep.subr.mxu0 0.0
    %4156 = vmatpush1.msra.mxu0 %v3903
    %4157 = vmatprep.subr.mxu0 0.0
    %4158 = vmatpush1.msra.mxu0 %v3904
    %4159 = vmatprep.subr.mxu0 0.0
    %4160 = vmatpush1.msra.mxu0 %v3905
    %4161 = vmatprep.subr.mxu0 0.0
    %4162 = vmatpush1.msra.mxu0 %v3906
    %4163 = vmatprep.subr.mxu0 0.0
    %4164 = vmatpush1.msra.mxu0 %v3907
    %4165 = vmatprep.subr.mxu0 0.0
    %4166 = vmatpush1.msra.mxu0 %v3908
    %4167 = vmatprep.subr.mxu0 0.0
    %4168 = vmatpush1.msra.mxu0 %v3909
    %4169 = vmatprep.subr.mxu0 0.0
    %4170 = vmatpush1.msra.mxu0 %v3910
    %4171 = vmatprep.subr.mxu0 0.0
    %4172 = vmatpush1.msra.mxu0 %v3911
    %4173 = vmatprep.subr.mxu0 0.0
    %4174 = vmatpush1.msra.mxu0 %v3912
    %4175 = vmatprep.subr.mxu0 0.0
    %4176 = vmatpush1.msra.mxu0 %v3913
    %4177 = vmatprep.subr.mxu0 0.0
    %4178 = vmatpush1.msra.mxu0 %v3914
    %4179 = vmatprep.subr.mxu0 0.0
    %4180 = vmatpush1.msra.mxu0 %v3915
    %4181 = vmatprep.subr.mxu0 0.0
    %4182 = vmatpush1.msra.mxu0 %v3916
    %4183 = vmatprep.subr.mxu0 0.0
    %4184 = vmatpush1.msra.mxu0 %v3917
    %4185 = vmatprep.subr.mxu0 0.0
    %4186 = vmatpush1.msra.mxu0 %v3918
    %4187 = vmatprep.subr.mxu0 0.0
    %4188 = vmatpush1.msra.mxu0 %v3919
    %4189 = vmatprep.subr.mxu0 0.0
    %4190 = vmatpush1.msra.mxu0 %v3920
    %4191 = vmatprep.subr.mxu0 0.0
    %4192 = vmatpush1.msra.mxu0 %v3921
    %4193 = vmatprep.subr.mxu0 0.0
    %4194 = vmatpush1.msra.mxu0 %v3922
    %4195 = vmatprep.subr.mxu0 0.0
    %4196 = vmatpush1.msra.mxu0 %v3923
    %4197 = vmatprep.subr.mxu0 0.0
    %4198 = vmatpush1.msra.mxu0 %v3924
    %4199 = vmatprep.subr.mxu0 0.0
    %4200 = vmatpush1.msra.mxu0 %v3925
    %4201 = vmatprep.subr.mxu0 0.0
    %4202 = vmatpush1.msra.mxu0 %v3926
    %4203 = vmatprep.subr.mxu0 0.0
    %4204 = vmatpush1.msra.mxu0 %v3927
    %4205 = vmatprep.subr.mxu0 0.0
    %4206 = vmatpush1.msra.mxu0 %v3928
    %4207 = vmatprep.subr.mxu0 0.0
    %4208 = vmatpush1.msra.mxu0 %v3929
    %4209 = vmatprep.subr.mxu0 0.0
    %4210 = vmatpush1.msra.mxu0 %v3930
    %4211 = vmatprep.subr.mxu0 0.0
    %4212 = vmatpush1.msra.mxu0 %v3931
    %4213 = vmatprep.subr.mxu0 0.0
    %4214 = vmatpush1.msra.mxu0 %v3932
    %4215 = vmatprep.mubr.f32.mxu0 %v3868
    %4216 = vmatmul.mubr.f32.gmra.mrb[0].mxu0 %v3867
    %v4217 = vpop.f32.mrb[0].mxu0
    %v4218 = vadd.f32 %v4148, %v4217
    %v4219 = vpop.f32.mrb[0].mxu0
    %4220 = vdwg.mxu0
    %v4221 = vld [vmem:[%s71] sm:$0x1]
    %v4222 = vadd.f32 %v4218, %v4221
    %v4223 = vmax.f32 %v4222, 0.0
    %v4224 = vld [vmem:[%s73] sm:$0xff]
    %v4225 = vld [vmem:[%s73 + $0x8] sm:$0xff]
    %v4226 = vld [vmem:[%s75] sm:$0x1]
    %v4228 = vsel %vm3196, %v4223, 0
    %4230 = vmatprep.subr.mxu0 0.0
    %4231 = vmatpush1.msra.mxu0 %v4224
    %4232 = vmatprep.subr.mxu0 0.0
    %4233 = vmatpush1.msra.mxu0 %v4225
    %4234 = vmatprep.subr.mxu0 0.0
    %4235 = vmatpush1.msra.mxu0 0.0
    %4236 = vmatprep.subr.mxu0 0.0
    %4237 = vmatpush1.msra.mxu0 0.0
    %4238 = vmatprep.subr.mxu0 0.0
    %4239 = vmatpush1.msra.mxu0 0.0
    %4240 = vmatprep.subr.mxu0 0.0
    %4241 = vmatpush1.msra.mxu0 0.0
    %4242 = vmatprep.subr.mxu0 0.0
    %4243 = vmatpush1.msra.mxu0 0.0
    %4244 = vmatprep.subr.mxu0 0.0
    %4245 = vmatpush1.msra.mxu0 0.0
    %4246 = vmatprep.subr.mxu0 0.0
    %4247 = vmatpush1.msra.mxu0 0.0
    %4248 = vmatprep.subr.mxu0 0.0
    %4249 = vmatpush1.msra.mxu0 0.0
    %4250 = vmatprep.subr.mxu0 0.0
    %4251 = vmatpush1.msra.mxu0 0.0
    %4252 = vmatprep.subr.mxu0 0.0
    %4253 = vmatpush1.msra.mxu0 0.0
    %4254 = vmatprep.subr.mxu0 0.0
    %4255 = vmatpush1.msra.mxu0 0.0
    %4256 = vmatprep.subr.mxu0 0.0
    %4257 = vmatpush1.msra.mxu0 0.0
    %4258 = vmatprep.subr.mxu0 0.0
    %4259 = vmatpush1.msra.mxu0 0.0
    %4260 = vmatprep.subr.mxu0 0.0
    %4261 = vmatpush1.msra.mxu0 0.0
    %4262 = vmatprep.subr.mxu0 0.0
    %4263 = vmatpush1.msra.mxu0 0.0
    %4264 = vmatprep.subr.mxu0 0.0
    %4265 = vmatpush1.msra.mxu0 0.0
    %4266 = vmatprep.subr.mxu0 0.0
    %4267 = vmatpush1.msra.mxu0 0.0
    %4268 = vmatprep.subr.mxu0 0.0
    %4269 = vmatpush1.msra.mxu0 0.0
    %4270 = vmatprep.subr.mxu0 0.0
    %4271 = vmatpush1.msra.mxu0 0.0
    %4272 = vmatprep.subr.mxu0 0.0
    %4273 = vmatpush1.msra.mxu0 0.0
    %4274 = vmatprep.subr.mxu0 0.0
    %4275 = vmatpush1.msra.mxu0 0.0
    %4276 = vmatprep.subr.mxu0 0.0
    %4277 = vmatpush1.msra.mxu0 0.0
    %4278 = vmatprep.subr.mxu0 0.0
    %4279 = vmatpush1.msra.mxu0 0.0
    %4280 = vmatprep.subr.mxu0 0.0
    %4281 = vmatpush1.msra.mxu0 0.0
    %4282 = vmatprep.subr.mxu0 0.0
    %4283 = vmatpush1.msra.mxu0 0.0
    %4284 = vmatprep.subr.mxu0 0.0
    %4285 = vmatpush1.msra.mxu0 0.0
    %4286 = vmatprep.subr.mxu0 0.0
    %4287 = vmatpush1.msra.mxu0 0.0
    %4288 = vmatprep.subr.mxu0 0.0
    %4289 = vmatpush1.msra.mxu0 0.0
    %4290 = vmatprep.subr.mxu0 0.0
    %4291 = vmatpush1.msra.mxu0 0.0
    %4292 = vmatprep.subr.mxu0 0.0
    %4293 = vmatpush1.msra.mxu0 0.0
    %4294 = vmatprep.mubr.f32.mxu0 0.0
    %4295 = vmatmul.mubr.f32.gmra.mrb[0].mxu0 %v4228
    %v4296 = vpop.f32.mrb[0].mxu0
    %v4297 = vadd.f32 %v4226, %v4296
    %v4298 = vpop.f32.mrb[0].mxu0
    %4299 = vdwg.mxu0
    %v4300 = vmax.f32 %v4297, 0.0
    %v4301 = vld [vmem:[%s77] sm:$0xff]
    %v4302 = vld [vmem:[%s77 + $0x8] sm:$0xff]
    %v4303 = vld [vmem:[%s79] sm:$0x1]
    %v4305 = vsel %vm3196, %v4300, 0
    %4307 = vmatprep.subr.mxu0 0.0
    %4308 = vmatpush1.msra.mxu0 %v4301
    %4309 = vmatprep.subr.mxu0 0.0
    %4310 = vmatpush1.msra.mxu0 %v4302
    %4311 = vmatprep.subr.mxu0 0.0
    %4312 = vmatpush1.msra.mxu0 0.0
    %4313 = vmatprep.subr.mxu0 0.0
    %4314 = vmatpush1.msra.mxu0 0.0
    %4315 = vmatprep.subr.mxu0 0.0
    %4316 = vmatpush1.msra.mxu0 0.0
    %4317 = vmatprep.subr.mxu0 0.0
    %4318 = vmatpush1.msra.mxu0 0.0
    %4319 = vmatprep.subr.mxu0 0.0
    %4320 = vmatpush1.msra.mxu0 0.0
    %4321 = vmatprep.subr.mxu0 0.0
    %4322 = vmatpush1.msra.mxu0 0.0
    %4323 = vmatprep.subr.mxu0 0.0
    %4324 = vmatpush1.msra.mxu0 0.0
    %4325 = vmatprep.subr.mxu0 0.0
    %4326 = vmatpush1.msra.mxu0 0.0
    %4327 = vmatprep.subr.mxu0 0.0
    %4328 = vmatpush1.msra.mxu0 0.0
    %4329 = vmatprep.subr.mxu0 0.0
    %4330 = vmatpush1.msra.mxu0 0.0
    %4331 = vmatprep.subr.mxu0 0.0
    %4332 = vmatpush1.msra.mxu0 0.0
    %4333 = vmatprep.subr.mxu0 0.0
    %4334 = vmatpush1.msra.mxu0 0.0
    %4335 = vmatprep.subr.mxu0 0.0
    %4336 = vmatpush1.msra.mxu0 0.0
    %4337 = vmatprep.subr.mxu0 0.0
    %4338 = vmatpush1.msra.mxu0 0.0
    %4339 = vmatprep.subr.mxu0 0.0
    %4340 = vmatpush1.msra.mxu0 0.0
    %4341 = vmatprep.subr.mxu0 0.0
    %4342 = vmatpush1.msra.mxu0 0.0
    %4343 = vmatprep.subr.mxu0 0.0
    %4344 = vmatpush1.msra.mxu0 0.0
    %4345 = vmatprep.subr.mxu0 0.0
    %4346 = vmatpush1.msra.mxu0 0.0
    %4347 = vmatprep.subr.mxu0 0.0
    %4348 = vmatpush1.msra.mxu0 0.0
    %4349 = vmatprep.subr.mxu0 0.0
    %4350 = vmatpush1.msra.mxu0 0.0
    %4351 = vmatprep.subr.mxu0 0.0
    %4352 = vmatpush1.msra.mxu0 0.0
    %4353 = vmatprep.subr.mxu0 0.0
    %4354 = vmatpush1.msra.mxu0 0.0
    %4355 = vmatprep.subr.mxu0 0.0
    %4356 = vmatpush1.msra.mxu0 0.0
    %4357 = vmatprep.subr.mxu0 0.0
    %4358 = vmatpush1.msra.mxu0 0.0
    %4359 = vmatprep.subr.mxu0 0.0
    %4360 = vmatpush1.msra.mxu0 0.0
    %4361 = vmatprep.subr.mxu0 0.0
    %4362 = vmatpush1.msra.mxu0 0.0
    %4363 = vmatprep.subr.mxu0 0.0
    %4364 = vmatpush1.msra.mxu0 0.0
    %4365 = vmatprep.subr.mxu0 0.0
    %4366 = vmatpush1.msra.mxu0 0.0
    %4367 = vmatprep.subr.mxu0 0.0
    %4368 = vmatpush1.msra.mxu0 0.0
    %4369 = vmatprep.subr.mxu0 0.0
    %4370 = vmatpush1.msra.mxu0 0.0
    %4371 = vmatprep.mubr.f32.mxu0 0.0
    %4372 = vmatmul.mubr.f32.gmra.mrb[0].mxu0 %v4305
    %v4373 = vpop.f32.mrb[0].mxu0
    %v4374 = vadd.f32 %v4303, %v4373
    %v4375 = vpop.f32.mrb[0].mxu0
    %4376 = vdwg.mxu0
    %v4377 = vmax.f32 %v4374, 0.0
    %v4378 = vld [vmem:[%s81] sm:$0xff]
    %v4379 = vld [vmem:[%s83] sm:$0x1]
    %v4381 = vsel %vm327, %v4377, 0
    %4383 = vmatprep.subr.mxu0 0.0
    %4384 = vmatpush1.msra.mxu0 %v4378
    %4385 = vmatprep.subr.mxu0 0.0
    %4386 = vmatpush1.msra.mxu0 0.0
    %4387 = vmatprep.subr.mxu0 0.0
    %4388 = vmatpush1.msra.mxu0 0.0
    %4389 = vmatprep.subr.mxu0 0.0
    %4390 = vmatpush1.msra.mxu0 0.0
    %4391 = vmatprep.subr.mxu0 0.0
    %4392 = vmatpush1.msra.mxu0 0.0
    %4393 = vmatprep.subr.mxu0 0.0
    %4394 = vmatpush1.msra.mxu0 0.0
    %4395 = vmatprep.subr.mxu0 0.0
    %4396 = vmatpush1.msra.mxu0 0.0
    %4397 = vmatprep.subr.mxu0 0.0
    %4398 = vmatpush1.msra.mxu0 0.0
    %4399 = vmatprep.subr.mxu0 0.0
    %4400 = vmatpush1.msra.mxu0 0.0
    %4401 = vmatprep.subr.mxu0 0.0
    %4402 = vmatpush1.msra.mxu0 0.0
    %4403 = vmatprep.subr.mxu0 0.0
    %4404 = vmatpush1.msra.mxu0 0.0
    %4405 = vmatprep.subr.mxu0 0.0
    %4406 = vmatpush1.msra.mxu0 0.0
    %4407 = vmatprep.subr.mxu0 0.0
    %4408 = vmatpush1.msra.mxu0 0.0
    %4409 = vmatprep.subr.mxu0 0.0
    %4410 = vmatpush1.msra.mxu0 0.0
    %4411 = vmatprep.subr.mxu0 0.0
    %4412 = vmatpush1.msra.mxu0 0.0
    %4413 = vmatprep.subr.mxu0 0.0
    %4414 = vmatpush1.msra.mxu0 0.0
    %4415 = vmatprep.subr.mxu0 0.0
    %4416 = vmatpush1.msra.mxu0 0.0
    %4417 = vmatprep.subr.mxu0 0.0
    %4418 = vmatpush1.msra.mxu0 0.0
    %4419 = vmatprep.subr.mxu0 0.0
    %4420 = vmatpush1.msra.mxu0 0.0
    %4421 = vmatprep.subr.mxu0 0.0
    %4422 = vmatpush1.msra.mxu0 0.0
    %4423 = vmatprep.subr.mxu0 0.0
    %4424 = vmatpush1.msra.mxu0 0.0
    %4425 = vmatprep.subr.mxu0 0.0
    %4426 = vmatpush1.msra.mxu0 0.0
    %4427 = vmatprep.subr.mxu0 0.0
    %4428 = vmatpush1.msra.mxu0 0.0
    %4429 = vmatprep.subr.mxu0 0.0
    %4430 = vmatpush1.msra.mxu0 0.0
    %4431 = vmatprep.subr.mxu0 0.0
    %4432 = vmatpush1.msra.mxu0 0.0
    %4433 = vmatprep.subr.mxu0 0.0
    %4434 = vmatpush1.msra.mxu0 0.0
    %4435 = vmatprep.subr.mxu0 0.0
    %4436 = vmatpush1.msra.mxu0 0.0
    %4437 = vmatprep.subr.mxu0 0.0
    %4438 = vmatpush1.msra.mxu0 0.0
    %4439 = vmatprep.subr.mxu0 0.0
    %4440 = vmatpush1.msra.mxu0 0.0
    %4441 = vmatprep.subr.mxu0 0.0
    %4442 = vmatpush1.msra.mxu0 0.0
    %4443 = vmatprep.subr.mxu0 0.0
    %4444 = vmatpush1.msra.mxu0 0.0
    %4445 = vmatprep.subr.mxu0 0.0
    %4446 = vmatpush1.msra.mxu0 0.0
    %4447 = vmatprep.mubr.f32.mxu0 0.0
    %4448 = vmatmul.mubr.f32.gmra.mrb[0].mxu0 %v4381
    %v4449 = vpop.f32.mrb[0].mxu0
    %v4450 = vadd.f32 %v4379, %v4449
    %v4451 = vpop.f32.mrb[0].mxu0
    %4452 = vdwg.mxu0
    %v4453 = vmax.f32 %v4450, 0.0
    %v4454 = vld [vmem:[%s85] sm:$0xf]
    %v4455 = vld [vmem:[#allocation3] sm:$0x1]
    %vm4456 = vcmask 31744
    %v4458 = vsel %vm4456, %v4453, 0
    %vm4460 = vcmask 1043456
    %v4462 = vsel %vm4460, %v4454, 0
    %4464 = vmatprep.subr.mxu0 0.0
    %4465 = vmatpush1.msra.mxu0 %v4462
    %4466 = vmatprep.subr.mxu0 0.0
    %4467 = vmatpush1.msra.mxu0 0.0
    %4468 = vmatprep.subr.mxu0 0.0
    %4469 = vmatpush1.msra.mxu0 0.0
    %4470 = vmatprep.subr.mxu0 0.0
    %4471 = vmatpush1.msra.mxu0 0.0
    %4472 = vmatprep.subr.mxu0 0.0
    %4473 = vmatpush1.msra.mxu0 0.0
    %4474 = vmatprep.subr.mxu0 0.0
    %4475 = vmatpush1.msra.mxu0 0.0
    %4476 = vmatprep.subr.mxu0 0.0
    %4477 = vmatpush1.msra.mxu0 0.0
    %4478 = vmatprep.subr.mxu0 0.0
    %4479 = vmatpush1.msra.mxu0 0.0
    %4480 = vmatprep.subr.mxu0 0.0
    %4481 = vmatpush1.msra.mxu0 0.0
    %4482 = vmatprep.subr.mxu0 0.0
    %4483 = vmatpush1.msra.mxu0 0.0
    %4484 = vmatprep.subr.mxu0 0.0
    %4485 = vmatpush1.msra.mxu0 0.0
    %4486 = vmatprep.subr.mxu0 0.0
    %4487 = vmatpush1.msra.mxu0 0.0
    %4488 = vmatprep.subr.mxu0 0.0
    %4489 = vmatpush1.msra.mxu0 0.0
    %4490 = vmatprep.subr.mxu0 0.0
    %4491 = vmatpush1.msra.mxu0 0.0
    %4492 = vmatprep.subr.mxu0 0.0
    %4493 = vmatpush1.msra.mxu0 0.0
    %4494 = vmatprep.subr.mxu0 0.0
    %4495 = vmatpush1.msra.mxu0 0.0
    %4496 = vmatprep.subr.mxu0 0.0
    %4497 = vmatpush1.msra.mxu0 0.0
    %4498 = vmatprep.subr.mxu0 0.0
    %4499 = vmatpush1.msra.mxu0 0.0
    %4500 = vmatprep.subr.mxu0 0.0
    %4501 = vmatpush1.msra.mxu0 0.0
    %4502 = vmatprep.subr.mxu0 0.0
    %4503 = vmatpush1.msra.mxu0 0.0
    %4504 = vmatprep.subr.mxu0 0.0
    %4505 = vmatpush1.msra.mxu0 0.0
    %4506 = vmatprep.subr.mxu0 0.0
    %4507 = vmatpush1.msra.mxu0 0.0
    %4508 = vmatprep.subr.mxu0 0.0
    %4509 = vmatpush1.msra.mxu0 0.0
    %4510 = vmatprep.subr.mxu0 0.0
    %4511 = vmatpush1.msra.mxu0 0.0
    %4512 = vmatprep.subr.mxu0 0.0
    %4513 = vmatpush1.msra.mxu0 0.0
    %4514 = vmatprep.subr.mxu0 0.0
    %4515 = vmatpush1.msra.mxu0 0.0
    %4516 = vmatprep.subr.mxu0 0.0
    %4517 = vmatpush1.msra.mxu0 0.0
    %4518 = vmatprep.subr.mxu0 0.0
    %4519 = vmatpush1.msra.mxu0 0.0
    %4520 = vmatprep.subr.mxu0 0.0
    %4521 = vmatpush1.msra.mxu0 0.0
    %4522 = vmatprep.subr.mxu0 0.0
    %4523 = vmatpush1.msra.mxu0 0.0
    %4524 = vmatprep.subr.mxu0 0.0
    %4525 = vmatpush1.msra.mxu0 0.0
    %4526 = vmatprep.subr.mxu0 0.0
    %4527 = vmatpush1.msra.mxu0 0.0
    %4528 = vmatprep.mubr.f32.mxu0 0.0
    %4529 = vmatmul.mubr.f32.gmra.mrb[0].mxu0 %v4458
    %v4530 = vpop.f32.mrb[0].mxu0
    %v4531 = vadd.f32 %v4455, %v4530
    %v4532 = vpop.f32.mrb[0].mxu0
    %4533 = vdwg.mxu0
    %v4534 = vadd.f32 %v3304, %v4531
    %v4535 = vxor.u32 %v4534, 2147483648
    %v4536 = vmul.f32 %v4535, 1.442695
    %v4537 = vpow.pop %v4536
    %v4538 = vadd.f32 %v4537, 1.0
    %v4539 = vrcp.pop %v4538
    %v4540 = vmul.f32 1.0, %v4539
    %vm4541 = vcmask 0
    %4542 = vst.msk [vmem:[#allocation7] sm:$0x1] %vm4541, %v4540
    %v4543 = vld [vmem:[#allocation4] sm:$0x1]
    %v4544 = vmul.f32 %v4540, %v4543
    %4545 = vst.msk [vmem:[#allocation5] sm:$0x1] %vm4541, %v4544
    // Predicated region
    $region182: #{ged_gnn_forward.1} parent=1 // pred_check
      _
    $region183: #{ged_gnn_forward.1} parent=1 // pred_check_branch
      %4547 = sbr.rel (0) target = $region185
    $region184: #{ged_gnn_forward.1} parent=1 // pred_region
      %s4549 = ssub.s32 16, 16
      %4550 = vsyncadd [#allocation6], %s4549
      %s4552 = sshll.u32 [#allocation5], 4
      %s4553 = int_to_ptr.vmem [resolvable:$true] %s4552
      %4555 = dma.vmem_to_hbm [thread:$0]  %s4553, 16, %s91, [#allocation6]
    $region185: #{ged_gnn_forward.1} parent=1 // pred_fallthru
      _
    // Predicated region
    $region186: #{ged_gnn_forward.1} parent=1 // pred_check
      _
    $region187: #{ged_gnn_forward.1} parent=1 // pred_check_branch
      %4557 = sbr.rel (0) target = $region189
    $region188: #{ged_gnn_forward.1} parent=1 // pred_region
      %s4559 = ssub.s32 16, 16
      %4560 = vsyncadd [#allocation8], %s4559
      %s4562 = sshll.u32 [#allocation7], 4
      %s4563 = int_to_ptr.vmem [resolvable:$true] %s4562
      %4565 = dma.vmem_to_hbm [thread:$0]  %s4563, 16, %s93, [#allocation8]
    $region189: #{ged_gnn_forward.1} parent=1 // pred_fallthru
      _
    // Predicated region
    $region190: #{ged_gnn_forward.1} parent=1 // pred_check
      _
    $region191: #{ged_gnn_forward.1} parent=1 // pred_check_branch
      %4567 = sbr.rel (0) target = $region193
    $region192: #{ged_gnn_forward.1} parent=1 // pred_region
      %4568 = dma.done [#allocation6], 16
    $region193: #{ged_gnn_forward.1} parent=1 // pred_fallthru
      _
    // Predicated region
    $region194: #{ged_gnn_forward.1} parent=1 // pred_check
      _
    $region195: #{ged_gnn_forward.1} parent=1 // pred_check_branch
      %4570 = sbr.rel (0) target = $region197
    $region196: #{ged_gnn_forward.1} parent=1 // pred_region
      %4571 = dma.done [#allocation8], 16
    $region197: #{ged_gnn_forward.1} parent=1 // pred_fallthru
      _
    %4572 = vsyncpa [#allocation6], 1
    %4573 = vsyncpa [#allocation8], 1

</llo_original>
